<compile_context>
chip_gen: v7x
topology: tpu7x:2x2x1
jax: 0.10.0
libtpu: 0.0.40
codegen_flags: <defaults>
</compile_context>

<pallas_src>
import jax
import jax.numpy as jnp
import numpy as np
from jax import lax
from jax.experimental import pallas as pl
from jax.experimental.pallas import tpu as pltpu


# ---------------------------------------------------------------------------
# Kernel (everything lives in VMEM; intermediates never touch HBM).
# ---------------------------------------------------------------------------
def _tap_conv(act, g_ref, w_ref, b, relu):
    """One conv layer as per-tap accumulated 2D matmuls.

    act:   (M_in, Cin)       activation rows, row index = (n*Hin + h)*Win + w
    g_ref: (T, M_out, M_in)  constant 0/1 row-selector per kernel tap
    w_ref: (T, Cin, Cout)    per-tap weight slice
    b:     (1, Cout)
    """
    n_taps = g_ref.shape[0]
    acc = None
    for t in range(n_taps):                      # static unroll: 9 taps
        rows = jnp.dot(g_ref[t], act, preferred_element_type=jnp.float32)
        term = jnp.dot(rows, w_ref[t], preferred_element_type=jnp.float32)
        acc = term if acc is None else acc + term
    y = acc + b
    if relu:
        y = jnp.maximum(y, 0.0)
    return y


def _fused_convnet_kernel(p1_ref, w1_ref, b1_ref, g2_ref, w2_ref, b2_ref,
                          g3_ref, w3_ref, b3_ref, o_ref):
    # Layer 1: host-side im2col -> one 2D GEMM with M = N*H1*W1.
    a1 = jnp.dot(p1_ref[...], w1_ref[...], preferred_element_type=jnp.float32)
    a1 = jnp.maximum(a1 + b1_ref[...], 0.0)                      # (N*H1*W1, 32)
    # Layers 2 & 3: per-tap matmuls; stride gathers done on the MXU via G.
    a2 = _tap_conv(a1, g2_ref, w2_ref, b2_ref[...], relu=True)    # (N*H2*W2, 64)
    a3 = _tap_conv(a2, g3_ref, w3_ref, b3_ref[...], relu=False)   # (N*H3*W3, 32)
    o_ref[...] = a3                                               # single store


# ---------------------------------------------------------------------------
# Host-side parameter / index preparation (done once, outside the hot path).
# ---------------------------------------------------------------------------
def prepare_params(params):
    """Flatten weights / reshape biases once (hoisted out of forward)."""
    w1, b1 = params["cnn1"]
    w2, b2 = params["cnn2"]
    w3, b3 = params["cnn3"]
    # OIHW -> (kh*kw*Cin, Cout), feature order (ki, kj, c) for the layer-1 GEMM.
    w1f = jnp.transpose(w1, (2, 3, 1, 0)).reshape(-1, w1.shape[0])
    # OIHW -> (kh*kw, Cin, Cout): one (Cin, Cout) slice per tap.
    w2t = jnp.transpose(w2, (2, 3, 1, 0)).reshape(9, w2.shape[1], w2.shape[0])
    w3t = jnp.transpose(w3, (2, 3, 1, 0)).reshape(9, w3.shape[1], w3.shape[0])
    return (w1f, b1.reshape(1, -1), w2t, b2.reshape(1, -1), w3t, b3.reshape(1, -1))


def _tap_selectors(n, hin, win, kh, kw, stride):
    """Constant one-hot matrices gathering the tap rows of a conv layer."""
    hout = (hin - kh) // stride + 1
    wout = (win - kw) // stride + 1
    m_in, m_out = n * hin * win, n * hout * wout
    g = np.zeros((kh * kw, m_out, m_in), np.float32)
    for ki in range(kh):
        for kj in range(kw):
            t = ki * kw + kj
            for b in range(n):
                for ho in range(hout):
                    for wo in range(wout):
                        r = (b * hout + ho) * wout + wo
                        c = (b * hin + stride * ho + ki) * win + stride * wo + kj
                        g[t, r, c] = 1.0
    return g, hout, wout


# ---------------------------------------------------------------------------
# Forward pass.
# ---------------------------------------------------------------------------
@jax.jit
def base_conv_net_forward(flat_params, x_nchw):
    w1f, b1, w2t, b2, w3t, b3 = flat_params
    x = jnp.transpose(x_nchw, (0, 2, 3, 1))                     # NHWC
    N, H, W, Cin = x.shape
    H1, W1 = (H - 4) // 2 + 1, (W - 4) // 2 + 1

    # Layer-1 im2col on the host (XLA): (N*H1*W1, 4*4*Cin), features (ki,kj,c).
    taps = [x[:, ki:ki + 2 * H1 - 1:2, kj:kj + 2 * W1 - 1:2, :]
            for ki in range(4) for kj in range(4)]
    p1 = jnp.concatenate(taps, axis=-1).reshape(N * H1 * W1, 4 * 4 * Cin)

    # Constant tap selectors (built from static shapes at trace time).
    g2_np, H2, W2 = _tap_selectors(N, H1, W1, 3, 3, 2)
    g3_np, H3, W3 = _tap_selectors(N, H2, W2, 3, 3, 1)
    g2, g3 = jnp.asarray(g2_np), jnp.asarray(g3_np)

    M1, M2, M3 = N * H1 * W1, N * H2 * W2, N * H3 * W3
    flops = 2 * (M1 * (4 * 4 * Cin) * 32
                 + 9 * (M2 * M1 * 32 + M2 * 32 * 64)
                 + 9 * (M3 * M2 * 64 + M3 * 64 * 32))
    bytes_accessed = 4 * (p1.size + g2.size + g3.size + M3 * 32
                          + sum(int(np.prod(a.shape)) for a in flat_params))

    vmem = pltpu.MemorySpace.VMEM
    out = pl.pallas_call(
        _fused_convnet_kernel,
        out_shape=jax.ShapeDtypeStruct((M3, 32), jnp.float32),
        in_specs=[pl.BlockSpec(memory_space=vmem)] * 9,
        out_specs=pl.BlockSpec(memory_space=vmem),
        cost_estimate=pl.CostEstimate(flops=flops, transcendentals=0,
                                      bytes_accessed=bytes_accessed),
    )(p1, w1f, b1, g2, w2t, b2, g3, w3t, b3)

    if H3 == 1 and W3 == 1:
        return out                                   # (N, 32): NCHW flatten is identity
    # PyTorch .view(N, -1) flattens in NCHW (channel-major) order.
    return jnp.transpose(out.reshape(N, H3, W3, 32), (0, 3, 1, 2)).reshape(
        N, 32 * H3 * W3)


# ---------------------------------------------------------------------------
# Deterministic init + pure-JAX reference + self-check.
# ---------------------------------------------------------------------------
def init_params(key):
    """PyTorch Conv2d default-style uniform(-1/sqrt(fan_in), +), OIHW layout."""
    def conv_init(k, cout, cin, kh, kw):
        wkey, bkey = jax.random.split(k)
        bound = 1.0 / np.sqrt(cin * kh * kw)
        w = jax.random.uniform(wkey, (cout, cin, kh, kw), jnp.float32, -bound, bound)
        b = jax.random.uniform(bkey, (cout,), jnp.float32, -bound, bound)
        return w, b

    k1, k2, k3 = jax.random.split(key, 3)
    return {
        "cnn1": conv_init(k1, 32, 2, 4, 4),    # Conv2d(2, 32, 4x4, stride 2)
        "cnn2": conv_init(k2, 64, 32, 3, 3),   # Conv2d(32, 64, 3x3, stride 2)
        "cnn3": conv_init(k3, 32, 64, 3, 3),   # Conv2d(64, 32, 3x3, stride 1)
    }


def reference_forward(params, x_nchw):
    def conv(x, w, b, stride):
        y = lax.conv_general_dilated(
            x, w, window_strides=(stride, stride), padding="VALID",
            dimension_numbers=("NCHW", "OIHW", "NCHW"))
        return y + b.reshape(1, -1, 1, 1)

    w1, b1 = params["cnn1"]
    w2, b2 = params["cnn2"]
    w3, b3 = params["cnn3"]
    x = jax.nn.relu(conv(x_nchw, w1, b1, 2))
    x = jax.nn.relu(conv(x, w2, b2, 2))
    x = conv(x, w3, b3, 1)
    return x.reshape(x.shape[0], -1)


if __name__ == "__main__":
    key = jax.random.PRNGKey(0)
    pkey, xkey = jax.random.split(key)
    params = init_params(pkey)
    flat_params = prepare_params(params)

    # NCHW input, Cin=2 as required by cnn1; 16x16 spatial -> final (N, 32).
    x = jax.random.normal(xkey, (2, 2, 16, 16), jnp.float32)

    out = jax.block_until_ready(base_conv_net_forward(flat_params, x))
    ref = jax.block_until_ready(reference_forward(params, x))

    assert out.shape == (2, 32), out.shape
    np.testing.assert_allclose(np.asarray(out), np.asarray(ref), rtol=1e-4, atol=1e-4)
    print("KERNEL_OK")
</pallas_src>

<mosaic_0001>
module attributes {stable_mosaic.version = 11 : i64} {
  func.func @_fused_convnet_kernel(%arg0: memref<98x32xf32, #tpu.memory_space<vmem>>, %arg1: memref<32x32xf32, #tpu.memory_space<vmem>>, %arg2: memref<1x32xf32, #tpu.memory_space<vmem>>, %arg3: memref<9x18x98xf32, #tpu.memory_space<vmem>>, %arg4: memref<9x32x64xf32, #tpu.memory_space<vmem>>, %arg5: memref<1x64xf32, #tpu.memory_space<vmem>>, %arg6: memref<9x2x18xf32, #tpu.memory_space<vmem>>, %arg7: memref<9x64x32xf32, #tpu.memory_space<vmem>>, %arg8: memref<1x32xf32, #tpu.memory_space<vmem>>, %arg9: memref<2x32xf32, #tpu.memory_space<vmem>>) attributes {dimension_semantics = [], scalar_prefetch = 0 : i64, scratch_operands = 0 : i64, tpu.core_type = #tpu.core_type<tc>} {
    %c0 = arith.constant 0 : index
    %c0_0 = arith.constant 0 : index
    %0 = vector.load %arg0[%c0, %c0_0] : memref<98x32xf32, #tpu.memory_space<vmem>>, vector<98x32xf32>
    %c0_1 = arith.constant 0 : index
    %c0_2 = arith.constant 0 : index
    %1 = vector.load %arg1[%c0_1, %c0_2] : memref<32x32xf32, #tpu.memory_space<vmem>>, vector<32x32xf32>
    %cst = arith.constant dense<0.000000e+00> : vector<98x32xf32>
    %2 = tpu.matmul %0, %1, %cst {dimension_numbers = #tpu.dot_dimension_numbers<[1], [0], [0], [1], [0, 0, 1, 1], [], []>} : vector<98x32xf32>, vector<32x32xf32>, vector<98x32xf32> -> vector<98x32xf32>
    %c0_3 = arith.constant 0 : index
    %c0_4 = arith.constant 0 : index
    %3 = vector.load %arg2[%c0_3, %c0_4] : memref<1x32xf32, #tpu.memory_space<vmem>>, vector<1x32xf32>
    %4 = vector.broadcast %3 : vector<1x32xf32> to vector<98x32xf32>
    %5 = arith.addf %2, %4 : vector<98x32xf32>
    %cst_5 = arith.constant 0.000000e+00 : f32
    %6 = vector.broadcast %cst_5 : f32 to vector<98x32xf32>
    %7 = arith.maximumf %5, %6 : vector<98x32xf32>
    %c0_6 = arith.constant 0 : index
    %c0_7 = arith.constant 0 : index
    %8 = vector.load %arg5[%c0_6, %c0_7] : memref<1x64xf32, #tpu.memory_space<vmem>>, vector<1x64xf32>
    %c0_8 = arith.constant 0 : index
    %c0_9 = arith.constant 0 : index
    %c0_10 = arith.constant 0 : index
    %9 = vector.load %arg3[%c0_8, %c0_9, %c0_10] : memref<9x18x98xf32, #tpu.memory_space<vmem>>, vector<1x18x98xf32>
    %10 = vector.shape_cast %9 : vector<1x18x98xf32> to vector<18x98xf32>
    %cst_11 = arith.constant dense<0.000000e+00> : vector<18x32xf32>
    %11 = tpu.matmul %10, %7, %cst_11 {dimension_numbers = #tpu.dot_dimension_numbers<[1], [0], [0], [1], [0, 0, 1, 1], [], []>} : vector<18x98xf32>, vector<98x32xf32>, vector<18x32xf32> -> vector<18x32xf32>
    %c0_12 = arith.constant 0 : index
    %c0_13 = arith.constant 0 : index
    %c0_14 = arith.constant 0 : index
    %12 = vector.load %arg4[%c0_12, %c0_13, %c0_14] : memref<9x32x64xf32, #tpu.memory_space<vmem>>, vector<1x32x64xf32>
    %13 = vector.shape_cast %12 : vector<1x32x64xf32> to vector<32x64xf32>
    %cst_15 = arith.constant dense<0.000000e+00> : vector<18x64xf32>
    %14 = tpu.matmul %11, %13, %cst_15 {dimension_numbers = #tpu.dot_dimension_numbers<[1], [0], [0], [1], [0, 0, 1, 1], [], []>} : vector<18x32xf32>, vector<32x64xf32>, vector<18x64xf32> -> vector<18x64xf32>
    %c1 = arith.constant 1 : index
    %c0_16 = arith.constant 0 : index
    %c0_17 = arith.constant 0 : index
    %15 = vector.load %arg3[%c1, %c0_16, %c0_17] : memref<9x18x98xf32, #tpu.memory_space<vmem>>, vector<1x18x98xf32>
    %16 = vector.shape_cast %15 : vector<1x18x98xf32> to vector<18x98xf32>
    %cst_18 = arith.constant dense<0.000000e+00> : vector<18x32xf32>
    %17 = tpu.matmul %16, %7, %cst_18 {dimension_numbers = #tpu.dot_dimension_numbers<[1], [0], [0], [1], [0, 0, 1, 1], [], []>} : vector<18x98xf32>, vector<98x32xf32>, vector<18x32xf32> -> vector<18x32xf32>
    %c1_19 = arith.constant 1 : index
    %c0_20 = arith.constant 0 : index
    %c0_21 = arith.constant 0 : index
    %18 = vector.load %arg4[%c1_19, %c0_20, %c0_21] : memref<9x32x64xf32, #tpu.memory_space<vmem>>, vector<1x32x64xf32>
    %19 = vector.shape_cast %18 : vector<1x32x64xf32> to vector<32x64xf32>
    %cst_22 = arith.constant dense<0.000000e+00> : vector<18x64xf32>
    %20 = tpu.matmul %17, %19, %cst_22 {dimension_numbers = #tpu.dot_dimension_numbers<[1], [0], [0], [1], [0, 0, 1, 1], [], []>} : vector<18x32xf32>, vector<32x64xf32>, vector<18x64xf32> -> vector<18x64xf32>
    %21 = arith.addf %14, %20 : vector<18x64xf32>
    %c2 = arith.constant 2 : index
    %c0_23 = arith.constant 0 : index
    %c0_24 = arith.constant 0 : index
    %22 = vector.load %arg3[%c2, %c0_23, %c0_24] : memref<9x18x98xf32, #tpu.memory_space<vmem>>, vector<1x18x98xf32>
    %23 = vector.shape_cast %22 : vector<1x18x98xf32> to vector<18x98xf32>
    %cst_25 = arith.constant dense<0.000000e+00> : vector<18x32xf32>
    %24 = tpu.matmul %23, %7, %cst_25 {dimension_numbers = #tpu.dot_dimension_numbers<[1], [0], [0], [1], [0, 0, 1, 1], [], []>} : vector<18x98xf32>, vector<98x32xf32>, vector<18x32xf32> -> vector<18x32xf32>
    %c2_26 = arith.constant 2 : index
    %c0_27 = arith.constant 0 : index
    %c0_28 = arith.constant 0 : index
    %25 = vector.load %arg4[%c2_26, %c0_27, %c0_28] : memref<9x32x64xf32, #tpu.memory_space<vmem>>, vector<1x32x64xf32>
    %26 = vector.shape_cast %25 : vector<1x32x64xf32> to vector<32x64xf32>
    %cst_29 = arith.constant dense<0.000000e+00> : vector<18x64xf32>
    %27 = tpu.matmul %24, %26, %cst_29 {dimension_numbers = #tpu.dot_dimension_numbers<[1], [0], [0], [1], [0, 0, 1, 1], [], []>} : vector<18x32xf32>, vector<32x64xf32>, vector<18x64xf32> -> vector<18x64xf32>
    %28 = arith.addf %21, %27 : vector<18x64xf32>
    %c3 = arith.constant 3 : index
    %c0_30 = arith.constant 0 : index
    %c0_31 = arith.constant 0 : index
    %29 = vector.load %arg3[%c3, %c0_30, %c0_31] : memref<9x18x98xf32, #tpu.memory_space<vmem>>, vector<1x18x98xf32>
    %30 = vector.shape_cast %29 : vector<1x18x98xf32> to vector<18x98xf32>
    %cst_32 = arith.constant dense<0.000000e+00> : vector<18x32xf32>
    %31 = tpu.matmul %30, %7, %cst_32 {dimension_numbers = #tpu.dot_dimension_numbers<[1], [0], [0], [1], [0, 0, 1, 1], [], []>} : vector<18x98xf32>, vector<98x32xf32>, vector<18x32xf32> -> vector<18x32xf32>
    %c3_33 = arith.constant 3 : index
    %c0_34 = arith.constant 0 : index
    %c0_35 = arith.constant 0 : index
    %32 = vector.load %arg4[%c3_33, %c0_34, %c0_35] : memref<9x32x64xf32, #tpu.memory_space<vmem>>, vector<1x32x64xf32>
    %33 = vector.shape_cast %32 : vector<1x32x64xf32> to vector<32x64xf32>
    %cst_36 = arith.constant dense<0.000000e+00> : vector<18x64xf32>
    %34 = tpu.matmul %31, %33, %cst_36 {dimension_numbers = #tpu.dot_dimension_numbers<[1], [0], [0], [1], [0, 0, 1, 1], [], []>} : vector<18x32xf32>, vector<32x64xf32>, vector<18x64xf32> -> vector<18x64xf32>
    %35 = arith.addf %28, %34 : vector<18x64xf32>
    %c4 = arith.constant 4 : index
    %c0_37 = arith.constant 0 : index
    %c0_38 = arith.constant 0 : index
    %36 = vector.load %arg3[%c4, %c0_37, %c0_38] : memref<9x18x98xf32, #tpu.memory_space<vmem>>, vector<1x18x98xf32>
    %37 = vector.shape_cast %36 : vector<1x18x98xf32> to vector<18x98xf32>
    %cst_39 = arith.constant dense<0.000000e+00> : vector<18x32xf32>
    %38 = tpu.matmul %37, %7, %cst_39 {dimension_numbers = #tpu.dot_dimension_numbers<[1], [0], [0], [1], [0, 0, 1, 1], [], []>} : vector<18x98xf32>, vector<98x32xf32>, vector<18x32xf32> -> vector<18x32xf32>
    %c4_40 = arith.constant 4 : index
    %c0_41 = arith.constant 0 : index
    %c0_42 = arith.constant 0 : index
    %39 = vector.load %arg4[%c4_40, %c0_41, %c0_42] : memref<9x32x64xf32, #tpu.memory_space<vmem>>, vector<1x32x64xf32>
    %40 = vector.shape_cast %39 : vector<1x32x64xf32> to vector<32x64xf32>
    %cst_43 = arith.constant dense<0.000000e+00> : vector<18x64xf32>
    %41 = tpu.matmul %38, %40, %cst_43 {dimension_numbers = #tpu.dot_dimension_numbers<[1], [0], [0], [1], [0, 0, 1, 1], [], []>} : vector<18x32xf32>, vector<32x64xf32>, vector<18x64xf32> -> vector<18x64xf32>
    %42 = arith.addf %35, %41 : vector<18x64xf32>
    %c5 = arith.constant 5 : index
    %c0_44 = arith.constant 0 : index
    %c0_45 = arith.constant 0 : index
    %43 = vector.load %arg3[%c5, %c0_44, %c0_45] : memref<9x18x98xf32, #tpu.memory_space<vmem>>, vector<1x18x98xf32>
    %44 = vector.shape_cast %43 : vector<1x18x98xf32> to vector<18x98xf32>
    %cst_46 = arith.constant dense<0.000000e+00> : vector<18x32xf32>
    %45 = tpu.matmul %44, %7, %cst_46 {dimension_numbers = #tpu.dot_dimension_numbers<[1], [0], [0], [1], [0, 0, 1, 1], [], []>} : vector<18x98xf32>, vector<98x32xf32>, vector<18x32xf32> -> vector<18x32xf32>
    %c5_47 = arith.constant 5 : index
    %c0_48 = arith.constant 0 : index
    %c0_49 = arith.constant 0 : index
    %46 = vector.load %arg4[%c5_47, %c0_48, %c0_49] : memref<9x32x64xf32, #tpu.memory_space<vmem>>, vector<1x32x64xf32>
    %47 = vector.shape_cast %46 : vector<1x32x64xf32> to vector<32x64xf32>
    %cst_50 = arith.constant dense<0.000000e+00> : vector<18x64xf32>
    %48 = tpu.matmul %45, %47, %cst_50 {dimension_numbers = #tpu.dot_dimension_numbers<[1], [0], [0], [1], [0, 0, 1, 1], [], []>} : vector<18x32xf32>, vector<32x64xf32>, vector<18x64xf32> -> vector<18x64xf32>
    %49 = arith.addf %42, %48 : vector<18x64xf32>
    %c6 = arith.constant 6 : index
    %c0_51 = arith.constant 0 : index
    %c0_52 = arith.constant 0 : index
    %50 = vector.load %arg3[%c6, %c0_51, %c0_52] : memref<9x18x98xf32, #tpu.memory_space<vmem>>, vector<1x18x98xf32>
    %51 = vector.shape_cast %50 : vector<1x18x98xf32> to vector<18x98xf32>
    %cst_53 = arith.constant dense<0.000000e+00> : vector<18x32xf32>
    %52 = tpu.matmul %51, %7, %cst_53 {dimension_numbers = #tpu.dot_dimension_numbers<[1], [0], [0], [1], [0, 0, 1, 1], [], []>} : vector<18x98xf32>, vector<98x32xf32>, vector<18x32xf32> -> vector<18x32xf32>
    %c6_54 = arith.constant 6 : index
    %c0_55 = arith.constant 0 : index
    %c0_56 = arith.constant 0 : index
    %53 = vector.load %arg4[%c6_54, %c0_55, %c0_56] : memref<9x32x64xf32, #tpu.memory_space<vmem>>, vector<1x32x64xf32>
    %54 = vector.shape_cast %53 : vector<1x32x64xf32> to vector<32x64xf32>
    %cst_57 = arith.constant dense<0.000000e+00> : vector<18x64xf32>
    %55 = tpu.matmul %52, %54, %cst_57 {dimension_numbers = #tpu.dot_dimension_numbers<[1], [0], [0], [1], [0, 0, 1, 1], [], []>} : vector<18x32xf32>, vector<32x64xf32>, vector<18x64xf32> -> vector<18x64xf32>
    %56 = arith.addf %49, %55 : vector<18x64xf32>
    %c7 = arith.constant 7 : index
    %c0_58 = arith.constant 0 : index
    %c0_59 = arith.constant 0 : index
    %57 = vector.load %arg3[%c7, %c0_58, %c0_59] : memref<9x18x98xf32, #tpu.memory_space<vmem>>, vector<1x18x98xf32>
    %58 = vector.shape_cast %57 : vector<1x18x98xf32> to vector<18x98xf32>
    %cst_60 = arith.constant dense<0.000000e+00> : vector<18x32xf32>
    %59 = tpu.matmul %58, %7, %cst_60 {dimension_numbers = #tpu.dot_dimension_numbers<[1], [0], [0], [1], [0, 0, 1, 1], [], []>} : vector<18x98xf32>, vector<98x32xf32>, vector<18x32xf32> -> vector<18x32xf32>
    %c7_61 = arith.constant 7 : index
    %c0_62 = arith.constant 0 : index
    %c0_63 = arith.constant 0 : index
    %60 = vector.load %arg4[%c7_61, %c0_62, %c0_63] : memref<9x32x64xf32, #tpu.memory_space<vmem>>, vector<1x32x64xf32>
    %61 = vector.shape_cast %60 : vector<1x32x64xf32> to vector<32x64xf32>
    %cst_64 = arith.constant dense<0.000000e+00> : vector<18x64xf32>
    %62 = tpu.matmul %59, %61, %cst_64 {dimension_numbers = #tpu.dot_dimension_numbers<[1], [0], [0], [1], [0, 0, 1, 1], [], []>} : vector<18x32xf32>, vector<32x64xf32>, vector<18x64xf32> -> vector<18x64xf32>
    %63 = arith.addf %56, %62 : vector<18x64xf32>
    %c8 = arith.constant 8 : index
    %c0_65 = arith.constant 0 : index
    %c0_66 = arith.constant 0 : index
    %64 = vector.load %arg3[%c8, %c0_65, %c0_66] : memref<9x18x98xf32, #tpu.memory_space<vmem>>, vector<1x18x98xf32>
    %65 = vector.shape_cast %64 : vector<1x18x98xf32> to vector<18x98xf32>
    %cst_67 = arith.constant dense<0.000000e+00> : vector<18x32xf32>
    %66 = tpu.matmul %65, %7, %cst_67 {dimension_numbers = #tpu.dot_dimension_numbers<[1], [0], [0], [1], [0, 0, 1, 1], [], []>} : vector<18x98xf32>, vector<98x32xf32>, vector<18x32xf32> -> vector<18x32xf32>
    %c8_68 = arith.constant 8 : index
    %c0_69 = arith.constant 0 : index
    %c0_70 = arith.constant 0 : index
    %67 = vector.load %arg4[%c8_68, %c0_69, %c0_70] : memref<9x32x64xf32, #tpu.memory_space<vmem>>, vector<1x32x64xf32>
    %68 = vector.shape_cast %67 : vector<1x32x64xf32> to vector<32x64xf32>
    %cst_71 = arith.constant dense<0.000000e+00> : vector<18x64xf32>
    %69 = tpu.matmul %66, %68, %cst_71 {dimension_numbers = #tpu.dot_dimension_numbers<[1], [0], [0], [1], [0, 0, 1, 1], [], []>} : vector<18x32xf32>, vector<32x64xf32>, vector<18x64xf32> -> vector<18x64xf32>
    %70 = arith.addf %63, %69 : vector<18x64xf32>
    %71 = vector.broadcast %8 : vector<1x64xf32> to vector<18x64xf32>
    %72 = arith.addf %70, %71 : vector<18x64xf32>
    %cst_72 = arith.constant 0.000000e+00 : f32
    %73 = vector.broadcast %cst_72 : f32 to vector<18x64xf32>
    %74 = arith.maximumf %72, %73 : vector<18x64xf32>
    %c0_73 = arith.constant 0 : index
    %c0_74 = arith.constant 0 : index
    %75 = vector.load %arg8[%c0_73, %c0_74] : memref<1x32xf32, #tpu.memory_space<vmem>>, vector<1x32xf32>
    %c0_75 = arith.constant 0 : index
    %c0_76 = arith.constant 0 : index
    %c0_77 = arith.constant 0 : index
    %76 = vector.load %arg6[%c0_75, %c0_76, %c0_77] : memref<9x2x18xf32, #tpu.memory_space<vmem>>, vector<1x2x18xf32>
    %77 = vector.shape_cast %76 : vector<1x2x18xf32> to vector<2x18xf32>
    %cst_78 = arith.constant dense<0.000000e+00> : vector<2x64xf32>
    %78 = tpu.matmul %77, %74, %cst_78 {dimension_numbers = #tpu.dot_dimension_numbers<[1], [0], [0], [1], [0, 0, 1, 1], [], []>} : vector<2x18xf32>, vector<18x64xf32>, vector<2x64xf32> -> vector<2x64xf32>
    %c0_79 = arith.constant 0 : index
    %c0_80 = arith.constant 0 : index
    %c0_81 = arith.constant 0 : index
    %79 = vector.load %arg7[%c0_79, %c0_80, %c0_81] : memref<9x64x32xf32, #tpu.memory_space<vmem>>, vector<1x64x32xf32>
    %80 = vector.shape_cast %79 : vector<1x64x32xf32> to vector<64x32xf32>
    %cst_82 = arith.constant dense<0.000000e+00> : vector<2x32xf32>
    %81 = tpu.matmul %78, %80, %cst_82 {dimension_numbers = #tpu.dot_dimension_numbers<[1], [0], [0], [1], [0, 0, 1, 1], [], []>} : vector<2x64xf32>, vector<64x32xf32>, vector<2x32xf32> -> vector<2x32xf32>
    %c1_83 = arith.constant 1 : index
    %c0_84 = arith.constant 0 : index
    %c0_85 = arith.constant 0 : index
    %82 = vector.load %arg6[%c1_83, %c0_84, %c0_85] : memref<9x2x18xf32, #tpu.memory_space<vmem>>, vector<1x2x18xf32>
    %83 = vector.shape_cast %82 : vector<1x2x18xf32> to vector<2x18xf32>
    %cst_86 = arith.constant dense<0.000000e+00> : vector<2x64xf32>
    %84 = tpu.matmul %83, %74, %cst_86 {dimension_numbers = #tpu.dot_dimension_numbers<[1], [0], [0], [1], [0, 0, 1, 1], [], []>} : vector<2x18xf32>, vector<18x64xf32>, vector<2x64xf32> -> vector<2x64xf32>
    %c1_87 = arith.constant 1 : index
    %c0_88 = arith.constant 0 : index
    %c0_89 = arith.constant 0 : index
    %85 = vector.load %arg7[%c1_87, %c0_88, %c0_89] : memref<9x64x32xf32, #tpu.memory_space<vmem>>, vector<1x64x32xf32>
    %86 = vector.shape_cast %85 : vector<1x64x32xf32> to vector<64x32xf32>
    %cst_90 = arith.constant dense<0.000000e+00> : vector<2x32xf32>
    %87 = tpu.matmul %84, %86, %cst_90 {dimension_numbers = #tpu.dot_dimension_numbers<[1], [0], [0], [1], [0, 0, 1, 1], [], []>} : vector<2x64xf32>, vector<64x32xf32>, vector<2x32xf32> -> vector<2x32xf32>
    %88 = arith.addf %81, %87 : vector<2x32xf32>
    %c2_91 = arith.constant 2 : index
    %c0_92 = arith.constant 0 : index
    %c0_93 = arith.constant 0 : index
    %89 = vector.load %arg6[%c2_91, %c0_92, %c0_93] : memref<9x2x18xf32, #tpu.memory_space<vmem>>, vector<1x2x18xf32>
    %90 = vector.shape_cast %89 : vector<1x2x18xf32> to vector<2x18xf32>
    %cst_94 = arith.constant dense<0.000000e+00> : vector<2x64xf32>
    %91 = tpu.matmul %90, %74, %cst_94 {dimension_numbers = #tpu.dot_dimension_numbers<[1], [0], [0], [1], [0, 0, 1, 1], [], []>} : vector<2x18xf32>, vector<18x64xf32>, vector<2x64xf32> -> vector<2x64xf32>
    %c2_95 = arith.constant 2 : index
    %c0_96 = arith.constant 0 : index
    %c0_97 = arith.constant 0 : index
    %92 = vector.load %arg7[%c2_95, %c0_96, %c0_97] : memref<9x64x32xf32, #tpu.memory_space<vmem>>, vector<1x64x32xf32>
    %93 = vector.shape_cast %92 : vector<1x64x32xf32> to vector<64x32xf32>
    %cst_98 = arith.constant dense<0.000000e+00> : vector<2x32xf32>
    %94 = tpu.matmul %91, %93, %cst_98 {dimension_numbers = #tpu.dot_dimension_numbers<[1], [0], [0], [1], [0, 0, 1, 1], [], []>} : vector<2x64xf32>, vector<64x32xf32>, vector<2x32xf32> -> vector<2x32xf32>
    %95 = arith.addf %88, %94 : vector<2x32xf32>
    %c3_99 = arith.constant 3 : index
    %c0_100 = arith.constant 0 : index
    %c0_101 = arith.constant 0 : index
    %96 = vector.load %arg6[%c3_99, %c0_100, %c0_101] : memref<9x2x18xf32, #tpu.memory_space<vmem>>, vector<1x2x18xf32>
    %97 = vector.shape_cast %96 : vector<1x2x18xf32> to vector<2x18xf32>
    %cst_102 = arith.constant dense<0.000000e+00> : vector<2x64xf32>
    %98 = tpu.matmul %97, %74, %cst_102 {dimension_numbers = #tpu.dot_dimension_numbers<[1], [0], [0], [1], [0, 0, 1, 1], [], []>} : vector<2x18xf32>, vector<18x64xf32>, vector<2x64xf32> -> vector<2x64xf32>
    %c3_103 = arith.constant 3 : index
    %c0_104 = arith.constant 0 : index
    %c0_105 = arith.constant 0 : index
    %99 = vector.load %arg7[%c3_103, %c0_104, %c0_105] : memref<9x64x32xf32, #tpu.memory_space<vmem>>, vector<1x64x32xf32>
    %100 = vector.shape_cast %99 : vector<1x64x32xf32> to vector<64x32xf32>
    %cst_106 = arith.constant dense<0.000000e+00> : vector<2x32xf32>
    %101 = tpu.matmul %98, %100, %cst_106 {dimension_numbers = #tpu.dot_dimension_numbers<[1], [0], [0], [1], [0, 0, 1, 1], [], []>} : vector<2x64xf32>, vector<64x32xf32>, vector<2x32xf32> -> vector<2x32xf32>
    %102 = arith.addf %95, %101 : vector<2x32xf32>
    %c4_107 = arith.constant 4 : index
    %c0_108 = arith.constant 0 : index
    %c0_109 = arith.constant 0 : index
    %103 = vector.load %arg6[%c4_107, %c0_108, %c0_109] : memref<9x2x18xf32, #tpu.memory_space<vmem>>, vector<1x2x18xf32>
    %104 = vector.shape_cast %103 : vector<1x2x18xf32> to vector<2x18xf32>
    %cst_110 = arith.constant dense<0.000000e+00> : vector<2x64xf32>
    %105 = tpu.matmul %104, %74, %cst_110 {dimension_numbers = #tpu.dot_dimension_numbers<[1], [0], [0], [1], [0, 0, 1, 1], [], []>} : vector<2x18xf32>, vector<18x64xf32>, vector<2x64xf32> -> vector<2x64xf32>
    %c4_111 = arith.constant 4 : index
    %c0_112 = arith.constant 0 : index
    %c0_113 = arith.constant 0 : index
    %106 = vector.load %arg7[%c4_111, %c0_112, %c0_113] : memref<9x64x32xf32, #tpu.memory_space<vmem>>, vector<1x64x32xf32>
    %107 = vector.shape_cast %106 : vector<1x64x32xf32> to vector<64x32xf32>
    %cst_114 = arith.constant dense<0.000000e+00> : vector<2x32xf32>
    %108 = tpu.matmul %105, %107, %cst_114 {dimension_numbers = #tpu.dot_dimension_numbers<[1], [0], [0], [1], [0, 0, 1, 1], [], []>} : vector<2x64xf32>, vector<64x32xf32>, vector<2x32xf32> -> vector<2x32xf32>
    %109 = arith.addf %102, %108 : vector<2x32xf32>
    %c5_115 = arith.constant 5 : index
    %c0_116 = arith.constant 0 : index
    %c0_117 = arith.constant 0 : index
    %110 = vector.load %arg6[%c5_115, %c0_116, %c0_117] : memref<9x2x18xf32, #tpu.memory_space<vmem>>, vector<1x2x18xf32>
    %111 = vector.shape_cast %110 : vector<1x2x18xf32> to vector<2x18xf32>
    %cst_118 = arith.constant dense<0.000000e+00> : vector<2x64xf32>
    %112 = tpu.matmul %111, %74, %cst_118 {dimension_numbers = #tpu.dot_dimension_numbers<[1], [0], [0], [1], [0, 0, 1, 1], [], []>} : vector<2x18xf32>, vector<18x64xf32>, vector<2x64xf32> -> vector<2x64xf32>
    %c5_119 = arith.constant 5 : index
    %c0_120 = arith.constant 0 : index
    %c0_121 = arith.constant 0 : index
    %113 = vector.load %arg7[%c5_119, %c0_120, %c0_121] : memref<9x64x32xf32, #tpu.memory_space<vmem>>, vector<1x64x32xf32>
    %114 = vector.shape_cast %113 : vector<1x64x32xf32> to vector<64x32xf32>
    %cst_122 = arith.constant dense<0.000000e+00> : vector<2x32xf32>
    %115 = tpu.matmul %112, %114, %cst_122 {dimension_numbers = #tpu.dot_dimension_numbers<[1], [0], [0], [1], [0, 0, 1, 1], [], []>} : vector<2x64xf32>, vector<64x32xf32>, vector<2x32xf32> -> vector<2x32xf32>
    %116 = arith.addf %109, %115 : vector<2x32xf32>
    %c6_123 = arith.constant 6 : index
    %c0_124 = arith.constant 0 : index
    %c0_125 = arith.constant 0 : index
    %117 = vector.load %arg6[%c6_123, %c0_124, %c0_125] : memref<9x2x18xf32, #tpu.memory_space<vmem>>, vector<1x2x18xf32>
    %118 = vector.shape_cast %117 : vector<1x2x18xf32> to vector<2x18xf32>
    %cst_126 = arith.constant dense<0.000000e+00> : vector<2x64xf32>
    %119 = tpu.matmul %118, %74, %cst_126 {dimension_numbers = #tpu.dot_dimension_numbers<[1], [0], [0], [1], [0, 0, 1, 1], [], []>} : vector<2x18xf32>, vector<18x64xf32>, vector<2x64xf32> -> vector<2x64xf32>
    %c6_127 = arith.constant 6 : index
    %c0_128 = arith.constant 0 : index
    %c0_129 = arith.constant 0 : index
    %120 = vector.load %arg7[%c6_127, %c0_128, %c0_129] : memref<9x64x32xf32, #tpu.memory_space<vmem>>, vector<1x64x32xf32>
    %121 = vector.shape_cast %120 : vector<1x64x32xf32> to vector<64x32xf32>
    %cst_130 = arith.constant dense<0.000000e+00> : vector<2x32xf32>
    %122 = tpu.matmul %119, %121, %cst_130 {dimension_numbers = #tpu.dot_dimension_numbers<[1], [0], [0], [1], [0, 0, 1, 1], [], []>} : vector<2x64xf32>, vector<64x32xf32>, vector<2x32xf32> -> vector<2x32xf32>
    %123 = arith.addf %116, %122 : vector<2x32xf32>
    %c7_131 = arith.constant 7 : index
    %c0_132 = arith.constant 0 : index
    %c0_133 = arith.constant 0 : index
    %124 = vector.load %arg6[%c7_131, %c0_132, %c0_133] : memref<9x2x18xf32, #tpu.memory_space<vmem>>, vector<1x2x18xf32>
    %125 = vector.shape_cast %124 : vector<1x2x18xf32> to vector<2x18xf32>
    %cst_134 = arith.constant dense<0.000000e+00> : vector<2x64xf32>
    %126 = tpu.matmul %125, %74, %cst_134 {dimension_numbers = #tpu.dot_dimension_numbers<[1], [0], [0], [1], [0, 0, 1, 1], [], []>} : vector<2x18xf32>, vector<18x64xf32>, vector<2x64xf32> -> vector<2x64xf32>
    %c7_135 = arith.constant 7 : index
    %c0_136 = arith.constant 0 : index
    %c0_137 = arith.constant 0 : index
    %127 = vector.load %arg7[%c7_135, %c0_136, %c0_137] : memref<9x64x32xf32, #tpu.memory_space<vmem>>, vector<1x64x32xf32>
    %128 = vector.shape_cast %127 : vector<1x64x32xf32> to vector<64x32xf32>
    %cst_138 = arith.constant dense<0.000000e+00> : vector<2x32xf32>
    %129 = tpu.matmul %126, %128, %cst_138 {dimension_numbers = #tpu.dot_dimension_numbers<[1], [0], [0], [1], [0, 0, 1, 1], [], []>} : vector<2x64xf32>, vector<64x32xf32>, vector<2x32xf32> -> vector<2x32xf32>
    %130 = arith.addf %123, %129 : vector<2x32xf32>
    %c8_139 = arith.constant 8 : index
    %c0_140 = arith.constant 0 : index
    %c0_141 = arith.constant 0 : index
    %131 = vector.load %arg6[%c8_139, %c0_140, %c0_141] : memref<9x2x18xf32, #tpu.memory_space<vmem>>, vector<1x2x18xf32>
    %132 = vector.shape_cast %131 : vector<1x2x18xf32> to vector<2x18xf32>
    %cst_142 = arith.constant dense<0.000000e+00> : vector<2x64xf32>
    %133 = tpu.matmul %132, %74, %cst_142 {dimension_numbers = #tpu.dot_dimension_numbers<[1], [0], [0], [1], [0, 0, 1, 1], [], []>} : vector<2x18xf32>, vector<18x64xf32>, vector<2x64xf32> -> vector<2x64xf32>
    %c8_143 = arith.constant 8 : index
    %c0_144 = arith.constant 0 : index
    %c0_145 = arith.constant 0 : index
    %134 = vector.load %arg7[%c8_143, %c0_144, %c0_145] : memref<9x64x32xf32, #tpu.memory_space<vmem>>, vector<1x64x32xf32>
    %135 = vector.shape_cast %134 : vector<1x64x32xf32> to vector<64x32xf32>
    %cst_146 = arith.constant dense<0.000000e+00> : vector<2x32xf32>
    %136 = tpu.matmul %133, %135, %cst_146 {dimension_numbers = #tpu.dot_dimension_numbers<[1], [0], [0], [1], [0, 0, 1, 1], [], []>} : vector<2x64xf32>, vector<64x32xf32>, vector<2x32xf32> -> vector<2x32xf32>
    %137 = arith.addf %130, %136 : vector<2x32xf32>
    %138 = vector.broadcast %75 : vector<1x32xf32> to vector<2x32xf32>
    %139 = arith.addf %137, %138 : vector<2x32xf32>
    %c0_147 = arith.constant 0 : index
    %c0_148 = arith.constant 0 : index
    %140 = vector.load %arg9[%c0_147, %c0_148] : memref<2x32xf32, #tpu.memory_space<vmem>>, vector<2x32xf32>
    tpu.vector_store %arg9[%c0_147, %c0_148], %139 {strides = array<i32>} : memref<2x32xf32, #tpu.memory_space<vmem>>, vector<2x32xf32>,
    return
  }
}

</mosaic_0001>

<llo_original>
// kernel: base_conv_net_forward.1
$region0: #{base_conv_net_forward.1}
  #allocation0 [shape = 'u32[]', space=smem, size = 0x4, offset = 0x4, fixed_abs, tag = 'smem constant byte address 0x4 - core index']
  #allocation1 [shape = 'u32[144,128]{1,0:T(1,128)}', space=vmem, size = 0x12000, scoped, tag = 'internal scratch']
  %s0 = inlined_call_operand.vmem [shape: f32[98,32], index: 0, kind: input, shape index: {}]
  %s1 = inlined_call_operand.vmem [shape: f32[32,32], index: 1, kind: input, shape index: {}]
  %s2 = inlined_call_operand.vmem [shape: f32[1,32], index: 2, kind: input, shape index: {}]
  %s3 = inlined_call_operand.vmem [shape: f32[9,18,98], index: 3, kind: input, shape index: {}]
  %s4 = inlined_call_operand.vmem [shape: f32[9,32,64], index: 4, kind: input, shape index: {}]
  %s5 = inlined_call_operand.vmem [shape: f32[1,64], index: 5, kind: input, shape index: {}]
  %s6 = inlined_call_operand.vmem [shape: f32[9,2,18], index: 6, kind: input, shape index: {}]
  %s7 = inlined_call_operand.vmem [shape: f32[9,64,32], index: 7, kind: input, shape index: {}]
  %s8 = inlined_call_operand.vmem [shape: f32[1,32], index: 8, kind: input, shape index: {}]
  %s9 = inlined_call_operand.hbm [shape: f32[2,32], index: 9, kind: output, shape index: {}]
  %s10 = sld [smem:[#allocation0]]
  $region46: #{base_conv_net_forward.1} parent=0
    _
  %s12 = ssub.s32 1, %s10
  %s13 = scalar_select 0, %s12, %s10
  $region1: #{base_conv_net_forward.1} parent=0
    #allocation2 [shape = 'u8[1024]{0}', space=vmem, size = 0x400, scoped, tag = 'output window, operand 0, single buffered']
    #allocation3 [shape = 's32[1]{0}', space=sflag, size = 0x4, scoped, tag = 'scoped memory for base_conv_net_forward.1']
    %14 = vsyncpa [#allocation3], 0
    // Predicated region
    $region2: #{base_conv_net_forward.1} parent=1 // pred_check
      _
    $region3: #{base_conv_net_forward.1} parent=1 // pred_check_branch
      %16 = sbr.rel (0) target = $region5
    $region4: #{base_conv_net_forward.1} parent=1 // pred_region
      _
    $region5: #{base_conv_net_forward.1} parent=1 // pred_fallthru
      _
    // Predicated region
    $region6: #{base_conv_net_forward.1} parent=1 // pred_check
      _
    $region7: #{base_conv_net_forward.1} parent=1 // pred_check_branch
      %18 = sbr.rel (0) target = $region9
    $region8: #{base_conv_net_forward.1} parent=1 // pred_region
      _
    $region9: #{base_conv_net_forward.1} parent=1 // pred_fallthru
      _
    // Predicated region
    $region10: #{base_conv_net_forward.1} parent=1 // pred_check
      _
    $region11: #{base_conv_net_forward.1} parent=1 // pred_check_branch
      %20 = sbr.rel (0) target = $region13
    $region12: #{base_conv_net_forward.1} parent=1 // pred_region
      _
    $region13: #{base_conv_net_forward.1} parent=1 // pred_fallthru
      _
    // Predicated region
    $region14: #{base_conv_net_forward.1} parent=1 // pred_check
      _
    $region15: #{base_conv_net_forward.1} parent=1 // pred_check_branch
      %22 = sbr.rel (0) target = $region17
    $region16: #{base_conv_net_forward.1} parent=1 // pred_region
      _
    $region17: #{base_conv_net_forward.1} parent=1 // pred_fallthru
      _
    // Predicated region
    $region18: #{base_conv_net_forward.1} parent=1 // pred_check
      _
    $region19: #{base_conv_net_forward.1} parent=1 // pred_check_branch
      %24 = sbr.rel (0) target = $region21
    $region20: #{base_conv_net_forward.1} parent=1 // pred_region
      _
    $region21: #{base_conv_net_forward.1} parent=1 // pred_fallthru
      _
    // Predicated region
    $region22: #{base_conv_net_forward.1} parent=1 // pred_check
      _
    $region23: #{base_conv_net_forward.1} parent=1 // pred_check_branch
      %26 = sbr.rel (0) target = $region25
    $region24: #{base_conv_net_forward.1} parent=1 // pred_region
      _
    $region25: #{base_conv_net_forward.1} parent=1 // pred_fallthru
      _
    // Predicated region
    $region26: #{base_conv_net_forward.1} parent=1 // pred_check
      _
    $region27: #{base_conv_net_forward.1} parent=1 // pred_check_branch
      %28 = sbr.rel (0) target = $region29
    $region28: #{base_conv_net_forward.1} parent=1 // pred_region
      _
    $region29: #{base_conv_net_forward.1} parent=1 // pred_fallthru
      _
    // Predicated region
    $region30: #{base_conv_net_forward.1} parent=1 // pred_check
      _
    $region31: #{base_conv_net_forward.1} parent=1 // pred_check_branch
      %30 = sbr.rel (0) target = $region33
    $region32: #{base_conv_net_forward.1} parent=1 // pred_region
      _
    $region33: #{base_conv_net_forward.1} parent=1 // pred_fallthru
      _
    // Predicated region
    $region34: #{base_conv_net_forward.1} parent=1 // pred_check
      _
    $region35: #{base_conv_net_forward.1} parent=1 // pred_check_branch
      %32 = sbr.rel (0) target = $region37
    $region36: #{base_conv_net_forward.1} parent=1 // pred_region
      _
    $region37: #{base_conv_net_forward.1} parent=1 // pred_fallthru
      _
    %v33 = vld [vmem:[%s0] sm:$0xff]
    %v34 = vld [vmem:[%s0 + $0x8] sm:$0xff]
    %v35 = vld [vmem:[%s0 + $0x10] sm:$0xff]
    %v36 = vld [vmem:[%s0 + $0x18] sm:$0xff]
    %v37 = vld [vmem:[%s0 + $0x20] sm:$0xff]
    %v38 = vld [vmem:[%s0 + $0x28] sm:$0xff]
    %v39 = vld [vmem:[%s0 + $0x30] sm:$0xff]
    %v40 = vld [vmem:[%s0 + $0x38] sm:$0xff]
    %v41 = vld [vmem:[%s0 + $0x40] sm:$0xff]
    %v42 = vld [vmem:[%s0 + $0x48] sm:$0xff]
    %v43 = vld [vmem:[%s0 + $0x50] sm:$0xff]
    %v44 = vld [vmem:[%s0 + $0x58] sm:$0xff]
    %v45 = vld [vmem:[%s0 + $0x60] sm:$0x3]
    %v46 = vld [vmem:[%s1] sm:$0xff]
    %v47 = vld [vmem:[%s1 + $0x8] sm:$0xff]
    %v48 = vld [vmem:[%s1 + $0x10] sm:$0xff]
    %v49 = vld [vmem:[%s1 + $0x18] sm:$0xff]
    %v50 = vld [vmem:[%s2] sm:$0x1]
    %v52 = vlaneseq
    %v53 = vshrl.u32 %v52, 7
    %v54 = vsub.s32 0, %v53
    %v55 = vrot.slane %v50, %v54
    %vm57 = vcmask 261120
    %v59 = vsel %vm57, %v33, 0
    %v62 = vsel %vm57, %v34, 0
    %v65 = vsel %vm57, %v35, 0
    %v68 = vsel %vm57, %v36, 0
    %v71 = vsel %vm57, %v37, 0
    %v74 = vsel %vm57, %v38, 0
    %v77 = vsel %vm57, %v39, 0
    %v80 = vsel %vm57, %v40, 0
    %v83 = vsel %vm57, %v41, 0
    %v86 = vsel %vm57, %v42, 0
    %v89 = vsel %vm57, %v43, 0
    %v92 = vsel %vm57, %v44, 0
    %v95 = vsel %vm57, %v45, 0
    %97 = vmatprep.subr.mxu0 0.0
    %98 = vmatpush1.msra.mxu0 %v46
    %99 = vmatprep.subr.mxu0 0.0
    %100 = vmatpush1.msra.mxu0 %v47
    %101 = vmatprep.subr.mxu0 0.0
    %102 = vmatpush1.msra.mxu0 %v48
    %103 = vmatprep.subr.mxu0 0.0
    %104 = vmatpush1.msra.mxu0 %v49
    %105 = vmatprep.subr.mxu0 0.0
    %106 = vmatpush1.msra.mxu0 0.0
    %107 = vmatprep.subr.mxu0 0.0
    %108 = vmatpush1.msra.mxu0 0.0
    %109 = vmatprep.subr.mxu0 0.0
    %110 = vmatpush1.msra.mxu0 0.0
    %111 = vmatprep.subr.mxu0 0.0
    %112 = vmatpush1.msra.mxu0 0.0
    %113 = vmatprep.subr.mxu0 0.0
    %114 = vmatpush1.msra.mxu0 0.0
    %115 = vmatprep.subr.mxu0 0.0
    %116 = vmatpush1.msra.mxu0 0.0
    %117 = vmatprep.subr.mxu0 0.0
    %118 = vmatpush1.msra.mxu0 0.0
    %119 = vmatprep.subr.mxu0 0.0
    %120 = vmatpush1.msra.mxu0 0.0
    %121 = vmatprep.subr.mxu0 0.0
    %122 = vmatpush1.msra.mxu0 0.0
    %123 = vmatprep.subr.mxu0 0.0
    %124 = vmatpush1.msra.mxu0 0.0
    %125 = vmatprep.subr.mxu0 0.0
    %126 = vmatpush1.msra.mxu0 0.0
    %127 = vmatprep.subr.mxu0 0.0
    %128 = vmatpush1.msra.mxu0 0.0
    %129 = vmatprep.subr.mxu0 0.0
    %130 = vmatpush1.msra.mxu0 0.0
    %131 = vmatprep.subr.mxu0 0.0
    %132 = vmatpush1.msra.mxu0 0.0
    %133 = vmatprep.subr.mxu0 0.0
    %134 = vmatpush1.msra.mxu0 0.0
    %135 = vmatprep.subr.mxu0 0.0
    %136 = vmatpush1.msra.mxu0 0.0
    %137 = vmatprep.subr.mxu0 0.0
    %138 = vmatpush1.msra.mxu0 0.0
    %139 = vmatprep.subr.mxu0 0.0
    %140 = vmatpush1.msra.mxu0 0.0
    %141 = vmatprep.subr.mxu0 0.0
    %142 = vmatpush1.msra.mxu0 0.0
    %143 = vmatprep.subr.mxu0 0.0
    %144 = vmatpush1.msra.mxu0 0.0
    %145 = vmatprep.subr.mxu0 0.0
    %146 = vmatpush1.msra.mxu0 0.0
    %147 = vmatprep.subr.mxu0 0.0
    %148 = vmatpush1.msra.mxu0 0.0
    %149 = vmatprep.subr.mxu0 0.0
    %150 = vmatpush1.msra.mxu0 0.0
    %151 = vmatprep.subr.mxu0 0.0
    %152 = vmatpush1.msra.mxu0 0.0
    %153 = vmatprep.subr.mxu0 0.0
    %154 = vmatpush1.msra.mxu0 0.0
    %155 = vmatprep.subr.mxu0 0.0
    %156 = vmatpush1.msra.mxu0 0.0
    %157 = vmatprep.subr.mxu0 0.0
    %158 = vmatpush1.msra.mxu0 0.0
    %159 = vmatprep.subr.mxu0 0.0
    %160 = vmatpush1.msra.mxu0 0.0
    %161 = vmatprep.mubr.f32.mxu0 0.0
    %162 = vmatmul.mubr.f32.gmra.mrb[0].mxu0 %v59
    %v163 = vpop.f32.mrb[0].mxu0
    %v164 = vadd.f32 %v55, %v163
    %v165 = vpop.f32.mrb[0].mxu0
    %166 = vmatprep.mubr.f32.mxu0 0.0
    %167 = vmatmul.mubr.f32.gmra.mrb[0].mxu0 %v62
    %v168 = vpop.f32.mrb[0].mxu0
    %v169 = vadd.f32 %v55, %v168
    %v170 = vpop.f32.mrb[0].mxu0
    %171 = vmatprep.mubr.f32.mxu0 0.0
    %172 = vmatmul.mubr.f32.gmra.mrb[0].mxu0 %v65
    %v173 = vpop.f32.mrb[0].mxu0
    %v174 = vadd.f32 %v55, %v173
    %v175 = vpop.f32.mrb[0].mxu0
    %176 = vmatprep.mubr.f32.mxu0 0.0
    %177 = vmatmul.mubr.f32.gmra.mrb[0].mxu0 %v68
    %v178 = vpop.f32.mrb[0].mxu0
    %v179 = vadd.f32 %v55, %v178
    %v180 = vpop.f32.mrb[0].mxu0
    %181 = vmatprep.mubr.f32.mxu0 0.0
    %182 = vmatmul.mubr.f32.gmra.mrb[0].mxu0 %v71
    %v183 = vpop.f32.mrb[0].mxu0
    %v184 = vadd.f32 %v55, %v183
    %v185 = vpop.f32.mrb[0].mxu0
    %186 = vmatprep.mubr.f32.mxu0 0.0
    %187 = vmatmul.mubr.f32.gmra.mrb[0].mxu0 %v74
    %v188 = vpop.f32.mrb[0].mxu0
    %v189 = vadd.f32 %v55, %v188
    %v190 = vpop.f32.mrb[0].mxu0
    %191 = vmatprep.mubr.f32.mxu0 0.0
    %192 = vmatmul.mubr.f32.gmra.mrb[0].mxu0 %v77
    %v193 = vpop.f32.mrb[0].mxu0
    %v194 = vadd.f32 %v55, %v193
    %v195 = vpop.f32.mrb[0].mxu0
    %196 = vmatprep.mubr.f32.mxu0 0.0
    %197 = vmatmul.mubr.f32.gmra.mrb[0].mxu0 %v80
    %v198 = vpop.f32.mrb[0].mxu0
    %v199 = vadd.f32 %v55, %v198
    %v200 = vpop.f32.mrb[0].mxu0
    %201 = vmatprep.mubr.f32.mxu0 0.0
    %202 = vmatmul.mubr.f32.gmra.mrb[0].mxu0 %v83
    %v203 = vpop.f32.mrb[0].mxu0
    %v204 = vadd.f32 %v55, %v203
    %v205 = vpop.f32.mrb[0].mxu0
    %206 = vmatprep.mubr.f32.mxu0 0.0
    %207 = vmatmul.mubr.f32.gmra.mrb[0].mxu0 %v86
    %v208 = vpop.f32.mrb[0].mxu0
    %v209 = vadd.f32 %v55, %v208
    %v210 = vpop.f32.mrb[0].mxu0
    %211 = vmatprep.mubr.f32.mxu0 0.0
    %212 = vmatmul.mubr.f32.gmra.mrb[0].mxu0 %v89
    %v213 = vpop.f32.mrb[0].mxu0
    %v214 = vadd.f32 %v55, %v213
    %v215 = vpop.f32.mrb[0].mxu0
    %216 = vmatprep.mubr.f32.mxu0 0.0
    %217 = vmatmul.mubr.f32.gmra.mrb[0].mxu0 %v92
    %v218 = vpop.f32.mrb[0].mxu0
    %v219 = vadd.f32 %v55, %v218
    %v220 = vpop.f32.mrb[0].mxu0
    %221 = vmatprep.mubr.f32.mxu0 0.0
    %222 = vmatmul.mubr.f32.gmra.mrb[0].mxu0 %v95
    %v223 = vpop.f32.mrb[0].mxu0
    %v224 = vadd.f32 %v55, %v223
    %v225 = vpop.f32.mrb[0].mxu0
    %226 = vdwg.mxu0
    %v227 = vmax.f32 %v164, 0.0
    %v228 = vmax.f32 %v169, 0.0
    %v229 = vmax.f32 %v174, 0.0
    %v230 = vmax.f32 %v179, 0.0
    %v231 = vmax.f32 %v184, 0.0
    %v232 = vmax.f32 %v189, 0.0
    %v233 = vmax.f32 %v194, 0.0
    %v234 = vmax.f32 %v199, 0.0
    %v235 = vmax.f32 %v204, 0.0
    %v236 = vmax.f32 %v209, 0.0
    %v237 = vmax.f32 %v214, 0.0
    %v238 = vmax.f32 %v219, 0.0
    %v239 = vmax.f32 %v224, 0.0
    %v240 = vld [vmem:[%s5] sm:$0x1]
    %v241 = vld [vmem:[%s3] sm:$0xff]
    %v242 = vld [vmem:[%s3 + $0x8] sm:$0xff]
    %v243 = vld [vmem:[%s3 + $0x10] sm:$0x3]
    %vm244 = vcmask 801792
    %v246 = vsel %vm244, %v241, 0
    %v249 = vsel %vm244, %v242, 0
    %v252 = vsel %vm244, %v243, 0
    %vm254 = vcmask 1041408
    %v256 = vsel %vm254, %v239, 0
    %258 = vmatprep.subr.mxu0 0.0
    %259 = vmatpush1.msra.mxu0 %v227
    %260 = vmatprep.subr.mxu0 0.0
    %261 = vmatpush1.msra.mxu0 %v228
    %262 = vmatprep.subr.mxu0 0.0
    %263 = vmatpush1.msra.mxu0 %v229
    %264 = vmatprep.subr.mxu0 0.0
    %265 = vmatpush1.msra.mxu0 %v230
    %266 = vmatprep.subr.mxu0 0.0
    %267 = vmatpush1.msra.mxu0 %v231
    %268 = vmatprep.subr.mxu0 0.0
    %269 = vmatpush1.msra.mxu0 %v232
    %270 = vmatprep.subr.mxu0 0.0
    %271 = vmatpush1.msra.mxu0 %v233
    %272 = vmatprep.subr.mxu0 0.0
    %273 = vmatpush1.msra.mxu0 %v234
    %274 = vmatprep.subr.mxu0 0.0
    %275 = vmatpush1.msra.mxu0 %v235
    %276 = vmatprep.subr.mxu0 0.0
    %277 = vmatpush1.msra.mxu0 %v236
    %278 = vmatprep.subr.mxu0 0.0
    %279 = vmatpush1.msra.mxu0 %v237
    %280 = vmatprep.subr.mxu0 0.0
    %281 = vmatpush1.msra.mxu0 %v238
    %282 = vmatprep.subr.mxu0 0.0
    %283 = vmatpush1.msra.mxu0 %v256
    %284 = vmatprep.subr.mxu0 0.0
    %285 = vmatpush1.msra.mxu0 0.0
    %286 = vmatprep.subr.mxu0 0.0
    %287 = vmatpush1.msra.mxu0 0.0
    %288 = vmatprep.subr.mxu0 0.0
    %289 = vmatpush1.msra.mxu0 0.0
    %290 = vmatprep.subr.mxu0 0.0
    %291 = vmatpush1.msra.mxu0 0.0
    %292 = vmatprep.subr.mxu0 0.0
    %293 = vmatpush1.msra.mxu0 0.0
    %294 = vmatprep.subr.mxu0 0.0
    %295 = vmatpush1.msra.mxu0 0.0
    %296 = vmatprep.subr.mxu0 0.0
    %297 = vmatpush1.msra.mxu0 0.0
    %298 = vmatprep.subr.mxu0 0.0
    %299 = vmatpush1.msra.mxu0 0.0
    %300 = vmatprep.subr.mxu0 0.0
    %301 = vmatpush1.msra.mxu0 0.0
    %302 = vmatprep.subr.mxu0 0.0
    %303 = vmatpush1.msra.mxu0 0.0
    %304 = vmatprep.subr.mxu0 0.0
    %305 = vmatpush1.msra.mxu0 0.0
    %306 = vmatprep.subr.mxu0 0.0
    %307 = vmatpush1.msra.mxu0 0.0
    %308 = vmatprep.subr.mxu0 0.0
    %309 = vmatpush1.msra.mxu0 0.0
    %310 = vmatprep.subr.mxu0 0.0
    %311 = vmatpush1.msra.mxu0 0.0
    %312 = vmatprep.subr.mxu0 0.0
    %313 = vmatpush1.msra.mxu0 0.0
    %314 = vmatprep.subr.mxu0 0.0
    %315 = vmatpush1.msra.mxu0 0.0
    %316 = vmatprep.subr.mxu0 0.0
    %317 = vmatpush1.msra.mxu0 0.0
    %318 = vmatprep.subr.mxu0 0.0
    %319 = vmatpush1.msra.mxu0 0.0
    %320 = vmatprep.subr.mxu0 0.0
    %321 = vmatpush1.msra.mxu0 0.0
    %322 = vmatprep.mubr.f32.mxu0 0.0
    %323 = vmatmul.mubr.f32.gmra.mrb[0].mxu0 %v246
    %v324 = vpop.f32.mrb[0].mxu0
    %v325 = vadd.f32 0.0, %v324
    %v326 = vpop.f32.mrb[0].mxu0
    %327 = vmatprep.mubr.f32.mxu0 0.0
    %328 = vmatmul.mubr.f32.gmra.mrb[0].mxu0 %v249
    %v329 = vpop.f32.mrb[0].mxu0
    %v330 = vadd.f32 0.0, %v329
    %v331 = vpop.f32.mrb[0].mxu0
    %332 = vmatprep.mubr.f32.mxu0 0.0
    %333 = vmatmul.mubr.f32.gmra.mrb[0].mxu0 %v252
    %v334 = vpop.f32.mrb[0].mxu0
    %v335 = vadd.f32 0.0, %v334
    %v336 = vpop.f32.mrb[0].mxu0
    %337 = vdwg.mxu0
    %v338 = vld [vmem:[%s4] sm:$0xff]
    %v339 = vld [vmem:[%s4 + $0x8] sm:$0xff]
    %v340 = vld [vmem:[%s4 + $0x10] sm:$0xff]
    %v341 = vld [vmem:[%s4 + $0x18] sm:$0xff]
    %s342 = scalar_lea.vmem %s3, 24
    %v343 = vld [vmem:[%s342] sm:$0xff]
    %v344 = vld [vmem:[%s342 + $0x8] sm:$0xff]
    %v345 = vld [vmem:[%s342 + $0x10] sm:$0x3]
    %v347 = vsel %vm244, %v343, 0
    %v350 = vsel %vm244, %v344, 0
    %v353 = vsel %vm244, %v345, 0
    %355 = vmatprep.subr.mxu0 0.0
    %356 = vmatpush1.msra.mxu0 %v227
    %357 = vmatprep.subr.mxu0 0.0
    %358 = vmatpush1.msra.mxu0 %v228
    %359 = vmatprep.subr.mxu0 0.0
    %360 = vmatpush1.msra.mxu0 %v229
    %361 = vmatprep.subr.mxu0 0.0
    %362 = vmatpush1.msra.mxu0 %v230
    %363 = vmatprep.subr.mxu0 0.0
    %364 = vmatpush1.msra.mxu0 %v231
    %365 = vmatprep.subr.mxu0 0.0
    %366 = vmatpush1.msra.mxu0 %v232
    %367 = vmatprep.subr.mxu0 0.0
    %368 = vmatpush1.msra.mxu0 %v233
    %369 = vmatprep.subr.mxu0 0.0
    %370 = vmatpush1.msra.mxu0 %v234
    %371 = vmatprep.subr.mxu0 0.0
    %372 = vmatpush1.msra.mxu0 %v235
    %373 = vmatprep.subr.mxu0 0.0
    %374 = vmatpush1.msra.mxu0 %v236
    %375 = vmatprep.subr.mxu0 0.0
    %376 = vmatpush1.msra.mxu0 %v237
    %377 = vmatprep.subr.mxu0 0.0
    %378 = vmatpush1.msra.mxu0 %v238
    %379 = vmatprep.subr.mxu0 0.0
    %380 = vmatpush1.msra.mxu0 %v256
    %381 = vmatprep.subr.mxu0 0.0
    %382 = vmatpush1.msra.mxu0 0.0
    %383 = vmatprep.subr.mxu0 0.0
    %384 = vmatpush1.msra.mxu0 0.0
    %385 = vmatprep.subr.mxu0 0.0
    %386 = vmatpush1.msra.mxu0 0.0
    %387 = vmatprep.subr.mxu0 0.0
    %388 = vmatpush1.msra.mxu0 0.0
    %389 = vmatprep.subr.mxu0 0.0
    %390 = vmatpush1.msra.mxu0 0.0
    %391 = vmatprep.subr.mxu0 0.0
    %392 = vmatpush1.msra.mxu0 0.0
    %393 = vmatprep.subr.mxu0 0.0
    %394 = vmatpush1.msra.mxu0 0.0
    %395 = vmatprep.subr.mxu0 0.0
    %396 = vmatpush1.msra.mxu0 0.0
    %397 = vmatprep.subr.mxu0 0.0
    %398 = vmatpush1.msra.mxu0 0.0
    %399 = vmatprep.subr.mxu0 0.0
    %400 = vmatpush1.msra.mxu0 0.0
    %401 = vmatprep.subr.mxu0 0.0
    %402 = vmatpush1.msra.mxu0 0.0
    %403 = vmatprep.subr.mxu0 0.0
    %404 = vmatpush1.msra.mxu0 0.0
    %405 = vmatprep.subr.mxu0 0.0
    %406 = vmatpush1.msra.mxu0 0.0
    %407 = vmatprep.subr.mxu0 0.0
    %408 = vmatpush1.msra.mxu0 0.0
    %409 = vmatprep.subr.mxu0 0.0
    %410 = vmatpush1.msra.mxu0 0.0
    %411 = vmatprep.subr.mxu0 0.0
    %412 = vmatpush1.msra.mxu0 0.0
    %413 = vmatprep.subr.mxu0 0.0
    %414 = vmatpush1.msra.mxu0 0.0
    %415 = vmatprep.subr.mxu0 0.0
    %416 = vmatpush1.msra.mxu0 0.0
    %417 = vmatprep.subr.mxu0 0.0
    %418 = vmatpush1.msra.mxu0 0.0
    %419 = vmatprep.mubr.f32.mxu0 0.0
    %420 = vmatmul.mubr.f32.gmra.mrb[0].mxu0 %v347
    %v421 = vpop.f32.mrb[0].mxu0
    %v422 = vadd.f32 0.0, %v421
    %v423 = vpop.f32.mrb[0].mxu0
    %424 = vmatprep.mubr.f32.mxu0 0.0
    %425 = vmatmul.mubr.f32.gmra.mrb[0].mxu0 %v350
    %v426 = vpop.f32.mrb[0].mxu0
    %v427 = vadd.f32 0.0, %v426
    %v428 = vpop.f32.mrb[0].mxu0
    %429 = vmatprep.mubr.f32.mxu0 0.0
    %430 = vmatmul.mubr.f32.gmra.mrb[0].mxu0 %v353
    %v431 = vpop.f32.mrb[0].mxu0
    %v432 = vadd.f32 0.0, %v431
    %v433 = vpop.f32.mrb[0].mxu0
    %434 = vdwg.mxu0
    %s435 = scalar_lea.vmem %s4, 32
    %v436 = vld [vmem:[%s435] sm:$0xff]
    %v437 = vld [vmem:[%s435 + $0x8] sm:$0xff]
    %v438 = vld [vmem:[%s435 + $0x10] sm:$0xff]
    %v439 = vld [vmem:[%s435 + $0x18] sm:$0xff]
    %v441 = vsel %vm57, %v422, 0
    %v444 = vsel %vm57, %v427, 0
    %v447 = vsel %vm57, %v432, 0
    %449 = vmatprep.subr.mxu0 0.0
    %450 = vmatpush1.msra.mxu0 %v436
    %451 = vmatprep.subr.mxu0 0.0
    %452 = vmatpush1.msra.mxu0 %v437
    %453 = vmatprep.subr.mxu0 0.0
    %454 = vmatpush1.msra.mxu0 %v438
    %455 = vmatprep.subr.mxu0 0.0
    %456 = vmatpush1.msra.mxu0 %v439
    %457 = vmatprep.subr.mxu0 0.0
    %458 = vmatpush1.msra.mxu0 0.0
    %459 = vmatprep.subr.mxu0 0.0
    %460 = vmatpush1.msra.mxu0 0.0
    %461 = vmatprep.subr.mxu0 0.0
    %462 = vmatpush1.msra.mxu0 0.0
    %463 = vmatprep.subr.mxu0 0.0
    %464 = vmatpush1.msra.mxu0 0.0
    %465 = vmatprep.subr.mxu0 0.0
    %466 = vmatpush1.msra.mxu0 0.0
    %467 = vmatprep.subr.mxu0 0.0
    %468 = vmatpush1.msra.mxu0 0.0
    %469 = vmatprep.subr.mxu0 0.0
    %470 = vmatpush1.msra.mxu0 0.0
    %471 = vmatprep.subr.mxu0 0.0
    %472 = vmatpush1.msra.mxu0 0.0
    %473 = vmatprep.subr.mxu0 0.0
    %474 = vmatpush1.msra.mxu0 0.0
    %475 = vmatprep.subr.mxu0 0.0
    %476 = vmatpush1.msra.mxu0 0.0
    %477 = vmatprep.subr.mxu0 0.0
    %478 = vmatpush1.msra.mxu0 0.0
    %479 = vmatprep.subr.mxu0 0.0
    %480 = vmatpush1.msra.mxu0 0.0
    %481 = vmatprep.subr.mxu0 0.0
    %482 = vmatpush1.msra.mxu0 0.0
    %483 = vmatprep.subr.mxu0 0.0
    %484 = vmatpush1.msra.mxu0 0.0
    %485 = vmatprep.subr.mxu0 0.0
    %486 = vmatpush1.msra.mxu0 0.0
    %487 = vmatprep.subr.mxu0 0.0
    %488 = vmatpush1.msra.mxu0 0.0
    %489 = vmatprep.subr.mxu0 0.0
    %490 = vmatpush1.msra.mxu0 0.0
    %491 = vmatprep.subr.mxu0 0.0
    %492 = vmatpush1.msra.mxu0 0.0
    %493 = vmatprep.subr.mxu0 0.0
    %494 = vmatpush1.msra.mxu0 0.0
    %495 = vmatprep.subr.mxu0 0.0
    %496 = vmatpush1.msra.mxu0 0.0
    %497 = vmatprep.subr.mxu0 0.0
    %498 = vmatpush1.msra.mxu0 0.0
    %499 = vmatprep.subr.mxu0 0.0
    %500 = vmatpush1.msra.mxu0 0.0
    %501 = vmatprep.subr.mxu0 0.0
    %502 = vmatpush1.msra.mxu0 0.0
    %503 = vmatprep.subr.mxu0 0.0
    %504 = vmatpush1.msra.mxu0 0.0
    %505 = vmatprep.subr.mxu0 0.0
    %506 = vmatpush1.msra.mxu0 0.0
    %507 = vmatprep.subr.mxu0 0.0
    %508 = vmatpush1.msra.mxu0 0.0
    %509 = vmatprep.subr.mxu0 0.0
    %510 = vmatpush1.msra.mxu0 0.0
    %511 = vmatprep.subr.mxu0 0.0
    %512 = vmatpush1.msra.mxu0 0.0
    %513 = vmatprep.mubr.f32.mxu0 0.0
    %514 = vmatmul.mubr.f32.gmra.mrb[0].mxu0 %v441
    %v515 = vpop.f32.mrb[0].mxu0
    %v516 = vadd.f32 0.0, %v515
    %v517 = vpop.f32.mrb[0].mxu0
    %518 = vmatprep.mubr.f32.mxu0 0.0
    %519 = vmatmul.mubr.f32.gmra.mrb[0].mxu0 %v444
    %v520 = vpop.f32.mrb[0].mxu0
    %v521 = vadd.f32 0.0, %v520
    %v522 = vpop.f32.mrb[0].mxu0
    %523 = vmatprep.mubr.f32.mxu0 0.0
    %524 = vmatmul.mubr.f32.gmra.mrb[0].mxu0 %v447
    %v525 = vpop.f32.mrb[0].mxu0
    %v526 = vadd.f32 0.0, %v525
    %v527 = vpop.f32.mrb[0].mxu0
    %528 = vdwg.mxu0
    %v530 = vsel %vm57, %v325, 0
    %v533 = vsel %vm57, %v330, 0
    %v536 = vsel %vm57, %v335, 0
    %538 = vmatprep.subr.mxu0 0.0
    %539 = vmatpush1.msra.mxu0 %v338
    %540 = vmatprep.subr.mxu0 0.0
    %541 = vmatpush1.msra.mxu0 %v339
    %542 = vmatprep.subr.mxu0 0.0
    %543 = vmatpush1.msra.mxu0 %v340
    %544 = vmatprep.subr.mxu0 0.0
    %545 = vmatpush1.msra.mxu0 %v341
    %546 = vmatprep.subr.mxu0 0.0
    %547 = vmatpush1.msra.mxu0 0.0
    %548 = vmatprep.subr.mxu0 0.0
    %549 = vmatpush1.msra.mxu0 0.0
    %550 = vmatprep.subr.mxu0 0.0
    %551 = vmatpush1.msra.mxu0 0.0
    %552 = vmatprep.subr.mxu0 0.0
    %553 = vmatpush1.msra.mxu0 0.0
    %554 = vmatprep.subr.mxu0 0.0
    %555 = vmatpush1.msra.mxu0 0.0
    %556 = vmatprep.subr.mxu0 0.0
    %557 = vmatpush1.msra.mxu0 0.0
    %558 = vmatprep.subr.mxu0 0.0
    %559 = vmatpush1.msra.mxu0 0.0
    %560 = vmatprep.subr.mxu0 0.0
    %561 = vmatpush1.msra.mxu0 0.0
    %562 = vmatprep.subr.mxu0 0.0
    %563 = vmatpush1.msra.mxu0 0.0
    %564 = vmatprep.subr.mxu0 0.0
    %565 = vmatpush1.msra.mxu0 0.0
    %566 = vmatprep.subr.mxu0 0.0
    %567 = vmatpush1.msra.mxu0 0.0
    %568 = vmatprep.subr.mxu0 0.0
    %569 = vmatpush1.msra.mxu0 0.0
    %570 = vmatprep.subr.mxu0 0.0
    %571 = vmatpush1.msra.mxu0 0.0
    %572 = vmatprep.subr.mxu0 0.0
    %573 = vmatpush1.msra.mxu0 0.0
    %574 = vmatprep.subr.mxu0 0.0
    %575 = vmatpush1.msra.mxu0 0.0
    %576 = vmatprep.subr.mxu0 0.0
    %577 = vmatpush1.msra.mxu0 0.0
    %578 = vmatprep.subr.mxu0 0.0
    %579 = vmatpush1.msra.mxu0 0.0
    %580 = vmatprep.subr.mxu0 0.0
    %581 = vmatpush1.msra.mxu0 0.0
    %582 = vmatprep.subr.mxu0 0.0
    %583 = vmatpush1.msra.mxu0 0.0
    %584 = vmatprep.subr.mxu0 0.0
    %585 = vmatpush1.msra.mxu0 0.0
    %586 = vmatprep.subr.mxu0 0.0
    %587 = vmatpush1.msra.mxu0 0.0
    %588 = vmatprep.subr.mxu0 0.0
    %589 = vmatpush1.msra.mxu0 0.0
    %590 = vmatprep.subr.mxu0 0.0
    %591 = vmatpush1.msra.mxu0 0.0
    %592 = vmatprep.subr.mxu0 0.0
    %593 = vmatpush1.msra.mxu0 0.0
    %594 = vmatprep.subr.mxu0 0.0
    %595 = vmatpush1.msra.mxu0 0.0
    %596 = vmatprep.subr.mxu0 0.0
    %597 = vmatpush1.msra.mxu0 0.0
    %598 = vmatprep.subr.mxu0 0.0
    %599 = vmatpush1.msra.mxu0 0.0
    %600 = vmatprep.subr.mxu0 0.0
    %601 = vmatpush1.msra.mxu0 0.0
    %602 = vmatprep.mubr.f32.mxu0 0.0
    %603 = vmatmul.mubr.f32.gmra.mrb[0].mxu0 %v530
    %v604 = vpop.f32.mrb[0].mxu0
    %v605 = vadd.f32 %v516, %v604
    %v606 = vpop.f32.mrb[0].mxu0
    %607 = vmatprep.mubr.f32.mxu0 0.0
    %608 = vmatmul.mubr.f32.gmra.mrb[0].mxu0 %v533
    %v609 = vpop.f32.mrb[0].mxu0
    %v610 = vadd.f32 %v521, %v609
    %v611 = vpop.f32.mrb[0].mxu0
    %612 = vmatprep.mubr.f32.mxu0 0.0
    %613 = vmatmul.mubr.f32.gmra.mrb[0].mxu0 %v536
    %v614 = vpop.f32.mrb[0].mxu0
    %v615 = vadd.f32 %v526, %v614
    %v616 = vpop.f32.mrb[0].mxu0
    %617 = vdwg.mxu0
    %s618 = scalar_lea.vmem %s3, 48
    %v619 = vld [vmem:[%s618] sm:$0xff]
    %v620 = vld [vmem:[%s618 + $0x8] sm:$0xff]
    %v621 = vld [vmem:[%s618 + $0x10] sm:$0x3]
    %v623 = vsel %vm244, %v619, 0
    %v626 = vsel %vm244, %v620, 0
    %v629 = vsel %vm244, %v621, 0
    %631 = vmatprep.subr.mxu0 0.0
    %632 = vmatpush1.msra.mxu0 %v227
    %633 = vmatprep.subr.mxu0 0.0
    %634 = vmatpush1.msra.mxu0 %v228
    %635 = vmatprep.subr.mxu0 0.0
    %636 = vmatpush1.msra.mxu0 %v229
    %637 = vmatprep.subr.mxu0 0.0
    %638 = vmatpush1.msra.mxu0 %v230
    %639 = vmatprep.subr.mxu0 0.0
    %640 = vmatpush1.msra.mxu0 %v231
    %641 = vmatprep.subr.mxu0 0.0
    %642 = vmatpush1.msra.mxu0 %v232
    %643 = vmatprep.subr.mxu0 0.0
    %644 = vmatpush1.msra.mxu0 %v233
    %645 = vmatprep.subr.mxu0 0.0
    %646 = vmatpush1.msra.mxu0 %v234
    %647 = vmatprep.subr.mxu0 0.0
    %648 = vmatpush1.msra.mxu0 %v235
    %649 = vmatprep.subr.mxu0 0.0
    %650 = vmatpush1.msra.mxu0 %v236
    %651 = vmatprep.subr.mxu0 0.0
    %652 = vmatpush1.msra.mxu0 %v237
    %653 = vmatprep.subr.mxu0 0.0
    %654 = vmatpush1.msra.mxu0 %v238
    %655 = vmatprep.subr.mxu0 0.0
    %656 = vmatpush1.msra.mxu0 %v256
    %657 = vmatprep.subr.mxu0 0.0
    %658 = vmatpush1.msra.mxu0 0.0
    %659 = vmatprep.subr.mxu0 0.0
    %660 = vmatpush1.msra.mxu0 0.0
    %661 = vmatprep.subr.mxu0 0.0
    %662 = vmatpush1.msra.mxu0 0.0
    %663 = vmatprep.subr.mxu0 0.0
    %664 = vmatpush1.msra.mxu0 0.0
    %665 = vmatprep.subr.mxu0 0.0
    %666 = vmatpush1.msra.mxu0 0.0
    %667 = vmatprep.subr.mxu0 0.0
    %668 = vmatpush1.msra.mxu0 0.0
    %669 = vmatprep.subr.mxu0 0.0
    %670 = vmatpush1.msra.mxu0 0.0
    %671 = vmatprep.subr.mxu0 0.0
    %672 = vmatpush1.msra.mxu0 0.0
    %673 = vmatprep.subr.mxu0 0.0
    %674 = vmatpush1.msra.mxu0 0.0
    %675 = vmatprep.subr.mxu0 0.0
    %676 = vmatpush1.msra.mxu0 0.0
    %677 = vmatprep.subr.mxu0 0.0
    %678 = vmatpush1.msra.mxu0 0.0
    %679 = vmatprep.subr.mxu0 0.0
    %680 = vmatpush1.msra.mxu0 0.0
    %681 = vmatprep.subr.mxu0 0.0
    %682 = vmatpush1.msra.mxu0 0.0
    %683 = vmatprep.subr.mxu0 0.0
    %684 = vmatpush1.msra.mxu0 0.0
    %685 = vmatprep.subr.mxu0 0.0
    %686 = vmatpush1.msra.mxu0 0.0
    %687 = vmatprep.subr.mxu0 0.0
    %688 = vmatpush1.msra.mxu0 0.0
    %689 = vmatprep.subr.mxu0 0.0
    %690 = vmatpush1.msra.mxu0 0.0
    %691 = vmatprep.subr.mxu0 0.0
    %692 = vmatpush1.msra.mxu0 0.0
    %693 = vmatprep.subr.mxu0 0.0
    %694 = vmatpush1.msra.mxu0 0.0
    %695 = vmatprep.mubr.f32.mxu0 0.0
    %696 = vmatmul.mubr.f32.gmra.mrb[0].mxu0 %v623
    %v697 = vpop.f32.mrb[0].mxu0
    %v698 = vadd.f32 0.0, %v697
    %v699 = vpop.f32.mrb[0].mxu0
    %700 = vmatprep.mubr.f32.mxu0 0.0
    %701 = vmatmul.mubr.f32.gmra.mrb[0].mxu0 %v626
    %v702 = vpop.f32.mrb[0].mxu0
    %v703 = vadd.f32 0.0, %v702
    %v704 = vpop.f32.mrb[0].mxu0
    %705 = vmatprep.mubr.f32.mxu0 0.0
    %706 = vmatmul.mubr.f32.gmra.mrb[0].mxu0 %v629
    %v707 = vpop.f32.mrb[0].mxu0
    %v708 = vadd.f32 0.0, %v707
    %v709 = vpop.f32.mrb[0].mxu0
    %710 = vdwg.mxu0
    %s711 = scalar_lea.vmem %s4, 64
    %v712 = vld [vmem:[%s711] sm:$0xff]
    %v713 = vld [vmem:[%s711 + $0x8] sm:$0xff]
    %v714 = vld [vmem:[%s711 + $0x10] sm:$0xff]
    %v715 = vld [vmem:[%s711 + $0x18] sm:$0xff]
    %v717 = vsel %vm57, %v698, 0
    %v720 = vsel %vm57, %v703, 0
    %v723 = vsel %vm57, %v708, 0
    %725 = vmatprep.subr.mxu0 0.0
    %726 = vmatpush1.msra.mxu0 %v712
    %727 = vmatprep.subr.mxu0 0.0
    %728 = vmatpush1.msra.mxu0 %v713
    %729 = vmatprep.subr.mxu0 0.0
    %730 = vmatpush1.msra.mxu0 %v714
    %731 = vmatprep.subr.mxu0 0.0
    %732 = vmatpush1.msra.mxu0 %v715
    %733 = vmatprep.subr.mxu0 0.0
    %734 = vmatpush1.msra.mxu0 0.0
    %735 = vmatprep.subr.mxu0 0.0
    %736 = vmatpush1.msra.mxu0 0.0
    %737 = vmatprep.subr.mxu0 0.0
    %738 = vmatpush1.msra.mxu0 0.0
    %739 = vmatprep.subr.mxu0 0.0
    %740 = vmatpush1.msra.mxu0 0.0
    %741 = vmatprep.subr.mxu0 0.0
    %742 = vmatpush1.msra.mxu0 0.0
    %743 = vmatprep.subr.mxu0 0.0
    %744 = vmatpush1.msra.mxu0 0.0
    %745 = vmatprep.subr.mxu0 0.0
    %746 = vmatpush1.msra.mxu0 0.0
    %747 = vmatprep.subr.mxu0 0.0
    %748 = vmatpush1.msra.mxu0 0.0
    %749 = vmatprep.subr.mxu0 0.0
    %750 = vmatpush1.msra.mxu0 0.0
    %751 = vmatprep.subr.mxu0 0.0
    %752 = vmatpush1.msra.mxu0 0.0
    %753 = vmatprep.subr.mxu0 0.0
    %754 = vmatpush1.msra.mxu0 0.0
    %755 = vmatprep.subr.mxu0 0.0
    %756 = vmatpush1.msra.mxu0 0.0
    %757 = vmatprep.subr.mxu0 0.0
    %758 = vmatpush1.msra.mxu0 0.0
    %759 = vmatprep.subr.mxu0 0.0
    %760 = vmatpush1.msra.mxu0 0.0
    %761 = vmatprep.subr.mxu0 0.0
    %762 = vmatpush1.msra.mxu0 0.0
    %763 = vmatprep.subr.mxu0 0.0
    %764 = vmatpush1.msra.mxu0 0.0
    %765 = vmatprep.subr.mxu0 0.0
    %766 = vmatpush1.msra.mxu0 0.0
    %767 = vmatprep.subr.mxu0 0.0
    %768 = vmatpush1.msra.mxu0 0.0
    %769 = vmatprep.subr.mxu0 0.0
    %770 = vmatpush1.msra.mxu0 0.0
    %771 = vmatprep.subr.mxu0 0.0
    %772 = vmatpush1.msra.mxu0 0.0
    %773 = vmatprep.subr.mxu0 0.0
    %774 = vmatpush1.msra.mxu0 0.0
    %775 = vmatprep.subr.mxu0 0.0
    %776 = vmatpush1.msra.mxu0 0.0
    %777 = vmatprep.subr.mxu0 0.0
    %778 = vmatpush1.msra.mxu0 0.0
    %779 = vmatprep.subr.mxu0 0.0
    %780 = vmatpush1.msra.mxu0 0.0
    %781 = vmatprep.subr.mxu0 0.0
    %782 = vmatpush1.msra.mxu0 0.0
    %783 = vmatprep.subr.mxu0 0.0
    %784 = vmatpush1.msra.mxu0 0.0
    %785 = vmatprep.subr.mxu0 0.0
    %786 = vmatpush1.msra.mxu0 0.0
    %787 = vmatprep.subr.mxu0 0.0
    %788 = vmatpush1.msra.mxu0 0.0
    %789 = vmatprep.mubr.f32.mxu0 0.0
    %790 = vmatmul.mubr.f32.gmra.mrb[0].mxu0 %v717
    %v791 = vpop.f32.mrb[0].mxu0
    %v792 = vadd.f32 0.0, %v791
    %v793 = vpop.f32.mrb[0].mxu0
    %794 = vmatprep.mubr.f32.mxu0 0.0
    %795 = vmatmul.mubr.f32.gmra.mrb[0].mxu0 %v720
    %v796 = vpop.f32.mrb[0].mxu0
    %v797 = vadd.f32 0.0, %v796
    %v798 = vpop.f32.mrb[0].mxu0
    %799 = vmatprep.mubr.f32.mxu0 0.0
    %800 = vmatmul.mubr.f32.gmra.mrb[0].mxu0 %v723
    %v801 = vpop.f32.mrb[0].mxu0
    %v802 = vadd.f32 0.0, %v801
    %v803 = vpop.f32.mrb[0].mxu0
    %804 = vdwg.mxu0
    %v805 = vadd.f32 %v605, %v792
    %v806 = vadd.f32 %v610, %v797
    %v807 = vadd.f32 %v615, %v802
    %s808 = scalar_lea.vmem %s3, 72
    %v809 = vld [vmem:[%s808] sm:$0xff]
    %v810 = vld [vmem:[%s808 + $0x8] sm:$0xff]
    %v811 = vld [vmem:[%s808 + $0x10] sm:$0x3]
    %v813 = vsel %vm244, %v809, 0
    %v816 = vsel %vm244, %v810, 0
    %v819 = vsel %vm244, %v811, 0
    %821 = vmatprep.subr.mxu0 0.0
    %822 = vmatpush1.msra.mxu0 %v227
    %823 = vmatprep.subr.mxu0 0.0
    %824 = vmatpush1.msra.mxu0 %v228
    %825 = vmatprep.subr.mxu0 0.0
    %826 = vmatpush1.msra.mxu0 %v229
    %827 = vmatprep.subr.mxu0 0.0
    %828 = vmatpush1.msra.mxu0 %v230
    %829 = vmatprep.subr.mxu0 0.0
    %830 = vmatpush1.msra.mxu0 %v231
    %831 = vmatprep.subr.mxu0 0.0
    %832 = vmatpush1.msra.mxu0 %v232
    %833 = vmatprep.subr.mxu0 0.0
    %834 = vmatpush1.msra.mxu0 %v233
    %835 = vmatprep.subr.mxu0 0.0
    %836 = vmatpush1.msra.mxu0 %v234
    %837 = vmatprep.subr.mxu0 0.0
    %838 = vmatpush1.msra.mxu0 %v235
    %839 = vmatprep.subr.mxu0 0.0
    %840 = vmatpush1.msra.mxu0 %v236
    %841 = vmatprep.subr.mxu0 0.0
    %842 = vmatpush1.msra.mxu0 %v237
    %843 = vmatprep.subr.mxu0 0.0
    %844 = vmatpush1.msra.mxu0 %v238
    %845 = vmatprep.subr.mxu0 0.0
    %846 = vmatpush1.msra.mxu0 %v256
    %847 = vmatprep.subr.mxu0 0.0
    %848 = vmatpush1.msra.mxu0 0.0
    %849 = vmatprep.subr.mxu0 0.0
    %850 = vmatpush1.msra.mxu0 0.0
    %851 = vmatprep.subr.mxu0 0.0
    %852 = vmatpush1.msra.mxu0 0.0
    %853 = vmatprep.subr.mxu0 0.0
    %854 = vmatpush1.msra.mxu0 0.0
    %855 = vmatprep.subr.mxu0 0.0
    %856 = vmatpush1.msra.mxu0 0.0
    %857 = vmatprep.subr.mxu0 0.0
    %858 = vmatpush1.msra.mxu0 0.0
    %859 = vmatprep.subr.mxu0 0.0
    %860 = vmatpush1.msra.mxu0 0.0
    %861 = vmatprep.subr.mxu0 0.0
    %862 = vmatpush1.msra.mxu0 0.0
    %863 = vmatprep.subr.mxu0 0.0
    %864 = vmatpush1.msra.mxu0 0.0
    %865 = vmatprep.subr.mxu0 0.0
    %866 = vmatpush1.msra.mxu0 0.0
    %867 = vmatprep.subr.mxu0 0.0
    %868 = vmatpush1.msra.mxu0 0.0
    %869 = vmatprep.subr.mxu0 0.0
    %870 = vmatpush1.msra.mxu0 0.0
    %871 = vmatprep.subr.mxu0 0.0
    %872 = vmatpush1.msra.mxu0 0.0
    %873 = vmatprep.subr.mxu0 0.0
    %874 = vmatpush1.msra.mxu0 0.0
    %875 = vmatprep.subr.mxu0 0.0
    %876 = vmatpush1.msra.mxu0 0.0
    %877 = vmatprep.subr.mxu0 0.0
    %878 = vmatpush1.msra.mxu0 0.0
    %879 = vmatprep.subr.mxu0 0.0
    %880 = vmatpush1.msra.mxu0 0.0
    %881 = vmatprep.subr.mxu0 0.0
    %882 = vmatpush1.msra.mxu0 0.0
    %883 = vmatprep.subr.mxu0 0.0
    %884 = vmatpush1.msra.mxu0 0.0
    %885 = vmatprep.mubr.f32.mxu0 0.0
    %886 = vmatmul.mubr.f32.gmra.mrb[0].mxu0 %v813
    %v887 = vpop.f32.mrb[0].mxu0
    %v888 = vadd.f32 0.0, %v887
    %v889 = vpop.f32.mrb[0].mxu0
    %890 = vmatprep.mubr.f32.mxu0 0.0
    %891 = vmatmul.mubr.f32.gmra.mrb[0].mxu0 %v816
    %v892 = vpop.f32.mrb[0].mxu0
    %v893 = vadd.f32 0.0, %v892
    %v894 = vpop.f32.mrb[0].mxu0
    %895 = vmatprep.mubr.f32.mxu0 0.0
    %896 = vmatmul.mubr.f32.gmra.mrb[0].mxu0 %v819
    %v897 = vpop.f32.mrb[0].mxu0
    %v898 = vadd.f32 0.0, %v897
    %v899 = vpop.f32.mrb[0].mxu0
    %900 = vdwg.mxu0
    %s901 = scalar_lea.vmem %s4, 96
    %v902 = vld [vmem:[%s901] sm:$0xff]
    %v903 = vld [vmem:[%s901 + $0x8] sm:$0xff]
    %v904 = vld [vmem:[%s901 + $0x10] sm:$0xff]
    %v905 = vld [vmem:[%s901 + $0x18] sm:$0xff]
    %v907 = vsel %vm57, %v888, 0
    %v910 = vsel %vm57, %v893, 0
    %v913 = vsel %vm57, %v898, 0
    %915 = vmatprep.subr.mxu0 0.0
    %916 = vmatpush1.msra.mxu0 %v902
    %917 = vmatprep.subr.mxu0 0.0
    %918 = vmatpush1.msra.mxu0 %v903
    %919 = vmatprep.subr.mxu0 0.0
    %920 = vmatpush1.msra.mxu0 %v904
    %921 = vmatprep.subr.mxu0 0.0
    %922 = vmatpush1.msra.mxu0 %v905
    %923 = vmatprep.subr.mxu0 0.0
    %924 = vmatpush1.msra.mxu0 0.0
    %925 = vmatprep.subr.mxu0 0.0
    %926 = vmatpush1.msra.mxu0 0.0
    %927 = vmatprep.subr.mxu0 0.0
    %928 = vmatpush1.msra.mxu0 0.0
    %929 = vmatprep.subr.mxu0 0.0
    %930 = vmatpush1.msra.mxu0 0.0
    %931 = vmatprep.subr.mxu0 0.0
    %932 = vmatpush1.msra.mxu0 0.0
    %933 = vmatprep.subr.mxu0 0.0
    %934 = vmatpush1.msra.mxu0 0.0
    %935 = vmatprep.subr.mxu0 0.0
    %936 = vmatpush1.msra.mxu0 0.0
    %937 = vmatprep.subr.mxu0 0.0
    %938 = vmatpush1.msra.mxu0 0.0
    %939 = vmatprep.subr.mxu0 0.0
    %940 = vmatpush1.msra.mxu0 0.0
    %941 = vmatprep.subr.mxu0 0.0
    %942 = vmatpush1.msra.mxu0 0.0
    %943 = vmatprep.subr.mxu0 0.0
    %944 = vmatpush1.msra.mxu0 0.0
    %945 = vmatprep.subr.mxu0 0.0
    %946 = vmatpush1.msra.mxu0 0.0
    %947 = vmatprep.subr.mxu0 0.0
    %948 = vmatpush1.msra.mxu0 0.0
    %949 = vmatprep.subr.mxu0 0.0
    %950 = vmatpush1.msra.mxu0 0.0
    %951 = vmatprep.subr.mxu0 0.0
    %952 = vmatpush1.msra.mxu0 0.0
    %953 = vmatprep.subr.mxu0 0.0
    %954 = vmatpush1.msra.mxu0 0.0
    %955 = vmatprep.subr.mxu0 0.0
    %956 = vmatpush1.msra.mxu0 0.0
    %957 = vmatprep.subr.mxu0 0.0
    %958 = vmatpush1.msra.mxu0 0.0
    %959 = vmatprep.subr.mxu0 0.0
    %960 = vmatpush1.msra.mxu0 0.0
    %961 = vmatprep.subr.mxu0 0.0
    %962 = vmatpush1.msra.mxu0 0.0
    %963 = vmatprep.subr.mxu0 0.0
    %964 = vmatpush1.msra.mxu0 0.0
    %965 = vmatprep.subr.mxu0 0.0
    %966 = vmatpush1.msra.mxu0 0.0
    %967 = vmatprep.subr.mxu0 0.0
    %968 = vmatpush1.msra.mxu0 0.0
    %969 = vmatprep.subr.mxu0 0.0
    %970 = vmatpush1.msra.mxu0 0.0
    %971 = vmatprep.subr.mxu0 0.0
    %972 = vmatpush1.msra.mxu0 0.0
    %973 = vmatprep.subr.mxu0 0.0
    %974 = vmatpush1.msra.mxu0 0.0
    %975 = vmatprep.subr.mxu0 0.0
    %976 = vmatpush1.msra.mxu0 0.0
    %977 = vmatprep.subr.mxu0 0.0
    %978 = vmatpush1.msra.mxu0 0.0
    %979 = vmatprep.mubr.f32.mxu0 0.0
    %980 = vmatmul.mubr.f32.gmra.mrb[0].mxu0 %v907
    %v981 = vpop.f32.mrb[0].mxu0
    %v982 = vadd.f32 0.0, %v981
    %v983 = vpop.f32.mrb[0].mxu0
    %984 = vmatprep.mubr.f32.mxu0 0.0
    %985 = vmatmul.mubr.f32.gmra.mrb[0].mxu0 %v910
    %v986 = vpop.f32.mrb[0].mxu0
    %v987 = vadd.f32 0.0, %v986
    %v988 = vpop.f32.mrb[0].mxu0
    %989 = vmatprep.mubr.f32.mxu0 0.0
    %990 = vmatmul.mubr.f32.gmra.mrb[0].mxu0 %v913
    %v991 = vpop.f32.mrb[0].mxu0
    %v992 = vadd.f32 0.0, %v991
    %v993 = vpop.f32.mrb[0].mxu0
    %994 = vdwg.mxu0
    %v995 = vadd.f32 %v805, %v982
    %v996 = vadd.f32 %v806, %v987
    %v997 = vadd.f32 %v807, %v992
    %s998 = scalar_lea.vmem %s3, 96
    %v999 = vld [vmem:[%s998] sm:$0xff]
    %v1000 = vld [vmem:[%s998 + $0x8] sm:$0xff]
    %v1001 = vld [vmem:[%s998 + $0x10] sm:$0x3]
    %v1003 = vsel %vm244, %v999, 0
    %v1006 = vsel %vm244, %v1000, 0
    %v1009 = vsel %vm244, %v1001, 0
    %1011 = vmatprep.subr.mxu0 0.0
    %1012 = vmatpush1.msra.mxu0 %v227
    %1013 = vmatprep.subr.mxu0 0.0
    %1014 = vmatpush1.msra.mxu0 %v228
    %1015 = vmatprep.subr.mxu0 0.0
    %1016 = vmatpush1.msra.mxu0 %v229
    %1017 = vmatprep.subr.mxu0 0.0
    %1018 = vmatpush1.msra.mxu0 %v230
    %1019 = vmatprep.subr.mxu0 0.0
    %1020 = vmatpush1.msra.mxu0 %v231
    %1021 = vmatprep.subr.mxu0 0.0
    %1022 = vmatpush1.msra.mxu0 %v232
    %1023 = vmatprep.subr.mxu0 0.0
    %1024 = vmatpush1.msra.mxu0 %v233
    %1025 = vmatprep.subr.mxu0 0.0
    %1026 = vmatpush1.msra.mxu0 %v234
    %1027 = vmatprep.subr.mxu0 0.0
    %1028 = vmatpush1.msra.mxu0 %v235
    %1029 = vmatprep.subr.mxu0 0.0
    %1030 = vmatpush1.msra.mxu0 %v236
    %1031 = vmatprep.subr.mxu0 0.0
    %1032 = vmatpush1.msra.mxu0 %v237
    %1033 = vmatprep.subr.mxu0 0.0
    %1034 = vmatpush1.msra.mxu0 %v238
    %1035 = vmatprep.subr.mxu0 0.0
    %1036 = vmatpush1.msra.mxu0 %v256
    %1037 = vmatprep.subr.mxu0 0.0
    %1038 = vmatpush1.msra.mxu0 0.0
    %1039 = vmatprep.subr.mxu0 0.0
    %1040 = vmatpush1.msra.mxu0 0.0
    %1041 = vmatprep.subr.mxu0 0.0
    %1042 = vmatpush1.msra.mxu0 0.0
    %1043 = vmatprep.subr.mxu0 0.0
    %1044 = vmatpush1.msra.mxu0 0.0
    %1045 = vmatprep.subr.mxu0 0.0
    %1046 = vmatpush1.msra.mxu0 0.0
    %1047 = vmatprep.subr.mxu0 0.0
    %1048 = vmatpush1.msra.mxu0 0.0
    %1049 = vmatprep.subr.mxu0 0.0
    %1050 = vmatpush1.msra.mxu0 0.0
    %1051 = vmatprep.subr.mxu0 0.0
    %1052 = vmatpush1.msra.mxu0 0.0
    %1053 = vmatprep.subr.mxu0 0.0
    %1054 = vmatpush1.msra.mxu0 0.0
    %1055 = vmatprep.subr.mxu0 0.0
    %1056 = vmatpush1.msra.mxu0 0.0
    %1057 = vmatprep.subr.mxu0 0.0
    %1058 = vmatpush1.msra.mxu0 0.0
    %1059 = vmatprep.subr.mxu0 0.0
    %1060 = vmatpush1.msra.mxu0 0.0
    %1061 = vmatprep.subr.mxu0 0.0
    %1062 = vmatpush1.msra.mxu0 0.0
    %1063 = vmatprep.subr.mxu0 0.0
    %1064 = vmatpush1.msra.mxu0 0.0
    %1065 = vmatprep.subr.mxu0 0.0
    %1066 = vmatpush1.msra.mxu0 0.0
    %1067 = vmatprep.subr.mxu0 0.0
    %1068 = vmatpush1.msra.mxu0 0.0
    %1069 = vmatprep.subr.mxu0 0.0
    %1070 = vmatpush1.msra.mxu0 0.0
    %1071 = vmatprep.subr.mxu0 0.0
    %1072 = vmatpush1.msra.mxu0 0.0
    %1073 = vmatprep.subr.mxu0 0.0
    %1074 = vmatpush1.msra.mxu0 0.0
    %1075 = vmatprep.mubr.f32.mxu0 0.0
    %1076 = vmatmul.mubr.f32.gmra.mrb[0].mxu0 %v1003
    %v1077 = vpop.f32.mrb[0].mxu0
    %v1078 = vadd.f32 0.0, %v1077
    %v1079 = vpop.f32.mrb[0].mxu0
    %1080 = vmatprep.mubr.f32.mxu0 0.0
    %1081 = vmatmul.mubr.f32.gmra.mrb[0].mxu0 %v1006
    %v1082 = vpop.f32.mrb[0].mxu0
    %v1083 = vadd.f32 0.0, %v1082
    %v1084 = vpop.f32.mrb[0].mxu0
    %1085 = vmatprep.mubr.f32.mxu0 0.0
    %1086 = vmatmul.mubr.f32.gmra.mrb[0].mxu0 %v1009
    %v1087 = vpop.f32.mrb[0].mxu0
    %v1088 = vadd.f32 0.0, %v1087
    %v1089 = vpop.f32.mrb[0].mxu0
    %1090 = vdwg.mxu0
    %s1091 = scalar_lea.vmem %s4, 128
    %v1092 = vld [vmem:[%s1091] sm:$0xff]
    %v1093 = vld [vmem:[%s1091 + $0x8] sm:$0xff]
    %v1094 = vld [vmem:[%s1091 + $0x10] sm:$0xff]
    %v1095 = vld [vmem:[%s1091 + $0x18] sm:$0xff]
    %v1097 = vsel %vm57, %v1078, 0
    %v1100 = vsel %vm57, %v1083, 0
    %v1103 = vsel %vm57, %v1088, 0
    %1105 = vmatprep.subr.mxu0 0.0
    %1106 = vmatpush1.msra.mxu0 %v1092
    %1107 = vmatprep.subr.mxu0 0.0
    %1108 = vmatpush1.msra.mxu0 %v1093
    %1109 = vmatprep.subr.mxu0 0.0
    %1110 = vmatpush1.msra.mxu0 %v1094
    %1111 = vmatprep.subr.mxu0 0.0
    %1112 = vmatpush1.msra.mxu0 %v1095
    %1113 = vmatprep.subr.mxu0 0.0
    %1114 = vmatpush1.msra.mxu0 0.0
    %1115 = vmatprep.subr.mxu0 0.0
    %1116 = vmatpush1.msra.mxu0 0.0
    %1117 = vmatprep.subr.mxu0 0.0
    %1118 = vmatpush1.msra.mxu0 0.0
    %1119 = vmatprep.subr.mxu0 0.0
    %1120 = vmatpush1.msra.mxu0 0.0
    %1121 = vmatprep.subr.mxu0 0.0
    %1122 = vmatpush1.msra.mxu0 0.0
    %1123 = vmatprep.subr.mxu0 0.0
    %1124 = vmatpush1.msra.mxu0 0.0
    %1125 = vmatprep.subr.mxu0 0.0
    %1126 = vmatpush1.msra.mxu0 0.0
    %1127 = vmatprep.subr.mxu0 0.0
    %1128 = vmatpush1.msra.mxu0 0.0
    %1129 = vmatprep.subr.mxu0 0.0
    %1130 = vmatpush1.msra.mxu0 0.0
    %1131 = vmatprep.subr.mxu0 0.0
    %1132 = vmatpush1.msra.mxu0 0.0
    %1133 = vmatprep.subr.mxu0 0.0
    %1134 = vmatpush1.msra.mxu0 0.0
    %1135 = vmatprep.subr.mxu0 0.0
    %1136 = vmatpush1.msra.mxu0 0.0
    %1137 = vmatprep.subr.mxu0 0.0
    %1138 = vmatpush1.msra.mxu0 0.0
    %1139 = vmatprep.subr.mxu0 0.0
    %1140 = vmatpush1.msra.mxu0 0.0
    %1141 = vmatprep.subr.mxu0 0.0
    %1142 = vmatpush1.msra.mxu0 0.0
    %1143 = vmatprep.subr.mxu0 0.0
    %1144 = vmatpush1.msra.mxu0 0.0
    %1145 = vmatprep.subr.mxu0 0.0
    %1146 = vmatpush1.msra.mxu0 0.0
    %1147 = vmatprep.subr.mxu0 0.0
    %1148 = vmatpush1.msra.mxu0 0.0
    %1149 = vmatprep.subr.mxu0 0.0
    %1150 = vmatpush1.msra.mxu0 0.0
    %1151 = vmatprep.subr.mxu0 0.0
    %1152 = vmatpush1.msra.mxu0 0.0
    %1153 = vmatprep.subr.mxu0 0.0
    %1154 = vmatpush1.msra.mxu0 0.0
    %1155 = vmatprep.subr.mxu0 0.0
    %1156 = vmatpush1.msra.mxu0 0.0
    %1157 = vmatprep.subr.mxu0 0.0
    %1158 = vmatpush1.msra.mxu0 0.0
    %1159 = vmatprep.subr.mxu0 0.0
    %1160 = vmatpush1.msra.mxu0 0.0
    %1161 = vmatprep.subr.mxu0 0.0
    %1162 = vmatpush1.msra.mxu0 0.0
    %1163 = vmatprep.subr.mxu0 0.0
    %1164 = vmatpush1.msra.mxu0 0.0
    %1165 = vmatprep.subr.mxu0 0.0
    %1166 = vmatpush1.msra.mxu0 0.0
    %1167 = vmatprep.subr.mxu0 0.0
    %1168 = vmatpush1.msra.mxu0 0.0
    %1169 = vmatprep.mubr.f32.mxu0 0.0
    %1170 = vmatmul.mubr.f32.gmra.mrb[0].mxu0 %v1097
    %v1171 = vpop.f32.mrb[0].mxu0
    %v1172 = vadd.f32 0.0, %v1171
    %v1173 = vpop.f32.mrb[0].mxu0
    %1174 = vmatprep.mubr.f32.mxu0 0.0
    %1175 = vmatmul.mubr.f32.gmra.mrb[0].mxu0 %v1100
    %v1176 = vpop.f32.mrb[0].mxu0
    %v1177 = vadd.f32 0.0, %v1176
    %v1178 = vpop.f32.mrb[0].mxu0
    %1179 = vmatprep.mubr.f32.mxu0 0.0
    %1180 = vmatmul.mubr.f32.gmra.mrb[0].mxu0 %v1103
    %v1181 = vpop.f32.mrb[0].mxu0
    %v1182 = vadd.f32 0.0, %v1181
    %v1183 = vpop.f32.mrb[0].mxu0
    %1184 = vdwg.mxu0
    %v1185 = vadd.f32 %v995, %v1172
    %v1186 = vadd.f32 %v996, %v1177
    %v1187 = vadd.f32 %v997, %v1182
    %s1188 = scalar_lea.vmem %s3, 120
    %v1189 = vld [vmem:[%s1188] sm:$0xff]
    %v1190 = vld [vmem:[%s1188 + $0x8] sm:$0xff]
    %v1191 = vld [vmem:[%s1188 + $0x10] sm:$0x3]
    %v1193 = vsel %vm244, %v1189, 0
    %v1196 = vsel %vm244, %v1190, 0
    %v1199 = vsel %vm244, %v1191, 0
    %1201 = vmatprep.subr.mxu0 0.0
    %1202 = vmatpush1.msra.mxu0 %v227
    %1203 = vmatprep.subr.mxu0 0.0
    %1204 = vmatpush1.msra.mxu0 %v228
    %1205 = vmatprep.subr.mxu0 0.0
    %1206 = vmatpush1.msra.mxu0 %v229
    %1207 = vmatprep.subr.mxu0 0.0
    %1208 = vmatpush1.msra.mxu0 %v230
    %1209 = vmatprep.subr.mxu0 0.0
    %1210 = vmatpush1.msra.mxu0 %v231
    %1211 = vmatprep.subr.mxu0 0.0
    %1212 = vmatpush1.msra.mxu0 %v232
    %1213 = vmatprep.subr.mxu0 0.0
    %1214 = vmatpush1.msra.mxu0 %v233
    %1215 = vmatprep.subr.mxu0 0.0
    %1216 = vmatpush1.msra.mxu0 %v234
    %1217 = vmatprep.subr.mxu0 0.0
    %1218 = vmatpush1.msra.mxu0 %v235
    %1219 = vmatprep.subr.mxu0 0.0
    %1220 = vmatpush1.msra.mxu0 %v236
    %1221 = vmatprep.subr.mxu0 0.0
    %1222 = vmatpush1.msra.mxu0 %v237
    %1223 = vmatprep.subr.mxu0 0.0
    %1224 = vmatpush1.msra.mxu0 %v238
    %1225 = vmatprep.subr.mxu0 0.0
    %1226 = vmatpush1.msra.mxu0 %v256
    %1227 = vmatprep.subr.mxu0 0.0
    %1228 = vmatpush1.msra.mxu0 0.0
    %1229 = vmatprep.subr.mxu0 0.0
    %1230 = vmatpush1.msra.mxu0 0.0
    %1231 = vmatprep.subr.mxu0 0.0
    %1232 = vmatpush1.msra.mxu0 0.0
    %1233 = vmatprep.subr.mxu0 0.0
    %1234 = vmatpush1.msra.mxu0 0.0
    %1235 = vmatprep.subr.mxu0 0.0
    %1236 = vmatpush1.msra.mxu0 0.0
    %1237 = vmatprep.subr.mxu0 0.0
    %1238 = vmatpush1.msra.mxu0 0.0
    %1239 = vmatprep.subr.mxu0 0.0
    %1240 = vmatpush1.msra.mxu0 0.0
    %1241 = vmatprep.subr.mxu0 0.0
    %1242 = vmatpush1.msra.mxu0 0.0
    %1243 = vmatprep.subr.mxu0 0.0
    %1244 = vmatpush1.msra.mxu0 0.0
    %1245 = vmatprep.subr.mxu0 0.0
    %1246 = vmatpush1.msra.mxu0 0.0
    %1247 = vmatprep.subr.mxu0 0.0
    %1248 = vmatpush1.msra.mxu0 0.0
    %1249 = vmatprep.subr.mxu0 0.0
    %1250 = vmatpush1.msra.mxu0 0.0
    %1251 = vmatprep.subr.mxu0 0.0
    %1252 = vmatpush1.msra.mxu0 0.0
    %1253 = vmatprep.subr.mxu0 0.0
    %1254 = vmatpush1.msra.mxu0 0.0
    %1255 = vmatprep.subr.mxu0 0.0
    %1256 = vmatpush1.msra.mxu0 0.0
    %1257 = vmatprep.subr.mxu0 0.0
    %1258 = vmatpush1.msra.mxu0 0.0
    %1259 = vmatprep.subr.mxu0 0.0
    %1260 = vmatpush1.msra.mxu0 0.0
    %1261 = vmatprep.subr.mxu0 0.0
    %1262 = vmatpush1.msra.mxu0 0.0
    %1263 = vmatprep.subr.mxu0 0.0
    %1264 = vmatpush1.msra.mxu0 0.0
    %1265 = vmatprep.mubr.f32.mxu0 0.0
    %1266 = vmatmul.mubr.f32.gmra.mrb[0].mxu0 %v1193
    %v1267 = vpop.f32.mrb[0].mxu0
    %v1268 = vadd.f32 0.0, %v1267
    %v1269 = vpop.f32.mrb[0].mxu0
    %1270 = vmatprep.mubr.f32.mxu0 0.0
    %1271 = vmatmul.mubr.f32.gmra.mrb[0].mxu0 %v1196
    %v1272 = vpop.f32.mrb[0].mxu0
    %v1273 = vadd.f32 0.0, %v1272
    %v1274 = vpop.f32.mrb[0].mxu0
    %1275 = vmatprep.mubr.f32.mxu0 0.0
    %1276 = vmatmul.mubr.f32.gmra.mrb[0].mxu0 %v1199
    %v1277 = vpop.f32.mrb[0].mxu0
    %v1278 = vadd.f32 0.0, %v1277
    %v1279 = vpop.f32.mrb[0].mxu0
    %1280 = vdwg.mxu0
    %s1281 = scalar_lea.vmem %s4, 160
    %v1282 = vld [vmem:[%s1281] sm:$0xff]
    %v1283 = vld [vmem:[%s1281 + $0x8] sm:$0xff]
    %v1284 = vld [vmem:[%s1281 + $0x10] sm:$0xff]
    %v1285 = vld [vmem:[%s1281 + $0x18] sm:$0xff]
    %v1287 = vsel %vm57, %v1268, 0
    %v1290 = vsel %vm57, %v1273, 0
    %v1293 = vsel %vm57, %v1278, 0
    %1295 = vmatprep.subr.mxu0 0.0
    %1296 = vmatpush1.msra.mxu0 %v1282
    %1297 = vmatprep.subr.mxu0 0.0
    %1298 = vmatpush1.msra.mxu0 %v1283
    %1299 = vmatprep.subr.mxu0 0.0
    %1300 = vmatpush1.msra.mxu0 %v1284
    %1301 = vmatprep.subr.mxu0 0.0
    %1302 = vmatpush1.msra.mxu0 %v1285
    %1303 = vmatprep.subr.mxu0 0.0
    %1304 = vmatpush1.msra.mxu0 0.0
    %1305 = vmatprep.subr.mxu0 0.0
    %1306 = vmatpush1.msra.mxu0 0.0
    %1307 = vmatprep.subr.mxu0 0.0
    %1308 = vmatpush1.msra.mxu0 0.0
    %1309 = vmatprep.subr.mxu0 0.0
    %1310 = vmatpush1.msra.mxu0 0.0
    %1311 = vmatprep.subr.mxu0 0.0
    %1312 = vmatpush1.msra.mxu0 0.0
    %1313 = vmatprep.subr.mxu0 0.0
    %1314 = vmatpush1.msra.mxu0 0.0
    %1315 = vmatprep.subr.mxu0 0.0
    %1316 = vmatpush1.msra.mxu0 0.0
    %1317 = vmatprep.subr.mxu0 0.0
    %1318 = vmatpush1.msra.mxu0 0.0
    %1319 = vmatprep.subr.mxu0 0.0
    %1320 = vmatpush1.msra.mxu0 0.0
    %1321 = vmatprep.subr.mxu0 0.0
    %1322 = vmatpush1.msra.mxu0 0.0
    %1323 = vmatprep.subr.mxu0 0.0
    %1324 = vmatpush1.msra.mxu0 0.0
    %1325 = vmatprep.subr.mxu0 0.0
    %1326 = vmatpush1.msra.mxu0 0.0
    %1327 = vmatprep.subr.mxu0 0.0
    %1328 = vmatpush1.msra.mxu0 0.0
    %1329 = vmatprep.subr.mxu0 0.0
    %1330 = vmatpush1.msra.mxu0 0.0
    %1331 = vmatprep.subr.mxu0 0.0
    %1332 = vmatpush1.msra.mxu0 0.0
    %1333 = vmatprep.subr.mxu0 0.0
    %1334 = vmatpush1.msra.mxu0 0.0
    %1335 = vmatprep.subr.mxu0 0.0
    %1336 = vmatpush1.msra.mxu0 0.0
    %1337 = vmatprep.subr.mxu0 0.0
    %1338 = vmatpush1.msra.mxu0 0.0
    %1339 = vmatprep.subr.mxu0 0.0
    %1340 = vmatpush1.msra.mxu0 0.0
    %1341 = vmatprep.subr.mxu0 0.0
    %1342 = vmatpush1.msra.mxu0 0.0
    %1343 = vmatprep.subr.mxu0 0.0
    %1344 = vmatpush1.msra.mxu0 0.0
    %1345 = vmatprep.subr.mxu0 0.0
    %1346 = vmatpush1.msra.mxu0 0.0
    %1347 = vmatprep.subr.mxu0 0.0
    %1348 = vmatpush1.msra.mxu0 0.0
    %1349 = vmatprep.subr.mxu0 0.0
    %1350 = vmatpush1.msra.mxu0 0.0
    %1351 = vmatprep.subr.mxu0 0.0
    %1352 = vmatpush1.msra.mxu0 0.0
    %1353 = vmatprep.subr.mxu0 0.0
    %1354 = vmatpush1.msra.mxu0 0.0
    %1355 = vmatprep.subr.mxu0 0.0
    %1356 = vmatpush1.msra.mxu0 0.0
    %1357 = vmatprep.subr.mxu0 0.0
    %1358 = vmatpush1.msra.mxu0 0.0
    %1359 = vmatprep.mubr.f32.mxu0 0.0
    %1360 = vmatmul.mubr.f32.gmra.mrb[0].mxu0 %v1287
    %v1361 = vpop.f32.mrb[0].mxu0
    %v1362 = vadd.f32 0.0, %v1361
    %v1363 = vpop.f32.mrb[0].mxu0
    %1364 = vmatprep.mubr.f32.mxu0 0.0
    %1365 = vmatmul.mubr.f32.gmra.mrb[0].mxu0 %v1290
    %v1366 = vpop.f32.mrb[0].mxu0
    %v1367 = vadd.f32 0.0, %v1366
    %v1368 = vpop.f32.mrb[0].mxu0
    %1369 = vmatprep.mubr.f32.mxu0 0.0
    %1370 = vmatmul.mubr.f32.gmra.mrb[0].mxu0 %v1293
    %v1371 = vpop.f32.mrb[0].mxu0
    %v1372 = vadd.f32 0.0, %v1371
    %v1373 = vpop.f32.mrb[0].mxu0
    %1374 = vdwg.mxu0
    %v1375 = vadd.f32 %v1185, %v1362
    %v1376 = vadd.f32 %v1186, %v1367
    %v1377 = vadd.f32 %v1187, %v1372
    %s1378 = scalar_lea.vmem %s3, 144
    %v1379 = vld [vmem:[%s1378] sm:$0xff]
    %v1380 = vld [vmem:[%s1378 + $0x8] sm:$0xff]
    %v1381 = vld [vmem:[%s1378 + $0x10] sm:$0x3]
    %v1383 = vsel %vm244, %v1379, 0
    %v1386 = vsel %vm244, %v1380, 0
    %v1389 = vsel %vm244, %v1381, 0
    %1391 = vmatprep.subr.mxu0 0.0
    %1392 = vmatpush1.msra.mxu0 %v227
    %1393 = vmatprep.subr.mxu0 0.0
    %1394 = vmatpush1.msra.mxu0 %v228
    %1395 = vmatprep.subr.mxu0 0.0
    %1396 = vmatpush1.msra.mxu0 %v229
    %1397 = vmatprep.subr.mxu0 0.0
    %1398 = vmatpush1.msra.mxu0 %v230
    %1399 = vmatprep.subr.mxu0 0.0
    %1400 = vmatpush1.msra.mxu0 %v231
    %1401 = vmatprep.subr.mxu0 0.0
    %1402 = vmatpush1.msra.mxu0 %v232
    %1403 = vmatprep.subr.mxu0 0.0
    %1404 = vmatpush1.msra.mxu0 %v233
    %1405 = vmatprep.subr.mxu0 0.0
    %1406 = vmatpush1.msra.mxu0 %v234
    %1407 = vmatprep.subr.mxu0 0.0
    %1408 = vmatpush1.msra.mxu0 %v235
    %1409 = vmatprep.subr.mxu0 0.0
    %1410 = vmatpush1.msra.mxu0 %v236
    %1411 = vmatprep.subr.mxu0 0.0
    %1412 = vmatpush1.msra.mxu0 %v237
    %1413 = vmatprep.subr.mxu0 0.0
    %1414 = vmatpush1.msra.mxu0 %v238
    %1415 = vmatprep.subr.mxu0 0.0
    %1416 = vmatpush1.msra.mxu0 %v256
    %1417 = vmatprep.subr.mxu0 0.0
    %1418 = vmatpush1.msra.mxu0 0.0
    %1419 = vmatprep.subr.mxu0 0.0
    %1420 = vmatpush1.msra.mxu0 0.0
    %1421 = vmatprep.subr.mxu0 0.0
    %1422 = vmatpush1.msra.mxu0 0.0
    %1423 = vmatprep.subr.mxu0 0.0
    %1424 = vmatpush1.msra.mxu0 0.0
    %1425 = vmatprep.subr.mxu0 0.0
    %1426 = vmatpush1.msra.mxu0 0.0
    %1427 = vmatprep.subr.mxu0 0.0
    %1428 = vmatpush1.msra.mxu0 0.0
    %1429 = vmatprep.subr.mxu0 0.0
    %1430 = vmatpush1.msra.mxu0 0.0
    %1431 = vmatprep.subr.mxu0 0.0
    %1432 = vmatpush1.msra.mxu0 0.0
    %1433 = vmatprep.subr.mxu0 0.0
    %1434 = vmatpush1.msra.mxu0 0.0
    %1435 = vmatprep.subr.mxu0 0.0
    %1436 = vmatpush1.msra.mxu0 0.0
    %1437 = vmatprep.subr.mxu0 0.0
    %1438 = vmatpush1.msra.mxu0 0.0
    %1439 = vmatprep.subr.mxu0 0.0
    %1440 = vmatpush1.msra.mxu0 0.0
    %1441 = vmatprep.subr.mxu0 0.0
    %1442 = vmatpush1.msra.mxu0 0.0
    %1443 = vmatprep.subr.mxu0 0.0
    %1444 = vmatpush1.msra.mxu0 0.0
    %1445 = vmatprep.subr.mxu0 0.0
    %1446 = vmatpush1.msra.mxu0 0.0
    %1447 = vmatprep.subr.mxu0 0.0
    %1448 = vmatpush1.msra.mxu0 0.0
    %1449 = vmatprep.subr.mxu0 0.0
    %1450 = vmatpush1.msra.mxu0 0.0
    %1451 = vmatprep.subr.mxu0 0.0
    %1452 = vmatpush1.msra.mxu0 0.0
    %1453 = vmatprep.subr.mxu0 0.0
    %1454 = vmatpush1.msra.mxu0 0.0
    %1455 = vmatprep.mubr.f32.mxu0 0.0
    %1456 = vmatmul.mubr.f32.gmra.mrb[0].mxu0 %v1383
    %v1457 = vpop.f32.mrb[0].mxu0
    %v1458 = vadd.f32 0.0, %v1457
    %v1459 = vpop.f32.mrb[0].mxu0
    %1460 = vmatprep.mubr.f32.mxu0 0.0
    %1461 = vmatmul.mubr.f32.gmra.mrb[0].mxu0 %v1386
    %v1462 = vpop.f32.mrb[0].mxu0
    %v1463 = vadd.f32 0.0, %v1462
    %v1464 = vpop.f32.mrb[0].mxu0
    %1465 = vmatprep.mubr.f32.mxu0 0.0
    %1466 = vmatmul.mubr.f32.gmra.mrb[0].mxu0 %v1389
    %v1467 = vpop.f32.mrb[0].mxu0
    %v1468 = vadd.f32 0.0, %v1467
    %v1469 = vpop.f32.mrb[0].mxu0
    %1470 = vdwg.mxu0
    %s1471 = scalar_lea.vmem %s4, 192
    %v1472 = vld [vmem:[%s1471] sm:$0xff]
    %v1473 = vld [vmem:[%s1471 + $0x8] sm:$0xff]
    %v1474 = vld [vmem:[%s1471 + $0x10] sm:$0xff]
    %v1475 = vld [vmem:[%s1471 + $0x18] sm:$0xff]
    %v1477 = vsel %vm57, %v1458, 0
    %v1480 = vsel %vm57, %v1463, 0
    %v1483 = vsel %vm57, %v1468, 0
    %1485 = vmatprep.subr.mxu0 0.0
    %1486 = vmatpush1.msra.mxu0 %v1472
    %1487 = vmatprep.subr.mxu0 0.0
    %1488 = vmatpush1.msra.mxu0 %v1473
    %1489 = vmatprep.subr.mxu0 0.0
    %1490 = vmatpush1.msra.mxu0 %v1474
    %1491 = vmatprep.subr.mxu0 0.0
    %1492 = vmatpush1.msra.mxu0 %v1475
    %1493 = vmatprep.subr.mxu0 0.0
    %1494 = vmatpush1.msra.mxu0 0.0
    %1495 = vmatprep.subr.mxu0 0.0
    %1496 = vmatpush1.msra.mxu0 0.0
    %1497 = vmatprep.subr.mxu0 0.0
    %1498 = vmatpush1.msra.mxu0 0.0
    %1499 = vmatprep.subr.mxu0 0.0
    %1500 = vmatpush1.msra.mxu0 0.0
    %1501 = vmatprep.subr.mxu0 0.0
    %1502 = vmatpush1.msra.mxu0 0.0
    %1503 = vmatprep.subr.mxu0 0.0
    %1504 = vmatpush1.msra.mxu0 0.0
    %1505 = vmatprep.subr.mxu0 0.0
    %1506 = vmatpush1.msra.mxu0 0.0
    %1507 = vmatprep.subr.mxu0 0.0
    %1508 = vmatpush1.msra.mxu0 0.0
    %1509 = vmatprep.subr.mxu0 0.0
    %1510 = vmatpush1.msra.mxu0 0.0
    %1511 = vmatprep.subr.mxu0 0.0
    %1512 = vmatpush1.msra.mxu0 0.0
    %1513 = vmatprep.subr.mxu0 0.0
    %1514 = vmatpush1.msra.mxu0 0.0
    %1515 = vmatprep.subr.mxu0 0.0
    %1516 = vmatpush1.msra.mxu0 0.0
    %1517 = vmatprep.subr.mxu0 0.0
    %1518 = vmatpush1.msra.mxu0 0.0
    %1519 = vmatprep.subr.mxu0 0.0
    %1520 = vmatpush1.msra.mxu0 0.0
    %1521 = vmatprep.subr.mxu0 0.0
    %1522 = vmatpush1.msra.mxu0 0.0
    %1523 = vmatprep.subr.mxu0 0.0
    %1524 = vmatpush1.msra.mxu0 0.0
    %1525 = vmatprep.subr.mxu0 0.0
    %1526 = vmatpush1.msra.mxu0 0.0
    %1527 = vmatprep.subr.mxu0 0.0
    %1528 = vmatpush1.msra.mxu0 0.0
    %1529 = vmatprep.subr.mxu0 0.0
    %1530 = vmatpush1.msra.mxu0 0.0
    %1531 = vmatprep.subr.mxu0 0.0
    %1532 = vmatpush1.msra.mxu0 0.0
    %1533 = vmatprep.subr.mxu0 0.0
    %1534 = vmatpush1.msra.mxu0 0.0
    %1535 = vmatprep.subr.mxu0 0.0
    %1536 = vmatpush1.msra.mxu0 0.0
    %1537 = vmatprep.subr.mxu0 0.0
    %1538 = vmatpush1.msra.mxu0 0.0
    %1539 = vmatprep.subr.mxu0 0.0
    %1540 = vmatpush1.msra.mxu0 0.0
    %1541 = vmatprep.subr.mxu0 0.0
    %1542 = vmatpush1.msra.mxu0 0.0
    %1543 = vmatprep.subr.mxu0 0.0
    %1544 = vmatpush1.msra.mxu0 0.0
    %1545 = vmatprep.subr.mxu0 0.0
    %1546 = vmatpush1.msra.mxu0 0.0
    %1547 = vmatprep.subr.mxu0 0.0
    %1548 = vmatpush1.msra.mxu0 0.0
    %1549 = vmatprep.mubr.f32.mxu0 0.0
    %1550 = vmatmul.mubr.f32.gmra.mrb[0].mxu0 %v1477
    %v1551 = vpop.f32.mrb[0].mxu0
    %v1552 = vadd.f32 0.0, %v1551
    %v1553 = vpop.f32.mrb[0].mxu0
    %1554 = vmatprep.mubr.f32.mxu0 0.0
    %1555 = vmatmul.mubr.f32.gmra.mrb[0].mxu0 %v1480
    %v1556 = vpop.f32.mrb[0].mxu0
    %v1557 = vadd.f32 0.0, %v1556
    %v1558 = vpop.f32.mrb[0].mxu0
    %1559 = vmatprep.mubr.f32.mxu0 0.0
    %1560 = vmatmul.mubr.f32.gmra.mrb[0].mxu0 %v1483
    %v1561 = vpop.f32.mrb[0].mxu0
    %v1562 = vadd.f32 0.0, %v1561
    %v1563 = vpop.f32.mrb[0].mxu0
    %1564 = vdwg.mxu0
    %v1565 = vadd.f32 %v1375, %v1552
    %v1566 = vadd.f32 %v1376, %v1557
    %v1567 = vadd.f32 %v1377, %v1562
    %s1568 = scalar_lea.vmem %s3, 168
    %v1569 = vld [vmem:[%s1568] sm:$0xff]
    %v1570 = vld [vmem:[%s1568 + $0x8] sm:$0xff]
    %v1571 = vld [vmem:[%s1568 + $0x10] sm:$0x3]
    %v1573 = vsel %vm244, %v1569, 0
    %v1576 = vsel %vm244, %v1570, 0
    %v1579 = vsel %vm244, %v1571, 0
    %1581 = vmatprep.subr.mxu0 0.0
    %1582 = vmatpush1.msra.mxu0 %v227
    %1583 = vmatprep.subr.mxu0 0.0
    %1584 = vmatpush1.msra.mxu0 %v228
    %1585 = vmatprep.subr.mxu0 0.0
    %1586 = vmatpush1.msra.mxu0 %v229
    %1587 = vmatprep.subr.mxu0 0.0
    %1588 = vmatpush1.msra.mxu0 %v230
    %1589 = vmatprep.subr.mxu0 0.0
    %1590 = vmatpush1.msra.mxu0 %v231
    %1591 = vmatprep.subr.mxu0 0.0
    %1592 = vmatpush1.msra.mxu0 %v232
    %1593 = vmatprep.subr.mxu0 0.0
    %1594 = vmatpush1.msra.mxu0 %v233
    %1595 = vmatprep.subr.mxu0 0.0
    %1596 = vmatpush1.msra.mxu0 %v234
    %1597 = vmatprep.subr.mxu0 0.0
    %1598 = vmatpush1.msra.mxu0 %v235
    %1599 = vmatprep.subr.mxu0 0.0
    %1600 = vmatpush1.msra.mxu0 %v236
    %1601 = vmatprep.subr.mxu0 0.0
    %1602 = vmatpush1.msra.mxu0 %v237
    %1603 = vmatprep.subr.mxu0 0.0
    %1604 = vmatpush1.msra.mxu0 %v238
    %1605 = vmatprep.subr.mxu0 0.0
    %1606 = vmatpush1.msra.mxu0 %v256
    %1607 = vmatprep.subr.mxu0 0.0
    %1608 = vmatpush1.msra.mxu0 0.0
    %1609 = vmatprep.subr.mxu0 0.0
    %1610 = vmatpush1.msra.mxu0 0.0
    %1611 = vmatprep.subr.mxu0 0.0
    %1612 = vmatpush1.msra.mxu0 0.0
    %1613 = vmatprep.subr.mxu0 0.0
    %1614 = vmatpush1.msra.mxu0 0.0
    %1615 = vmatprep.subr.mxu0 0.0
    %1616 = vmatpush1.msra.mxu0 0.0
    %1617 = vmatprep.subr.mxu0 0.0
    %1618 = vmatpush1.msra.mxu0 0.0
    %1619 = vmatprep.subr.mxu0 0.0
    %1620 = vmatpush1.msra.mxu0 0.0
    %1621 = vmatprep.subr.mxu0 0.0
    %1622 = vmatpush1.msra.mxu0 0.0
    %1623 = vmatprep.subr.mxu0 0.0
    %1624 = vmatpush1.msra.mxu0 0.0
    %1625 = vmatprep.subr.mxu0 0.0
    %1626 = vmatpush1.msra.mxu0 0.0
    %1627 = vmatprep.subr.mxu0 0.0
    %1628 = vmatpush1.msra.mxu0 0.0
    %1629 = vmatprep.subr.mxu0 0.0
    %1630 = vmatpush1.msra.mxu0 0.0
    %1631 = vmatprep.subr.mxu0 0.0
    %1632 = vmatpush1.msra.mxu0 0.0
    %1633 = vmatprep.subr.mxu0 0.0
    %1634 = vmatpush1.msra.mxu0 0.0
    %1635 = vmatprep.subr.mxu0 0.0
    %1636 = vmatpush1.msra.mxu0 0.0
    %1637 = vmatprep.subr.mxu0 0.0
    %1638 = vmatpush1.msra.mxu0 0.0
    %1639 = vmatprep.subr.mxu0 0.0
    %1640 = vmatpush1.msra.mxu0 0.0
    %1641 = vmatprep.subr.mxu0 0.0
    %1642 = vmatpush1.msra.mxu0 0.0
    %1643 = vmatprep.subr.mxu0 0.0
    %1644 = vmatpush1.msra.mxu0 0.0
    %1645 = vmatprep.mubr.f32.mxu0 0.0
    %1646 = vmatmul.mubr.f32.gmra.mrb[0].mxu0 %v1573
    %v1647 = vpop.f32.mrb[0].mxu0
    %v1648 = vadd.f32 0.0, %v1647
    %v1649 = vpop.f32.mrb[0].mxu0
    %1650 = vmatprep.mubr.f32.mxu0 0.0
    %1651 = vmatmul.mubr.f32.gmra.mrb[0].mxu0 %v1576
    %v1652 = vpop.f32.mrb[0].mxu0
    %v1653 = vadd.f32 0.0, %v1652
    %v1654 = vpop.f32.mrb[0].mxu0
    %1655 = vmatprep.mubr.f32.mxu0 0.0
    %1656 = vmatmul.mubr.f32.gmra.mrb[0].mxu0 %v1579
    %v1657 = vpop.f32.mrb[0].mxu0
    %v1658 = vadd.f32 0.0, %v1657
    %v1659 = vpop.f32.mrb[0].mxu0
    %1660 = vdwg.mxu0
    %s1661 = scalar_lea.vmem %s4, 224
    %v1662 = vld [vmem:[%s1661] sm:$0xff]
    %v1663 = vld [vmem:[%s1661 + $0x8] sm:$0xff]
    %v1664 = vld [vmem:[%s1661 + $0x10] sm:$0xff]
    %v1665 = vld [vmem:[%s1661 + $0x18] sm:$0xff]
    %v1667 = vsel %vm57, %v1648, 0
    %v1670 = vsel %vm57, %v1653, 0
    %v1673 = vsel %vm57, %v1658, 0
    %1675 = vmatprep.subr.mxu0 0.0
    %1676 = vmatpush1.msra.mxu0 %v1662
    %1677 = vmatprep.subr.mxu0 0.0
    %1678 = vmatpush1.msra.mxu0 %v1663
    %1679 = vmatprep.subr.mxu0 0.0
    %1680 = vmatpush1.msra.mxu0 %v1664
    %1681 = vmatprep.subr.mxu0 0.0
    %1682 = vmatpush1.msra.mxu0 %v1665
    %1683 = vmatprep.subr.mxu0 0.0
    %1684 = vmatpush1.msra.mxu0 0.0
    %1685 = vmatprep.subr.mxu0 0.0
    %1686 = vmatpush1.msra.mxu0 0.0
    %1687 = vmatprep.subr.mxu0 0.0
    %1688 = vmatpush1.msra.mxu0 0.0
    %1689 = vmatprep.subr.mxu0 0.0
    %1690 = vmatpush1.msra.mxu0 0.0
    %1691 = vmatprep.subr.mxu0 0.0
    %1692 = vmatpush1.msra.mxu0 0.0
    %1693 = vmatprep.subr.mxu0 0.0
    %1694 = vmatpush1.msra.mxu0 0.0
    %1695 = vmatprep.subr.mxu0 0.0
    %1696 = vmatpush1.msra.mxu0 0.0
    %1697 = vmatprep.subr.mxu0 0.0
    %1698 = vmatpush1.msra.mxu0 0.0
    %1699 = vmatprep.subr.mxu0 0.0
    %1700 = vmatpush1.msra.mxu0 0.0
    %1701 = vmatprep.subr.mxu0 0.0
    %1702 = vmatpush1.msra.mxu0 0.0
    %1703 = vmatprep.subr.mxu0 0.0
    %1704 = vmatpush1.msra.mxu0 0.0
    %1705 = vmatprep.subr.mxu0 0.0
    %1706 = vmatpush1.msra.mxu0 0.0
    %1707 = vmatprep.subr.mxu0 0.0
    %1708 = vmatpush1.msra.mxu0 0.0
    %1709 = vmatprep.subr.mxu0 0.0
    %1710 = vmatpush1.msra.mxu0 0.0
    %1711 = vmatprep.subr.mxu0 0.0
    %1712 = vmatpush1.msra.mxu0 0.0
    %1713 = vmatprep.subr.mxu0 0.0
    %1714 = vmatpush1.msra.mxu0 0.0
    %1715 = vmatprep.subr.mxu0 0.0
    %1716 = vmatpush1.msra.mxu0 0.0
    %1717 = vmatprep.subr.mxu0 0.0
    %1718 = vmatpush1.msra.mxu0 0.0
    %1719 = vmatprep.subr.mxu0 0.0
    %1720 = vmatpush1.msra.mxu0 0.0
    %1721 = vmatprep.subr.mxu0 0.0
    %1722 = vmatpush1.msra.mxu0 0.0
    %1723 = vmatprep.subr.mxu0 0.0
    %1724 = vmatpush1.msra.mxu0 0.0
    %1725 = vmatprep.subr.mxu0 0.0
    %1726 = vmatpush1.msra.mxu0 0.0
    %1727 = vmatprep.subr.mxu0 0.0
    %1728 = vmatpush1.msra.mxu0 0.0
    %1729 = vmatprep.subr.mxu0 0.0
    %1730 = vmatpush1.msra.mxu0 0.0
    %1731 = vmatprep.subr.mxu0 0.0
    %1732 = vmatpush1.msra.mxu0 0.0
    %1733 = vmatprep.subr.mxu0 0.0
    %1734 = vmatpush1.msra.mxu0 0.0
    %1735 = vmatprep.subr.mxu0 0.0
    %1736 = vmatpush1.msra.mxu0 0.0
    %1737 = vmatprep.subr.mxu0 0.0
    %1738 = vmatpush1.msra.mxu0 0.0
    %1739 = vmatprep.mubr.f32.mxu0 0.0
    %1740 = vmatmul.mubr.f32.gmra.mrb[0].mxu0 %v1667
    %v1741 = vpop.f32.mrb[0].mxu0
    %v1742 = vadd.f32 0.0, %v1741
    %v1743 = vpop.f32.mrb[0].mxu0
    %1744 = vmatprep.mubr.f32.mxu0 0.0
    %1745 = vmatmul.mubr.f32.gmra.mrb[0].mxu0 %v1670
    %v1746 = vpop.f32.mrb[0].mxu0
    %v1747 = vadd.f32 0.0, %v1746
    %v1748 = vpop.f32.mrb[0].mxu0
    %1749 = vmatprep.mubr.f32.mxu0 0.0
    %1750 = vmatmul.mubr.f32.gmra.mrb[0].mxu0 %v1673
    %v1751 = vpop.f32.mrb[0].mxu0
    %v1752 = vadd.f32 0.0, %v1751
    %v1753 = vpop.f32.mrb[0].mxu0
    %1754 = vdwg.mxu0
    %v1755 = vadd.f32 %v1565, %v1742
    %v1756 = vadd.f32 %v1566, %v1747
    %v1757 = vadd.f32 %v1567, %v1752
    %s1758 = scalar_lea.vmem %s3, 192
    %v1759 = vld [vmem:[%s1758] sm:$0xff]
    %v1760 = vld [vmem:[%s1758 + $0x8] sm:$0xff]
    %v1761 = vld [vmem:[%s1758 + $0x10] sm:$0x3]
    %v1763 = vsel %vm244, %v1759, 0
    %v1766 = vsel %vm244, %v1760, 0
    %v1769 = vsel %vm244, %v1761, 0
    %1771 = vmatprep.subr.mxu0 0.0
    %1772 = vmatpush1.msra.mxu0 %v227
    %1773 = vmatprep.subr.mxu0 0.0
    %1774 = vmatpush1.msra.mxu0 %v228
    %1775 = vmatprep.subr.mxu0 0.0
    %1776 = vmatpush1.msra.mxu0 %v229
    %1777 = vmatprep.subr.mxu0 0.0
    %1778 = vmatpush1.msra.mxu0 %v230
    %1779 = vmatprep.subr.mxu0 0.0
    %1780 = vmatpush1.msra.mxu0 %v231
    %1781 = vmatprep.subr.mxu0 0.0
    %1782 = vmatpush1.msra.mxu0 %v232
    %1783 = vmatprep.subr.mxu0 0.0
    %1784 = vmatpush1.msra.mxu0 %v233
    %1785 = vmatprep.subr.mxu0 0.0
    %1786 = vmatpush1.msra.mxu0 %v234
    %1787 = vmatprep.subr.mxu0 0.0
    %1788 = vmatpush1.msra.mxu0 %v235
    %1789 = vmatprep.subr.mxu0 0.0
    %1790 = vmatpush1.msra.mxu0 %v236
    %1791 = vmatprep.subr.mxu0 0.0
    %1792 = vmatpush1.msra.mxu0 %v237
    %1793 = vmatprep.subr.mxu0 0.0
    %1794 = vmatpush1.msra.mxu0 %v238
    %1795 = vmatprep.subr.mxu0 0.0
    %1796 = vmatpush1.msra.mxu0 %v256
    %1797 = vmatprep.subr.mxu0 0.0
    %1798 = vmatpush1.msra.mxu0 0.0
    %1799 = vmatprep.subr.mxu0 0.0
    %1800 = vmatpush1.msra.mxu0 0.0
    %1801 = vmatprep.subr.mxu0 0.0
    %1802 = vmatpush1.msra.mxu0 0.0
    %1803 = vmatprep.subr.mxu0 0.0
    %1804 = vmatpush1.msra.mxu0 0.0
    %1805 = vmatprep.subr.mxu0 0.0
    %1806 = vmatpush1.msra.mxu0 0.0
    %1807 = vmatprep.subr.mxu0 0.0
    %1808 = vmatpush1.msra.mxu0 0.0
    %1809 = vmatprep.subr.mxu0 0.0
    %1810 = vmatpush1.msra.mxu0 0.0
    %1811 = vmatprep.subr.mxu0 0.0
    %1812 = vmatpush1.msra.mxu0 0.0
    %1813 = vmatprep.subr.mxu0 0.0
    %1814 = vmatpush1.msra.mxu0 0.0
    %1815 = vmatprep.subr.mxu0 0.0
    %1816 = vmatpush1.msra.mxu0 0.0
    %1817 = vmatprep.subr.mxu0 0.0
    %1818 = vmatpush1.msra.mxu0 0.0
    %1819 = vmatprep.subr.mxu0 0.0
    %1820 = vmatpush1.msra.mxu0 0.0
    %1821 = vmatprep.subr.mxu0 0.0
    %1822 = vmatpush1.msra.mxu0 0.0
    %1823 = vmatprep.subr.mxu0 0.0
    %1824 = vmatpush1.msra.mxu0 0.0
    %1825 = vmatprep.subr.mxu0 0.0
    %1826 = vmatpush1.msra.mxu0 0.0
    %1827 = vmatprep.subr.mxu0 0.0
    %1828 = vmatpush1.msra.mxu0 0.0
    %1829 = vmatprep.subr.mxu0 0.0
    %1830 = vmatpush1.msra.mxu0 0.0
    %1831 = vmatprep.subr.mxu0 0.0
    %1832 = vmatpush1.msra.mxu0 0.0
    %1833 = vmatprep.subr.mxu0 0.0
    %1834 = vmatpush1.msra.mxu0 0.0
    %1835 = vmatprep.mubr.f32.mxu0 0.0
    %1836 = vmatmul.mubr.f32.gmra.mrb[0].mxu0 %v1763
    %v1837 = vpop.f32.mrb[0].mxu0
    %v1838 = vadd.f32 0.0, %v1837
    %v1839 = vpop.f32.mrb[0].mxu0
    %1840 = vmatprep.mubr.f32.mxu0 0.0
    %1841 = vmatmul.mubr.f32.gmra.mrb[0].mxu0 %v1766
    %v1842 = vpop.f32.mrb[0].mxu0
    %v1843 = vadd.f32 0.0, %v1842
    %v1844 = vpop.f32.mrb[0].mxu0
    %1845 = vmatprep.mubr.f32.mxu0 0.0
    %1846 = vmatmul.mubr.f32.gmra.mrb[0].mxu0 %v1769
    %v1847 = vpop.f32.mrb[0].mxu0
    %v1848 = vadd.f32 0.0, %v1847
    %v1849 = vpop.f32.mrb[0].mxu0
    %1850 = vdwg.mxu0
    %s1851 = scalar_lea.vmem %s4, 256
    %v1852 = vld [vmem:[%s1851] sm:$0xff]
    %v1853 = vld [vmem:[%s1851 + $0x8] sm:$0xff]
    %v1854 = vld [vmem:[%s1851 + $0x10] sm:$0xff]
    %v1855 = vld [vmem:[%s1851 + $0x18] sm:$0xff]
    %v1857 = vsel %vm57, %v1838, 0
    %v1860 = vsel %vm57, %v1843, 0
    %v1863 = vsel %vm57, %v1848, 0
    %1865 = vmatprep.subr.mxu0 0.0
    %1866 = vmatpush1.msra.mxu0 %v1852
    %1867 = vmatprep.subr.mxu0 0.0
    %1868 = vmatpush1.msra.mxu0 %v1853
    %1869 = vmatprep.subr.mxu0 0.0
    %1870 = vmatpush1.msra.mxu0 %v1854
    %1871 = vmatprep.subr.mxu0 0.0
    %1872 = vmatpush1.msra.mxu0 %v1855
    %1873 = vmatprep.subr.mxu0 0.0
    %1874 = vmatpush1.msra.mxu0 0.0
    %1875 = vmatprep.subr.mxu0 0.0
    %1876 = vmatpush1.msra.mxu0 0.0
    %1877 = vmatprep.subr.mxu0 0.0
    %1878 = vmatpush1.msra.mxu0 0.0
    %1879 = vmatprep.subr.mxu0 0.0
    %1880 = vmatpush1.msra.mxu0 0.0
    %1881 = vmatprep.subr.mxu0 0.0
    %1882 = vmatpush1.msra.mxu0 0.0
    %1883 = vmatprep.subr.mxu0 0.0
    %1884 = vmatpush1.msra.mxu0 0.0
    %1885 = vmatprep.subr.mxu0 0.0
    %1886 = vmatpush1.msra.mxu0 0.0
    %1887 = vmatprep.subr.mxu0 0.0
    %1888 = vmatpush1.msra.mxu0 0.0
    %1889 = vmatprep.subr.mxu0 0.0
    %1890 = vmatpush1.msra.mxu0 0.0
    %1891 = vmatprep.subr.mxu0 0.0
    %1892 = vmatpush1.msra.mxu0 0.0
    %1893 = vmatprep.subr.mxu0 0.0
    %1894 = vmatpush1.msra.mxu0 0.0
    %1895 = vmatprep.subr.mxu0 0.0
    %1896 = vmatpush1.msra.mxu0 0.0
    %1897 = vmatprep.subr.mxu0 0.0
    %1898 = vmatpush1.msra.mxu0 0.0
    %1899 = vmatprep.subr.mxu0 0.0
    %1900 = vmatpush1.msra.mxu0 0.0
    %1901 = vmatprep.subr.mxu0 0.0
    %1902 = vmatpush1.msra.mxu0 0.0
    %1903 = vmatprep.subr.mxu0 0.0
    %1904 = vmatpush1.msra.mxu0 0.0
    %1905 = vmatprep.subr.mxu0 0.0
    %1906 = vmatpush1.msra.mxu0 0.0
    %1907 = vmatprep.subr.mxu0 0.0
    %1908 = vmatpush1.msra.mxu0 0.0
    %1909 = vmatprep.subr.mxu0 0.0
    %1910 = vmatpush1.msra.mxu0 0.0
    %1911 = vmatprep.subr.mxu0 0.0
    %1912 = vmatpush1.msra.mxu0 0.0
    %1913 = vmatprep.subr.mxu0 0.0
    %1914 = vmatpush1.msra.mxu0 0.0
    %1915 = vmatprep.subr.mxu0 0.0
    %1916 = vmatpush1.msra.mxu0 0.0
    %1917 = vmatprep.subr.mxu0 0.0
    %1918 = vmatpush1.msra.mxu0 0.0
    %1919 = vmatprep.subr.mxu0 0.0
    %1920 = vmatpush1.msra.mxu0 0.0
    %1921 = vmatprep.subr.mxu0 0.0
    %1922 = vmatpush1.msra.mxu0 0.0
    %1923 = vmatprep.subr.mxu0 0.0
    %1924 = vmatpush1.msra.mxu0 0.0
    %1925 = vmatprep.subr.mxu0 0.0
    %1926 = vmatpush1.msra.mxu0 0.0
    %1927 = vmatprep.subr.mxu0 0.0
    %1928 = vmatpush1.msra.mxu0 0.0
    %1929 = vmatprep.mubr.f32.mxu0 0.0
    %1930 = vmatmul.mubr.f32.gmra.mrb[0].mxu0 %v1857
    %v1931 = vpop.f32.mrb[0].mxu0
    %v1932 = vadd.f32 0.0, %v1931
    %v1933 = vpop.f32.mrb[0].mxu0
    %1934 = vmatprep.mubr.f32.mxu0 0.0
    %1935 = vmatmul.mubr.f32.gmra.mrb[0].mxu0 %v1860
    %v1936 = vpop.f32.mrb[0].mxu0
    %v1937 = vadd.f32 0.0, %v1936
    %v1938 = vpop.f32.mrb[0].mxu0
    %1939 = vmatprep.mubr.f32.mxu0 0.0
    %1940 = vmatmul.mubr.f32.gmra.mrb[0].mxu0 %v1863
    %v1941 = vpop.f32.mrb[0].mxu0
    %v1942 = vadd.f32 0.0, %v1941
    %v1943 = vpop.f32.mrb[0].mxu0
    %1944 = vdwg.mxu0
    %v1945 = vadd.f32 %v1755, %v1932
    %v1946 = vadd.f32 %v1756, %v1937
    %v1947 = vadd.f32 %v1757, %v1942
    %v1949 = vlaneseq
    %v1950 = vshrl.u32 %v1949, 7
    %v1951 = vsub.s32 0, %v1950
    %v1952 = vrot.slane %v240, %v1951
    %v1954 = vadd.f32 %v1945, %v1952
    %v1955 = vadd.f32 %v1946, %v1952
    %v1956 = vadd.f32 %v1947, %v1952
    %v1957 = vmax.f32 %v1954, 0.0
    %v1958 = vmax.f32 %v1955, 0.0
    %v1959 = vmax.f32 %v1956, 0.0
    %v1960 = vld [vmem:[%s8] sm:$0x1]
    %v1961 = vld [vmem:[%s6] sm:$0x3]
    %vm1962 = vcmask 146432
    %v1964 = vsel %vm1962, %v1961, 0
    %v1967 = vsel %vm254, %v1959, 0
    %1969 = vmatprep.subr.mxu0 0.0
    %1970 = vmatpush1.msra.mxu0 %v1957
    %1971 = vmatprep.subr.mxu0 0.0
    %1972 = vmatpush1.msra.mxu0 %v1958
    %1973 = vmatprep.subr.mxu0 0.0
    %1974 = vmatpush1.msra.mxu0 %v1967
    %1975 = vmatprep.subr.mxu0 0.0
    %1976 = vmatpush1.msra.mxu0 0.0
    %1977 = vmatprep.subr.mxu0 0.0
    %1978 = vmatpush1.msra.mxu0 0.0
    %1979 = vmatprep.subr.mxu0 0.0
    %1980 = vmatpush1.msra.mxu0 0.0
    %1981 = vmatprep.subr.mxu0 0.0
    %1982 = vmatpush1.msra.mxu0 0.0
    %1983 = vmatprep.subr.mxu0 0.0
    %1984 = vmatpush1.msra.mxu0 0.0
    %1985 = vmatprep.subr.mxu0 0.0
    %1986 = vmatpush1.msra.mxu0 0.0
    %1987 = vmatprep.subr.mxu0 0.0
    %1988 = vmatpush1.msra.mxu0 0.0
    %1989 = vmatprep.subr.mxu0 0.0
    %1990 = vmatpush1.msra.mxu0 0.0
    %1991 = vmatprep.subr.mxu0 0.0
    %1992 = vmatpush1.msra.mxu0 0.0
    %1993 = vmatprep.subr.mxu0 0.0
    %1994 = vmatpush1.msra.mxu0 0.0
    %1995 = vmatprep.subr.mxu0 0.0
    %1996 = vmatpush1.msra.mxu0 0.0
    %1997 = vmatprep.subr.mxu0 0.0
    %1998 = vmatpush1.msra.mxu0 0.0
    %1999 = vmatprep.subr.mxu0 0.0
    %2000 = vmatpush1.msra.mxu0 0.0
    %2001 = vmatprep.subr.mxu0 0.0
    %2002 = vmatpush1.msra.mxu0 0.0
    %2003 = vmatprep.subr.mxu0 0.0
    %2004 = vmatpush1.msra.mxu0 0.0
    %2005 = vmatprep.subr.mxu0 0.0
    %2006 = vmatpush1.msra.mxu0 0.0
    %2007 = vmatprep.subr.mxu0 0.0
    %2008 = vmatpush1.msra.mxu0 0.0
    %2009 = vmatprep.subr.mxu0 0.0
    %2010 = vmatpush1.msra.mxu0 0.0
    %2011 = vmatprep.subr.mxu0 0.0
    %2012 = vmatpush1.msra.mxu0 0.0
    %2013 = vmatprep.subr.mxu0 0.0
    %2014 = vmatpush1.msra.mxu0 0.0
    %2015 = vmatprep.subr.mxu0 0.0
    %2016 = vmatpush1.msra.mxu0 0.0
    %2017 = vmatprep.subr.mxu0 0.0
    %2018 = vmatpush1.msra.mxu0 0.0
    %2019 = vmatprep.subr.mxu0 0.0
    %2020 = vmatpush1.msra.mxu0 0.0
    %2021 = vmatprep.subr.mxu0 0.0
    %2022 = vmatpush1.msra.mxu0 0.0
    %2023 = vmatprep.subr.mxu0 0.0
    %2024 = vmatpush1.msra.mxu0 0.0
    %2025 = vmatprep.subr.mxu0 0.0
    %2026 = vmatpush1.msra.mxu0 0.0
    %2027 = vmatprep.subr.mxu0 0.0
    %2028 = vmatpush1.msra.mxu0 0.0
    %2029 = vmatprep.subr.mxu0 0.0
    %2030 = vmatpush1.msra.mxu0 0.0
    %2031 = vmatprep.subr.mxu0 0.0
    %2032 = vmatpush1.msra.mxu0 0.0
    %2033 = vmatprep.mubr.f32.mxu0 0.0
    %2034 = vmatmul.mubr.f32.gmra.mrb[0].mxu0 %v1964
    %v2035 = vpop.f32.mrb[0].mxu0
    %v2036 = vadd.f32 0.0, %v2035
    %v2037 = vpop.f32.mrb[0].mxu0
    %2038 = vdwg.mxu0
    %v2039 = vld [vmem:[%s7] sm:$0xff]
    %v2040 = vld [vmem:[%s7 + $0x8] sm:$0xff]
    %v2041 = vld [vmem:[%s7 + $0x10] sm:$0xff]
    %v2042 = vld [vmem:[%s7 + $0x18] sm:$0xff]
    %v2043 = vld [vmem:[%s7 + $0x20] sm:$0xff]
    %v2044 = vld [vmem:[%s7 + $0x28] sm:$0xff]
    %v2045 = vld [vmem:[%s7 + $0x30] sm:$0xff]
    %v2046 = vld [vmem:[%s7 + $0x38] sm:$0xff]
    %s2047 = scalar_lea.vmem %s6, 2
    %v2048 = vld [vmem:[%s2047] sm:$0x3]
    %v2050 = vsel %vm1962, %v2048, 0
    %2052 = vmatprep.subr.mxu0 0.0
    %2053 = vmatpush1.msra.mxu0 %v1957
    %2054 = vmatprep.subr.mxu0 0.0
    %2055 = vmatpush1.msra.mxu0 %v1958
    %2056 = vmatprep.subr.mxu0 0.0
    %2057 = vmatpush1.msra.mxu0 %v1967
    %2058 = vmatprep.subr.mxu0 0.0
    %2059 = vmatpush1.msra.mxu0 0.0
    %2060 = vmatprep.subr.mxu0 0.0
    %2061 = vmatpush1.msra.mxu0 0.0
    %2062 = vmatprep.subr.mxu0 0.0
    %2063 = vmatpush1.msra.mxu0 0.0
    %2064 = vmatprep.subr.mxu0 0.0
    %2065 = vmatpush1.msra.mxu0 0.0
    %2066 = vmatprep.subr.mxu0 0.0
    %2067 = vmatpush1.msra.mxu0 0.0
    %2068 = vmatprep.subr.mxu0 0.0
    %2069 = vmatpush1.msra.mxu0 0.0
    %2070 = vmatprep.subr.mxu0 0.0
    %2071 = vmatpush1.msra.mxu0 0.0
    %2072 = vmatprep.subr.mxu0 0.0
    %2073 = vmatpush1.msra.mxu0 0.0
    %2074 = vmatprep.subr.mxu0 0.0
    %2075 = vmatpush1.msra.mxu0 0.0
    %2076 = vmatprep.subr.mxu0 0.0
    %2077 = vmatpush1.msra.mxu0 0.0
    %2078 = vmatprep.subr.mxu0 0.0
    %2079 = vmatpush1.msra.mxu0 0.0
    %2080 = vmatprep.subr.mxu0 0.0
    %2081 = vmatpush1.msra.mxu0 0.0
    %2082 = vmatprep.subr.mxu0 0.0
    %2083 = vmatpush1.msra.mxu0 0.0
    %2084 = vmatprep.subr.mxu0 0.0
    %2085 = vmatpush1.msra.mxu0 0.0
    %2086 = vmatprep.subr.mxu0 0.0
    %2087 = vmatpush1.msra.mxu0 0.0
    %2088 = vmatprep.subr.mxu0 0.0
    %2089 = vmatpush1.msra.mxu0 0.0
    %2090 = vmatprep.subr.mxu0 0.0
    %2091 = vmatpush1.msra.mxu0 0.0
    %2092 = vmatprep.subr.mxu0 0.0
    %2093 = vmatpush1.msra.mxu0 0.0
    %2094 = vmatprep.subr.mxu0 0.0
    %2095 = vmatpush1.msra.mxu0 0.0
    %2096 = vmatprep.subr.mxu0 0.0
    %2097 = vmatpush1.msra.mxu0 0.0
    %2098 = vmatprep.subr.mxu0 0.0
    %2099 = vmatpush1.msra.mxu0 0.0
    %2100 = vmatprep.subr.mxu0 0.0
    %2101 = vmatpush1.msra.mxu0 0.0
    %2102 = vmatprep.subr.mxu0 0.0
    %2103 = vmatpush1.msra.mxu0 0.0
    %2104 = vmatprep.subr.mxu0 0.0
    %2105 = vmatpush1.msra.mxu0 0.0
    %2106 = vmatprep.subr.mxu0 0.0
    %2107 = vmatpush1.msra.mxu0 0.0
    %2108 = vmatprep.subr.mxu0 0.0
    %2109 = vmatpush1.msra.mxu0 0.0
    %2110 = vmatprep.subr.mxu0 0.0
    %2111 = vmatpush1.msra.mxu0 0.0
    %2112 = vmatprep.subr.mxu0 0.0
    %2113 = vmatpush1.msra.mxu0 0.0
    %2114 = vmatprep.subr.mxu0 0.0
    %2115 = vmatpush1.msra.mxu0 0.0
    %2116 = vmatprep.mubr.f32.mxu0 0.0
    %2117 = vmatmul.mubr.f32.gmra.mrb[0].mxu0 %v2050
    %v2118 = vpop.f32.mrb[0].mxu0
    %v2119 = vadd.f32 0.0, %v2118
    %v2120 = vpop.f32.mrb[0].mxu0
    %2121 = vdwg.mxu0
    %s2122 = scalar_lea.vmem %s7, 64
    %v2123 = vld [vmem:[%s2122] sm:$0xff]
    %v2124 = vld [vmem:[%s2122 + $0x8] sm:$0xff]
    %v2125 = vld [vmem:[%s2122 + $0x10] sm:$0xff]
    %v2126 = vld [vmem:[%s2122 + $0x18] sm:$0xff]
    %v2127 = vld [vmem:[%s2122 + $0x20] sm:$0xff]
    %v2128 = vld [vmem:[%s2122 + $0x28] sm:$0xff]
    %v2129 = vld [vmem:[%s2122 + $0x30] sm:$0xff]
    %v2130 = vld [vmem:[%s2122 + $0x38] sm:$0xff]
    %vm2131 = vcmask 523264
    %v2133 = vsel %vm2131, %v2119, 0
    %2135 = vmatprep.subr.mxu0 0.0
    %2136 = vmatpush1.msra.mxu0 %v2123
    %2137 = vmatprep.subr.mxu0 0.0
    %2138 = vmatpush1.msra.mxu0 %v2124
    %2139 = vmatprep.subr.mxu0 0.0
    %2140 = vmatpush1.msra.mxu0 %v2125
    %2141 = vmatprep.subr.mxu0 0.0
    %2142 = vmatpush1.msra.mxu0 %v2126
    %2143 = vmatprep.subr.mxu0 0.0
    %2144 = vmatpush1.msra.mxu0 %v2127
    %2145 = vmatprep.subr.mxu0 0.0
    %2146 = vmatpush1.msra.mxu0 %v2128
    %2147 = vmatprep.subr.mxu0 0.0
    %2148 = vmatpush1.msra.mxu0 %v2129
    %2149 = vmatprep.subr.mxu0 0.0
    %2150 = vmatpush1.msra.mxu0 %v2130
    %2151 = vmatprep.subr.mxu0 0.0
    %2152 = vmatpush1.msra.mxu0 0.0
    %2153 = vmatprep.subr.mxu0 0.0
    %2154 = vmatpush1.msra.mxu0 0.0
    %2155 = vmatprep.subr.mxu0 0.0
    %2156 = vmatpush1.msra.mxu0 0.0
    %2157 = vmatprep.subr.mxu0 0.0
    %2158 = vmatpush1.msra.mxu0 0.0
    %2159 = vmatprep.subr.mxu0 0.0
    %2160 = vmatpush1.msra.mxu0 0.0
    %2161 = vmatprep.subr.mxu0 0.0
    %2162 = vmatpush1.msra.mxu0 0.0
    %2163 = vmatprep.subr.mxu0 0.0
    %2164 = vmatpush1.msra.mxu0 0.0
    %2165 = vmatprep.subr.mxu0 0.0
    %2166 = vmatpush1.msra.mxu0 0.0
    %2167 = vmatprep.subr.mxu0 0.0
    %2168 = vmatpush1.msra.mxu0 0.0
    %2169 = vmatprep.subr.mxu0 0.0
    %2170 = vmatpush1.msra.mxu0 0.0
    %2171 = vmatprep.subr.mxu0 0.0
    %2172 = vmatpush1.msra.mxu0 0.0
    %2173 = vmatprep.subr.mxu0 0.0
    %2174 = vmatpush1.msra.mxu0 0.0
    %2175 = vmatprep.subr.mxu0 0.0
    %2176 = vmatpush1.msra.mxu0 0.0
    %2177 = vmatprep.subr.mxu0 0.0
    %2178 = vmatpush1.msra.mxu0 0.0
    %2179 = vmatprep.subr.mxu0 0.0
    %2180 = vmatpush1.msra.mxu0 0.0
    %2181 = vmatprep.subr.mxu0 0.0
    %2182 = vmatpush1.msra.mxu0 0.0
    %2183 = vmatprep.subr.mxu0 0.0
    %2184 = vmatpush1.msra.mxu0 0.0
    %2185 = vmatprep.subr.mxu0 0.0
    %2186 = vmatpush1.msra.mxu0 0.0
    %2187 = vmatprep.subr.mxu0 0.0
    %2188 = vmatpush1.msra.mxu0 0.0
    %2189 = vmatprep.subr.mxu0 0.0
    %2190 = vmatpush1.msra.mxu0 0.0
    %2191 = vmatprep.subr.mxu0 0.0
    %2192 = vmatpush1.msra.mxu0 0.0
    %2193 = vmatprep.subr.mxu0 0.0
    %2194 = vmatpush1.msra.mxu0 0.0
    %2195 = vmatprep.subr.mxu0 0.0
    %2196 = vmatpush1.msra.mxu0 0.0
    %2197 = vmatprep.subr.mxu0 0.0
    %2198 = vmatpush1.msra.mxu0 0.0
    %2199 = vmatprep.mubr.f32.mxu0 0.0
    %2200 = vmatmul.mubr.f32.gmra.mrb[0].mxu0 %v2133
    %v2201 = vpop.f32.mrb[0].mxu0
    %v2202 = vadd.f32 0.0, %v2201
    %v2203 = vpop.f32.mrb[0].mxu0
    %2204 = vdwg.mxu0
    %v2206 = vsel %vm2131, %v2036, 0
    %2208 = vmatprep.subr.mxu0 0.0
    %2209 = vmatpush1.msra.mxu0 %v2039
    %2210 = vmatprep.subr.mxu0 0.0
    %2211 = vmatpush1.msra.mxu0 %v2040
    %2212 = vmatprep.subr.mxu0 0.0
    %2213 = vmatpush1.msra.mxu0 %v2041
    %2214 = vmatprep.subr.mxu0 0.0
    %2215 = vmatpush1.msra.mxu0 %v2042
    %2216 = vmatprep.subr.mxu0 0.0
    %2217 = vmatpush1.msra.mxu0 %v2043
    %2218 = vmatprep.subr.mxu0 0.0
    %2219 = vmatpush1.msra.mxu0 %v2044
    %2220 = vmatprep.subr.mxu0 0.0
    %2221 = vmatpush1.msra.mxu0 %v2045
    %2222 = vmatprep.subr.mxu0 0.0
    %2223 = vmatpush1.msra.mxu0 %v2046
    %2224 = vmatprep.subr.mxu0 0.0
    %2225 = vmatpush1.msra.mxu0 0.0
    %2226 = vmatprep.subr.mxu0 0.0
    %2227 = vmatpush1.msra.mxu0 0.0
    %2228 = vmatprep.subr.mxu0 0.0
    %2229 = vmatpush1.msra.mxu0 0.0
    %2230 = vmatprep.subr.mxu0 0.0
    %2231 = vmatpush1.msra.mxu0 0.0
    %2232 = vmatprep.subr.mxu0 0.0
    %2233 = vmatpush1.msra.mxu0 0.0
    %2234 = vmatprep.subr.mxu0 0.0
    %2235 = vmatpush1.msra.mxu0 0.0
    %2236 = vmatprep.subr.mxu0 0.0
    %2237 = vmatpush1.msra.mxu0 0.0
    %2238 = vmatprep.subr.mxu0 0.0
    %2239 = vmatpush1.msra.mxu0 0.0
    %2240 = vmatprep.subr.mxu0 0.0
    %2241 = vmatpush1.msra.mxu0 0.0
    %2242 = vmatprep.subr.mxu0 0.0
    %2243 = vmatpush1.msra.mxu0 0.0
    %2244 = vmatprep.subr.mxu0 0.0
    %2245 = vmatpush1.msra.mxu0 0.0
    %2246 = vmatprep.subr.mxu0 0.0
    %2247 = vmatpush1.msra.mxu0 0.0
    %2248 = vmatprep.subr.mxu0 0.0
    %2249 = vmatpush1.msra.mxu0 0.0
    %2250 = vmatprep.subr.mxu0 0.0
    %2251 = vmatpush1.msra.mxu0 0.0
    %2252 = vmatprep.subr.mxu0 0.0
    %2253 = vmatpush1.msra.mxu0 0.0
    %2254 = vmatprep.subr.mxu0 0.0
    %2255 = vmatpush1.msra.mxu0 0.0
    %2256 = vmatprep.subr.mxu0 0.0
    %2257 = vmatpush1.msra.mxu0 0.0
    %2258 = vmatprep.subr.mxu0 0.0
    %2259 = vmatpush1.msra.mxu0 0.0
    %2260 = vmatprep.subr.mxu0 0.0
    %2261 = vmatpush1.msra.mxu0 0.0
    %2262 = vmatprep.subr.mxu0 0.0
    %2263 = vmatpush1.msra.mxu0 0.0
    %2264 = vmatprep.subr.mxu0 0.0
    %2265 = vmatpush1.msra.mxu0 0.0
    %2266 = vmatprep.subr.mxu0 0.0
    %2267 = vmatpush1.msra.mxu0 0.0
    %2268 = vmatprep.subr.mxu0 0.0
    %2269 = vmatpush1.msra.mxu0 0.0
    %2270 = vmatprep.subr.mxu0 0.0
    %2271 = vmatpush1.msra.mxu0 0.0
    %2272 = vmatprep.mubr.f32.mxu0 0.0
    %2273 = vmatmul.mubr.f32.gmra.mrb[0].mxu0 %v2206
    %v2274 = vpop.f32.mrb[0].mxu0
    %v2275 = vadd.f32 %v2202, %v2274
    %v2276 = vpop.f32.mrb[0].mxu0
    %2277 = vdwg.mxu0
    %s2278 = scalar_lea.vmem %s6, 4
    %v2279 = vld [vmem:[%s2278] sm:$0x3]
    %v2281 = vsel %vm1962, %v2279, 0
    %2283 = vmatprep.subr.mxu0 0.0
    %2284 = vmatpush1.msra.mxu0 %v1957
    %2285 = vmatprep.subr.mxu0 0.0
    %2286 = vmatpush1.msra.mxu0 %v1958
    %2287 = vmatprep.subr.mxu0 0.0
    %2288 = vmatpush1.msra.mxu0 %v1967
    %2289 = vmatprep.subr.mxu0 0.0
    %2290 = vmatpush1.msra.mxu0 0.0
    %2291 = vmatprep.subr.mxu0 0.0
    %2292 = vmatpush1.msra.mxu0 0.0
    %2293 = vmatprep.subr.mxu0 0.0
    %2294 = vmatpush1.msra.mxu0 0.0
    %2295 = vmatprep.subr.mxu0 0.0
    %2296 = vmatpush1.msra.mxu0 0.0
    %2297 = vmatprep.subr.mxu0 0.0
    %2298 = vmatpush1.msra.mxu0 0.0
    %2299 = vmatprep.subr.mxu0 0.0
    %2300 = vmatpush1.msra.mxu0 0.0
    %2301 = vmatprep.subr.mxu0 0.0
    %2302 = vmatpush1.msra.mxu0 0.0
    %2303 = vmatprep.subr.mxu0 0.0
    %2304 = vmatpush1.msra.mxu0 0.0
    %2305 = vmatprep.subr.mxu0 0.0
    %2306 = vmatpush1.msra.mxu0 0.0
    %2307 = vmatprep.subr.mxu0 0.0
    %2308 = vmatpush1.msra.mxu0 0.0
    %2309 = vmatprep.subr.mxu0 0.0
    %2310 = vmatpush1.msra.mxu0 0.0
    %2311 = vmatprep.subr.mxu0 0.0
    %2312 = vmatpush1.msra.mxu0 0.0
    %2313 = vmatprep.subr.mxu0 0.0
    %2314 = vmatpush1.msra.mxu0 0.0
    %2315 = vmatprep.subr.mxu0 0.0
    %2316 = vmatpush1.msra.mxu0 0.0
    %2317 = vmatprep.subr.mxu0 0.0
    %2318 = vmatpush1.msra.mxu0 0.0
    %2319 = vmatprep.subr.mxu0 0.0
    %2320 = vmatpush1.msra.mxu0 0.0
    %2321 = vmatprep.subr.mxu0 0.0
    %2322 = vmatpush1.msra.mxu0 0.0
    %2323 = vmatprep.subr.mxu0 0.0
    %2324 = vmatpush1.msra.mxu0 0.0
    %2325 = vmatprep.subr.mxu0 0.0
    %2326 = vmatpush1.msra.mxu0 0.0
    %2327 = vmatprep.subr.mxu0 0.0
    %2328 = vmatpush1.msra.mxu0 0.0
    %2329 = vmatprep.subr.mxu0 0.0
    %2330 = vmatpush1.msra.mxu0 0.0
    %2331 = vmatprep.subr.mxu0 0.0
    %2332 = vmatpush1.msra.mxu0 0.0
    %2333 = vmatprep.subr.mxu0 0.0
    %2334 = vmatpush1.msra.mxu0 0.0
    %2335 = vmatprep.subr.mxu0 0.0
    %2336 = vmatpush1.msra.mxu0 0.0
    %2337 = vmatprep.subr.mxu0 0.0
    %2338 = vmatpush1.msra.mxu0 0.0
    %2339 = vmatprep.subr.mxu0 0.0
    %2340 = vmatpush1.msra.mxu0 0.0
    %2341 = vmatprep.subr.mxu0 0.0
    %2342 = vmatpush1.msra.mxu0 0.0
    %2343 = vmatprep.subr.mxu0 0.0
    %2344 = vmatpush1.msra.mxu0 0.0
    %2345 = vmatprep.subr.mxu0 0.0
    %2346 = vmatpush1.msra.mxu0 0.0
    %2347 = vmatprep.mubr.f32.mxu0 0.0
    %2348 = vmatmul.mubr.f32.gmra.mrb[0].mxu0 %v2281
    %v2349 = vpop.f32.mrb[0].mxu0
    %v2350 = vadd.f32 0.0, %v2349
    %v2351 = vpop.f32.mrb[0].mxu0
    %2352 = vdwg.mxu0
    %s2353 = scalar_lea.vmem %s7, 128
    %v2354 = vld [vmem:[%s2353] sm:$0xff]
    %v2355 = vld [vmem:[%s2353 + $0x8] sm:$0xff]
    %v2356 = vld [vmem:[%s2353 + $0x10] sm:$0xff]
    %v2357 = vld [vmem:[%s2353 + $0x18] sm:$0xff]
    %v2358 = vld [vmem:[%s2353 + $0x20] sm:$0xff]
    %v2359 = vld [vmem:[%s2353 + $0x28] sm:$0xff]
    %v2360 = vld [vmem:[%s2353 + $0x30] sm:$0xff]
    %v2361 = vld [vmem:[%s2353 + $0x38] sm:$0xff]
    %v2363 = vsel %vm2131, %v2350, 0
    %2365 = vmatprep.subr.mxu0 0.0
    %2366 = vmatpush1.msra.mxu0 %v2354
    %2367 = vmatprep.subr.mxu0 0.0
    %2368 = vmatpush1.msra.mxu0 %v2355
    %2369 = vmatprep.subr.mxu0 0.0
    %2370 = vmatpush1.msra.mxu0 %v2356
    %2371 = vmatprep.subr.mxu0 0.0
    %2372 = vmatpush1.msra.mxu0 %v2357
    %2373 = vmatprep.subr.mxu0 0.0
    %2374 = vmatpush1.msra.mxu0 %v2358
    %2375 = vmatprep.subr.mxu0 0.0
    %2376 = vmatpush1.msra.mxu0 %v2359
    %2377 = vmatprep.subr.mxu0 0.0
    %2378 = vmatpush1.msra.mxu0 %v2360
    %2379 = vmatprep.subr.mxu0 0.0
    %2380 = vmatpush1.msra.mxu0 %v2361
    %2381 = vmatprep.subr.mxu0 0.0
    %2382 = vmatpush1.msra.mxu0 0.0
    %2383 = vmatprep.subr.mxu0 0.0
    %2384 = vmatpush1.msra.mxu0 0.0
    %2385 = vmatprep.subr.mxu0 0.0
    %2386 = vmatpush1.msra.mxu0 0.0
    %2387 = vmatprep.subr.mxu0 0.0
    %2388 = vmatpush1.msra.mxu0 0.0
    %2389 = vmatprep.subr.mxu0 0.0
    %2390 = vmatpush1.msra.mxu0 0.0
    %2391 = vmatprep.subr.mxu0 0.0
    %2392 = vmatpush1.msra.mxu0 0.0
    %2393 = vmatprep.subr.mxu0 0.0
    %2394 = vmatpush1.msra.mxu0 0.0
    %2395 = vmatprep.subr.mxu0 0.0
    %2396 = vmatpush1.msra.mxu0 0.0
    %2397 = vmatprep.subr.mxu0 0.0
    %2398 = vmatpush1.msra.mxu0 0.0
    %2399 = vmatprep.subr.mxu0 0.0
    %2400 = vmatpush1.msra.mxu0 0.0
    %2401 = vmatprep.subr.mxu0 0.0
    %2402 = vmatpush1.msra.mxu0 0.0
    %2403 = vmatprep.subr.mxu0 0.0
    %2404 = vmatpush1.msra.mxu0 0.0
    %2405 = vmatprep.subr.mxu0 0.0
    %2406 = vmatpush1.msra.mxu0 0.0
    %2407 = vmatprep.subr.mxu0 0.0
    %2408 = vmatpush1.msra.mxu0 0.0
    %2409 = vmatprep.subr.mxu0 0.0
    %2410 = vmatpush1.msra.mxu0 0.0
    %2411 = vmatprep.subr.mxu0 0.0
    %2412 = vmatpush1.msra.mxu0 0.0
    %2413 = vmatprep.subr.mxu0 0.0
    %2414 = vmatpush1.msra.mxu0 0.0
    %2415 = vmatprep.subr.mxu0 0.0
    %2416 = vmatpush1.msra.mxu0 0.0
    %2417 = vmatprep.subr.mxu0 0.0
    %2418 = vmatpush1.msra.mxu0 0.0
    %2419 = vmatprep.subr.mxu0 0.0
    %2420 = vmatpush1.msra.mxu0 0.0
    %2421 = vmatprep.subr.mxu0 0.0
    %2422 = vmatpush1.msra.mxu0 0.0
    %2423 = vmatprep.subr.mxu0 0.0
    %2424 = vmatpush1.msra.mxu0 0.0
    %2425 = vmatprep.subr.mxu0 0.0
    %2426 = vmatpush1.msra.mxu0 0.0
    %2427 = vmatprep.subr.mxu0 0.0
    %2428 = vmatpush1.msra.mxu0 0.0
    %2429 = vmatprep.mubr.f32.mxu0 0.0
    %2430 = vmatmul.mubr.f32.gmra.mrb[0].mxu0 %v2363
    %v2431 = vpop.f32.mrb[0].mxu0
    %v2432 = vadd.f32 0.0, %v2431
    %v2433 = vpop.f32.mrb[0].mxu0
    %2434 = vdwg.mxu0
    %v2435 = vadd.f32 %v2275, %v2432
    %s2436 = scalar_lea.vmem %s6, 6
    %v2437 = vld [vmem:[%s2436] sm:$0x3]
    %v2439 = vsel %vm1962, %v2437, 0
    %2441 = vmatprep.subr.mxu0 0.0
    %2442 = vmatpush1.msra.mxu0 %v1957
    %2443 = vmatprep.subr.mxu0 0.0
    %2444 = vmatpush1.msra.mxu0 %v1958
    %2445 = vmatprep.subr.mxu0 0.0
    %2446 = vmatpush1.msra.mxu0 %v1967
    %2447 = vmatprep.subr.mxu0 0.0
    %2448 = vmatpush1.msra.mxu0 0.0
    %2449 = vmatprep.subr.mxu0 0.0
    %2450 = vmatpush1.msra.mxu0 0.0
    %2451 = vmatprep.subr.mxu0 0.0
    %2452 = vmatpush1.msra.mxu0 0.0
    %2453 = vmatprep.subr.mxu0 0.0
    %2454 = vmatpush1.msra.mxu0 0.0
    %2455 = vmatprep.subr.mxu0 0.0
    %2456 = vmatpush1.msra.mxu0 0.0
    %2457 = vmatprep.subr.mxu0 0.0
    %2458 = vmatpush1.msra.mxu0 0.0
    %2459 = vmatprep.subr.mxu0 0.0
    %2460 = vmatpush1.msra.mxu0 0.0
    %2461 = vmatprep.subr.mxu0 0.0
    %2462 = vmatpush1.msra.mxu0 0.0
    %2463 = vmatprep.subr.mxu0 0.0
    %2464 = vmatpush1.msra.mxu0 0.0
    %2465 = vmatprep.subr.mxu0 0.0
    %2466 = vmatpush1.msra.mxu0 0.0
    %2467 = vmatprep.subr.mxu0 0.0
    %2468 = vmatpush1.msra.mxu0 0.0
    %2469 = vmatprep.subr.mxu0 0.0
    %2470 = vmatpush1.msra.mxu0 0.0
    %2471 = vmatprep.subr.mxu0 0.0
    %2472 = vmatpush1.msra.mxu0 0.0
    %2473 = vmatprep.subr.mxu0 0.0
    %2474 = vmatpush1.msra.mxu0 0.0
    %2475 = vmatprep.subr.mxu0 0.0
    %2476 = vmatpush1.msra.mxu0 0.0
    %2477 = vmatprep.subr.mxu0 0.0
    %2478 = vmatpush1.msra.mxu0 0.0
    %2479 = vmatprep.subr.mxu0 0.0
    %2480 = vmatpush1.msra.mxu0 0.0
    %2481 = vmatprep.subr.mxu0 0.0
    %2482 = vmatpush1.msra.mxu0 0.0
    %2483 = vmatprep.subr.mxu0 0.0
    %2484 = vmatpush1.msra.mxu0 0.0
    %2485 = vmatprep.subr.mxu0 0.0
    %2486 = vmatpush1.msra.mxu0 0.0
    %2487 = vmatprep.subr.mxu0 0.0
    %2488 = vmatpush1.msra.mxu0 0.0
    %2489 = vmatprep.subr.mxu0 0.0
    %2490 = vmatpush1.msra.mxu0 0.0
    %2491 = vmatprep.subr.mxu0 0.0
    %2492 = vmatpush1.msra.mxu0 0.0
    %2493 = vmatprep.subr.mxu0 0.0
    %2494 = vmatpush1.msra.mxu0 0.0
    %2495 = vmatprep.subr.mxu0 0.0
    %2496 = vmatpush1.msra.mxu0 0.0
    %2497 = vmatprep.subr.mxu0 0.0
    %2498 = vmatpush1.msra.mxu0 0.0
    %2499 = vmatprep.subr.mxu0 0.0
    %2500 = vmatpush1.msra.mxu0 0.0
    %2501 = vmatprep.subr.mxu0 0.0
    %2502 = vmatpush1.msra.mxu0 0.0
    %2503 = vmatprep.subr.mxu0 0.0
    %2504 = vmatpush1.msra.mxu0 0.0
    %2505 = vmatprep.mubr.f32.mxu0 0.0
    %2506 = vmatmul.mubr.f32.gmra.mrb[0].mxu0 %v2439
    %v2507 = vpop.f32.mrb[0].mxu0
    %v2508 = vadd.f32 0.0, %v2507
    %v2509 = vpop.f32.mrb[0].mxu0
    %2510 = vdwg.mxu0
    %s2511 = scalar_lea.vmem %s7, 192
    %v2512 = vld [vmem:[%s2511] sm:$0xff]
    %v2513 = vld [vmem:[%s2511 + $0x8] sm:$0xff]
    %v2514 = vld [vmem:[%s2511 + $0x10] sm:$0xff]
    %v2515 = vld [vmem:[%s2511 + $0x18] sm:$0xff]
    %v2516 = vld [vmem:[%s2511 + $0x20] sm:$0xff]
    %v2517 = vld [vmem:[%s2511 + $0x28] sm:$0xff]
    %v2518 = vld [vmem:[%s2511 + $0x30] sm:$0xff]
    %v2519 = vld [vmem:[%s2511 + $0x38] sm:$0xff]
    %v2521 = vsel %vm2131, %v2508, 0
    %2523 = vmatprep.subr.mxu0 0.0
    %2524 = vmatpush1.msra.mxu0 %v2512
    %2525 = vmatprep.subr.mxu0 0.0
    %2526 = vmatpush1.msra.mxu0 %v2513
    %2527 = vmatprep.subr.mxu0 0.0
    %2528 = vmatpush1.msra.mxu0 %v2514
    %2529 = vmatprep.subr.mxu0 0.0
    %2530 = vmatpush1.msra.mxu0 %v2515
    %2531 = vmatprep.subr.mxu0 0.0
    %2532 = vmatpush1.msra.mxu0 %v2516
    %2533 = vmatprep.subr.mxu0 0.0
    %2534 = vmatpush1.msra.mxu0 %v2517
    %2535 = vmatprep.subr.mxu0 0.0
    %2536 = vmatpush1.msra.mxu0 %v2518
    %2537 = vmatprep.subr.mxu0 0.0
    %2538 = vmatpush1.msra.mxu0 %v2519
    %2539 = vmatprep.subr.mxu0 0.0
    %2540 = vmatpush1.msra.mxu0 0.0
    %2541 = vmatprep.subr.mxu0 0.0
    %2542 = vmatpush1.msra.mxu0 0.0
    %2543 = vmatprep.subr.mxu0 0.0
    %2544 = vmatpush1.msra.mxu0 0.0
    %2545 = vmatprep.subr.mxu0 0.0
    %2546 = vmatpush1.msra.mxu0 0.0
    %2547 = vmatprep.subr.mxu0 0.0
    %2548 = vmatpush1.msra.mxu0 0.0
    %2549 = vmatprep.subr.mxu0 0.0
    %2550 = vmatpush1.msra.mxu0 0.0
    %2551 = vmatprep.subr.mxu0 0.0
    %2552 = vmatpush1.msra.mxu0 0.0
    %2553 = vmatprep.subr.mxu0 0.0
    %2554 = vmatpush1.msra.mxu0 0.0
    %2555 = vmatprep.subr.mxu0 0.0
    %2556 = vmatpush1.msra.mxu0 0.0
    %2557 = vmatprep.subr.mxu0 0.0
    %2558 = vmatpush1.msra.mxu0 0.0
    %2559 = vmatprep.subr.mxu0 0.0
    %2560 = vmatpush1.msra.mxu0 0.0
    %2561 = vmatprep.subr.mxu0 0.0
    %2562 = vmatpush1.msra.mxu0 0.0
    %2563 = vmatprep.subr.mxu0 0.0
    %2564 = vmatpush1.msra.mxu0 0.0
    %2565 = vmatprep.subr.mxu0 0.0
    %2566 = vmatpush1.msra.mxu0 0.0
    %2567 = vmatprep.subr.mxu0 0.0
    %2568 = vmatpush1.msra.mxu0 0.0
    %2569 = vmatprep.subr.mxu0 0.0
    %2570 = vmatpush1.msra.mxu0 0.0
    %2571 = vmatprep.subr.mxu0 0.0
    %2572 = vmatpush1.msra.mxu0 0.0
    %2573 = vmatprep.subr.mxu0 0.0
    %2574 = vmatpush1.msra.mxu0 0.0
    %2575 = vmatprep.subr.mxu0 0.0
    %2576 = vmatpush1.msra.mxu0 0.0
    %2577 = vmatprep.subr.mxu0 0.0
    %2578 = vmatpush1.msra.mxu0 0.0
    %2579 = vmatprep.subr.mxu0 0.0
    %2580 = vmatpush1.msra.mxu0 0.0
    %2581 = vmatprep.subr.mxu0 0.0
    %2582 = vmatpush1.msra.mxu0 0.0
    %2583 = vmatprep.subr.mxu0 0.0
    %2584 = vmatpush1.msra.mxu0 0.0
    %2585 = vmatprep.subr.mxu0 0.0
    %2586 = vmatpush1.msra.mxu0 0.0
    %2587 = vmatprep.mubr.f32.mxu0 0.0
    %2588 = vmatmul.mubr.f32.gmra.mrb[0].mxu0 %v2521
    %v2589 = vpop.f32.mrb[0].mxu0
    %v2590 = vadd.f32 0.0, %v2589
    %v2591 = vpop.f32.mrb[0].mxu0
    %2592 = vdwg.mxu0
    %v2593 = vadd.f32 %v2435, %v2590
    %s2594 = scalar_lea.vmem %s6, 8
    %v2595 = vld [vmem:[%s2594] sm:$0x3]
    %v2597 = vsel %vm1962, %v2595, 0
    %2599 = vmatprep.subr.mxu0 0.0
    %2600 = vmatpush1.msra.mxu0 %v1957
    %2601 = vmatprep.subr.mxu0 0.0
    %2602 = vmatpush1.msra.mxu0 %v1958
    %2603 = vmatprep.subr.mxu0 0.0
    %2604 = vmatpush1.msra.mxu0 %v1967
    %2605 = vmatprep.subr.mxu0 0.0
    %2606 = vmatpush1.msra.mxu0 0.0
    %2607 = vmatprep.subr.mxu0 0.0
    %2608 = vmatpush1.msra.mxu0 0.0
    %2609 = vmatprep.subr.mxu0 0.0
    %2610 = vmatpush1.msra.mxu0 0.0
    %2611 = vmatprep.subr.mxu0 0.0
    %2612 = vmatpush1.msra.mxu0 0.0
    %2613 = vmatprep.subr.mxu0 0.0
    %2614 = vmatpush1.msra.mxu0 0.0
    %2615 = vmatprep.subr.mxu0 0.0
    %2616 = vmatpush1.msra.mxu0 0.0
    %2617 = vmatprep.subr.mxu0 0.0
    %2618 = vmatpush1.msra.mxu0 0.0
    %2619 = vmatprep.subr.mxu0 0.0
    %2620 = vmatpush1.msra.mxu0 0.0
    %2621 = vmatprep.subr.mxu0 0.0
    %2622 = vmatpush1.msra.mxu0 0.0
    %2623 = vmatprep.subr.mxu0 0.0
    %2624 = vmatpush1.msra.mxu0 0.0
    %2625 = vmatprep.subr.mxu0 0.0
    %2626 = vmatpush1.msra.mxu0 0.0
    %2627 = vmatprep.subr.mxu0 0.0
    %2628 = vmatpush1.msra.mxu0 0.0
    %2629 = vmatprep.subr.mxu0 0.0
    %2630 = vmatpush1.msra.mxu0 0.0
    %2631 = vmatprep.subr.mxu0 0.0
    %2632 = vmatpush1.msra.mxu0 0.0
    %2633 = vmatprep.subr.mxu0 0.0
    %2634 = vmatpush1.msra.mxu0 0.0
    %2635 = vmatprep.subr.mxu0 0.0
    %2636 = vmatpush1.msra.mxu0 0.0
    %2637 = vmatprep.subr.mxu0 0.0
    %2638 = vmatpush1.msra.mxu0 0.0
    %2639 = vmatprep.subr.mxu0 0.0
    %2640 = vmatpush1.msra.mxu0 0.0
    %2641 = vmatprep.subr.mxu0 0.0
    %2642 = vmatpush1.msra.mxu0 0.0
    %2643 = vmatprep.subr.mxu0 0.0
    %2644 = vmatpush1.msra.mxu0 0.0
    %2645 = vmatprep.subr.mxu0 0.0
    %2646 = vmatpush1.msra.mxu0 0.0
    %2647 = vmatprep.subr.mxu0 0.0
    %2648 = vmatpush1.msra.mxu0 0.0
    %2649 = vmatprep.subr.mxu0 0.0
    %2650 = vmatpush1.msra.mxu0 0.0
    %2651 = vmatprep.subr.mxu0 0.0
    %2652 = vmatpush1.msra.mxu0 0.0
    %2653 = vmatprep.subr.mxu0 0.0
    %2654 = vmatpush1.msra.mxu0 0.0
    %2655 = vmatprep.subr.mxu0 0.0
    %2656 = vmatpush1.msra.mxu0 0.0
    %2657 = vmatprep.subr.mxu0 0.0
    %2658 = vmatpush1.msra.mxu0 0.0
    %2659 = vmatprep.subr.mxu0 0.0
    %2660 = vmatpush1.msra.mxu0 0.0
    %2661 = vmatprep.subr.mxu0 0.0
    %2662 = vmatpush1.msra.mxu0 0.0
    %2663 = vmatprep.mubr.f32.mxu0 0.0
    %2664 = vmatmul.mubr.f32.gmra.mrb[0].mxu0 %v2597
    %v2665 = vpop.f32.mrb[0].mxu0
    %v2666 = vadd.f32 0.0, %v2665
    %v2667 = vpop.f32.mrb[0].mxu0
    %2668 = vdwg.mxu0
    %s2669 = scalar_lea.vmem %s7, 256
    %v2670 = vld [vmem:[%s2669] sm:$0xff]
    %v2671 = vld [vmem:[%s2669 + $0x8] sm:$0xff]
    %v2672 = vld [vmem:[%s2669 + $0x10] sm:$0xff]
    %v2673 = vld [vmem:[%s2669 + $0x18] sm:$0xff]
    %v2674 = vld [vmem:[%s2669 + $0x20] sm:$0xff]
    %v2675 = vld [vmem:[%s2669 + $0x28] sm:$0xff]
    %v2676 = vld [vmem:[%s2669 + $0x30] sm:$0xff]
    %v2677 = vld [vmem:[%s2669 + $0x38] sm:$0xff]
    %v2679 = vsel %vm2131, %v2666, 0
    %2681 = vmatprep.subr.mxu0 0.0
    %2682 = vmatpush1.msra.mxu0 %v2670
    %2683 = vmatprep.subr.mxu0 0.0
    %2684 = vmatpush1.msra.mxu0 %v2671
    %2685 = vmatprep.subr.mxu0 0.0
    %2686 = vmatpush1.msra.mxu0 %v2672
    %2687 = vmatprep.subr.mxu0 0.0
    %2688 = vmatpush1.msra.mxu0 %v2673
    %2689 = vmatprep.subr.mxu0 0.0
    %2690 = vmatpush1.msra.mxu0 %v2674
    %2691 = vmatprep.subr.mxu0 0.0
    %2692 = vmatpush1.msra.mxu0 %v2675
    %2693 = vmatprep.subr.mxu0 0.0
    %2694 = vmatpush1.msra.mxu0 %v2676
    %2695 = vmatprep.subr.mxu0 0.0
    %2696 = vmatpush1.msra.mxu0 %v2677
    %2697 = vmatprep.subr.mxu0 0.0
    %2698 = vmatpush1.msra.mxu0 0.0
    %2699 = vmatprep.subr.mxu0 0.0
    %2700 = vmatpush1.msra.mxu0 0.0
    %2701 = vmatprep.subr.mxu0 0.0
    %2702 = vmatpush1.msra.mxu0 0.0
    %2703 = vmatprep.subr.mxu0 0.0
    %2704 = vmatpush1.msra.mxu0 0.0
    %2705 = vmatprep.subr.mxu0 0.0
    %2706 = vmatpush1.msra.mxu0 0.0
    %2707 = vmatprep.subr.mxu0 0.0
    %2708 = vmatpush1.msra.mxu0 0.0
    %2709 = vmatprep.subr.mxu0 0.0
    %2710 = vmatpush1.msra.mxu0 0.0
    %2711 = vmatprep.subr.mxu0 0.0
    %2712 = vmatpush1.msra.mxu0 0.0
    %2713 = vmatprep.subr.mxu0 0.0
    %2714 = vmatpush1.msra.mxu0 0.0
    %2715 = vmatprep.subr.mxu0 0.0
    %2716 = vmatpush1.msra.mxu0 0.0
    %2717 = vmatprep.subr.mxu0 0.0
    %2718 = vmatpush1.msra.mxu0 0.0
    %2719 = vmatprep.subr.mxu0 0.0
    %2720 = vmatpush1.msra.mxu0 0.0
    %2721 = vmatprep.subr.mxu0 0.0
    %2722 = vmatpush1.msra.mxu0 0.0
    %2723 = vmatprep.subr.mxu0 0.0
    %2724 = vmatpush1.msra.mxu0 0.0
    %2725 = vmatprep.subr.mxu0 0.0
    %2726 = vmatpush1.msra.mxu0 0.0
    %2727 = vmatprep.subr.mxu0 0.0
    %2728 = vmatpush1.msra.mxu0 0.0
    %2729 = vmatprep.subr.mxu0 0.0
    %2730 = vmatpush1.msra.mxu0 0.0
    %2731 = vmatprep.subr.mxu0 0.0
    %2732 = vmatpush1.msra.mxu0 0.0
    %2733 = vmatprep.subr.mxu0 0.0
    %2734 = vmatpush1.msra.mxu0 0.0
    %2735 = vmatprep.subr.mxu0 0.0
    %2736 = vmatpush1.msra.mxu0 0.0
    %2737 = vmatprep.subr.mxu0 0.0
    %2738 = vmatpush1.msra.mxu0 0.0
    %2739 = vmatprep.subr.mxu0 0.0
    %2740 = vmatpush1.msra.mxu0 0.0
    %2741 = vmatprep.subr.mxu0 0.0
    %2742 = vmatpush1.msra.mxu0 0.0
    %2743 = vmatprep.subr.mxu0 0.0
    %2744 = vmatpush1.msra.mxu0 0.0
    %2745 = vmatprep.mubr.f32.mxu0 0.0
    %2746 = vmatmul.mubr.f32.gmra.mrb[0].mxu0 %v2679
    %v2747 = vpop.f32.mrb[0].mxu0
    %v2748 = vadd.f32 0.0, %v2747
    %v2749 = vpop.f32.mrb[0].mxu0
    %2750 = vdwg.mxu0
    %v2751 = vadd.f32 %v2593, %v2748
    %s2752 = scalar_lea.vmem %s6, 10
    %v2753 = vld [vmem:[%s2752] sm:$0x3]
    %v2755 = vsel %vm1962, %v2753, 0
    %2757 = vmatprep.subr.mxu0 0.0
    %2758 = vmatpush1.msra.mxu0 %v1957
    %2759 = vmatprep.subr.mxu0 0.0
    %2760 = vmatpush1.msra.mxu0 %v1958
    %2761 = vmatprep.subr.mxu0 0.0
    %2762 = vmatpush1.msra.mxu0 %v1967
    %2763 = vmatprep.subr.mxu0 0.0
    %2764 = vmatpush1.msra.mxu0 0.0
    %2765 = vmatprep.subr.mxu0 0.0
    %2766 = vmatpush1.msra.mxu0 0.0
    %2767 = vmatprep.subr.mxu0 0.0
    %2768 = vmatpush1.msra.mxu0 0.0
    %2769 = vmatprep.subr.mxu0 0.0
    %2770 = vmatpush1.msra.mxu0 0.0
    %2771 = vmatprep.subr.mxu0 0.0
    %2772 = vmatpush1.msra.mxu0 0.0
    %2773 = vmatprep.subr.mxu0 0.0
    %2774 = vmatpush1.msra.mxu0 0.0
    %2775 = vmatprep.subr.mxu0 0.0
    %2776 = vmatpush1.msra.mxu0 0.0
    %2777 = vmatprep.subr.mxu0 0.0
    %2778 = vmatpush1.msra.mxu0 0.0
    %2779 = vmatprep.subr.mxu0 0.0
    %2780 = vmatpush1.msra.mxu0 0.0
    %2781 = vmatprep.subr.mxu0 0.0
    %2782 = vmatpush1.msra.mxu0 0.0
    %2783 = vmatprep.subr.mxu0 0.0
    %2784 = vmatpush1.msra.mxu0 0.0
    %2785 = vmatprep.subr.mxu0 0.0
    %2786 = vmatpush1.msra.mxu0 0.0
    %2787 = vmatprep.subr.mxu0 0.0
    %2788 = vmatpush1.msra.mxu0 0.0
    %2789 = vmatprep.subr.mxu0 0.0
    %2790 = vmatpush1.msra.mxu0 0.0
    %2791 = vmatprep.subr.mxu0 0.0
    %2792 = vmatpush1.msra.mxu0 0.0
    %2793 = vmatprep.subr.mxu0 0.0
    %2794 = vmatpush1.msra.mxu0 0.0
    %2795 = vmatprep.subr.mxu0 0.0
    %2796 = vmatpush1.msra.mxu0 0.0
    %2797 = vmatprep.subr.mxu0 0.0
    %2798 = vmatpush1.msra.mxu0 0.0
    %2799 = vmatprep.subr.mxu0 0.0
    %2800 = vmatpush1.msra.mxu0 0.0
    %2801 = vmatprep.subr.mxu0 0.0
    %2802 = vmatpush1.msra.mxu0 0.0
    %2803 = vmatprep.subr.mxu0 0.0
    %2804 = vmatpush1.msra.mxu0 0.0
    %2805 = vmatprep.subr.mxu0 0.0
    %2806 = vmatpush1.msra.mxu0 0.0
    %2807 = vmatprep.subr.mxu0 0.0
    %2808 = vmatpush1.msra.mxu0 0.0
    %2809 = vmatprep.subr.mxu0 0.0
    %2810 = vmatpush1.msra.mxu0 0.0
    %2811 = vmatprep.subr.mxu0 0.0
    %2812 = vmatpush1.msra.mxu0 0.0
    %2813 = vmatprep.subr.mxu0 0.0
    %2814 = vmatpush1.msra.mxu0 0.0
    %2815 = vmatprep.subr.mxu0 0.0
    %2816 = vmatpush1.msra.mxu0 0.0
    %2817 = vmatprep.subr.mxu0 0.0
    %2818 = vmatpush1.msra.mxu0 0.0
    %2819 = vmatprep.subr.mxu0 0.0
    %2820 = vmatpush1.msra.mxu0 0.0
    %2821 = vmatprep.mubr.f32.mxu0 0.0
    %2822 = vmatmul.mubr.f32.gmra.mrb[0].mxu0 %v2755
    %v2823 = vpop.f32.mrb[0].mxu0
    %v2824 = vadd.f32 0.0, %v2823
    %v2825 = vpop.f32.mrb[0].mxu0
    %2826 = vdwg.mxu0
    %s2827 = scalar_lea.vmem %s7, 320
    %v2828 = vld [vmem:[%s2827] sm:$0xff]
    %v2829 = vld [vmem:[%s2827 + $0x8] sm:$0xff]
    %v2830 = vld [vmem:[%s2827 + $0x10] sm:$0xff]
    %v2831 = vld [vmem:[%s2827 + $0x18] sm:$0xff]
    %v2832 = vld [vmem:[%s2827 + $0x20] sm:$0xff]
    %v2833 = vld [vmem:[%s2827 + $0x28] sm:$0xff]
    %v2834 = vld [vmem:[%s2827 + $0x30] sm:$0xff]
    %v2835 = vld [vmem:[%s2827 + $0x38] sm:$0xff]
    %v2837 = vsel %vm2131, %v2824, 0
    %2839 = vmatprep.subr.mxu0 0.0
    %2840 = vmatpush1.msra.mxu0 %v2828
    %2841 = vmatprep.subr.mxu0 0.0
    %2842 = vmatpush1.msra.mxu0 %v2829
    %2843 = vmatprep.subr.mxu0 0.0
    %2844 = vmatpush1.msra.mxu0 %v2830
    %2845 = vmatprep.subr.mxu0 0.0
    %2846 = vmatpush1.msra.mxu0 %v2831
    %2847 = vmatprep.subr.mxu0 0.0
    %2848 = vmatpush1.msra.mxu0 %v2832
    %2849 = vmatprep.subr.mxu0 0.0
    %2850 = vmatpush1.msra.mxu0 %v2833
    %2851 = vmatprep.subr.mxu0 0.0
    %2852 = vmatpush1.msra.mxu0 %v2834
    %2853 = vmatprep.subr.mxu0 0.0
    %2854 = vmatpush1.msra.mxu0 %v2835
    %2855 = vmatprep.subr.mxu0 0.0
    %2856 = vmatpush1.msra.mxu0 0.0
    %2857 = vmatprep.subr.mxu0 0.0
    %2858 = vmatpush1.msra.mxu0 0.0
    %2859 = vmatprep.subr.mxu0 0.0
    %2860 = vmatpush1.msra.mxu0 0.0
    %2861 = vmatprep.subr.mxu0 0.0
    %2862 = vmatpush1.msra.mxu0 0.0
    %2863 = vmatprep.subr.mxu0 0.0
    %2864 = vmatpush1.msra.mxu0 0.0
    %2865 = vmatprep.subr.mxu0 0.0
    %2866 = vmatpush1.msra.mxu0 0.0
    %2867 = vmatprep.subr.mxu0 0.0
    %2868 = vmatpush1.msra.mxu0 0.0
    %2869 = vmatprep.subr.mxu0 0.0
    %2870 = vmatpush1.msra.mxu0 0.0
    %2871 = vmatprep.subr.mxu0 0.0
    %2872 = vmatpush1.msra.mxu0 0.0
    %2873 = vmatprep.subr.mxu0 0.0
    %2874 = vmatpush1.msra.mxu0 0.0
    %2875 = vmatprep.subr.mxu0 0.0
    %2876 = vmatpush1.msra.mxu0 0.0
    %2877 = vmatprep.subr.mxu0 0.0
    %2878 = vmatpush1.msra.mxu0 0.0
    %2879 = vmatprep.subr.mxu0 0.0
    %2880 = vmatpush1.msra.mxu0 0.0
    %2881 = vmatprep.subr.mxu0 0.0
    %2882 = vmatpush1.msra.mxu0 0.0
    %2883 = vmatprep.subr.mxu0 0.0
    %2884 = vmatpush1.msra.mxu0 0.0
    %2885 = vmatprep.subr.mxu0 0.0
    %2886 = vmatpush1.msra.mxu0 0.0
    %2887 = vmatprep.subr.mxu0 0.0
    %2888 = vmatpush1.msra.mxu0 0.0
    %2889 = vmatprep.subr.mxu0 0.0
    %2890 = vmatpush1.msra.mxu0 0.0
    %2891 = vmatprep.subr.mxu0 0.0
    %2892 = vmatpush1.msra.mxu0 0.0
    %2893 = vmatprep.subr.mxu0 0.0
    %2894 = vmatpush1.msra.mxu0 0.0
    %2895 = vmatprep.subr.mxu0 0.0
    %2896 = vmatpush1.msra.mxu0 0.0
    %2897 = vmatprep.subr.mxu0 0.0
    %2898 = vmatpush1.msra.mxu0 0.0
    %2899 = vmatprep.subr.mxu0 0.0
    %2900 = vmatpush1.msra.mxu0 0.0
    %2901 = vmatprep.subr.mxu0 0.0
    %2902 = vmatpush1.msra.mxu0 0.0
    %2903 = vmatprep.mubr.f32.mxu0 0.0
    %2904 = vmatmul.mubr.f32.gmra.mrb[0].mxu0 %v2837
    %v2905 = vpop.f32.mrb[0].mxu0
    %v2906 = vadd.f32 0.0, %v2905
    %v2907 = vpop.f32.mrb[0].mxu0
    %2908 = vdwg.mxu0
    %v2909 = vadd.f32 %v2751, %v2906
    %s2910 = scalar_lea.vmem %s6, 12
    %v2911 = vld [vmem:[%s2910] sm:$0x3]
    %v2913 = vsel %vm1962, %v2911, 0
    %2915 = vmatprep.subr.mxu0 0.0
    %2916 = vmatpush1.msra.mxu0 %v1957
    %2917 = vmatprep.subr.mxu0 0.0
    %2918 = vmatpush1.msra.mxu0 %v1958
    %2919 = vmatprep.subr.mxu0 0.0
    %2920 = vmatpush1.msra.mxu0 %v1967
    %2921 = vmatprep.subr.mxu0 0.0
    %2922 = vmatpush1.msra.mxu0 0.0
    %2923 = vmatprep.subr.mxu0 0.0
    %2924 = vmatpush1.msra.mxu0 0.0
    %2925 = vmatprep.subr.mxu0 0.0
    %2926 = vmatpush1.msra.mxu0 0.0
    %2927 = vmatprep.subr.mxu0 0.0
    %2928 = vmatpush1.msra.mxu0 0.0
    %2929 = vmatprep.subr.mxu0 0.0
    %2930 = vmatpush1.msra.mxu0 0.0
    %2931 = vmatprep.subr.mxu0 0.0
    %2932 = vmatpush1.msra.mxu0 0.0
    %2933 = vmatprep.subr.mxu0 0.0
    %2934 = vmatpush1.msra.mxu0 0.0
    %2935 = vmatprep.subr.mxu0 0.0
    %2936 = vmatpush1.msra.mxu0 0.0
    %2937 = vmatprep.subr.mxu0 0.0
    %2938 = vmatpush1.msra.mxu0 0.0
    %2939 = vmatprep.subr.mxu0 0.0
    %2940 = vmatpush1.msra.mxu0 0.0
    %2941 = vmatprep.subr.mxu0 0.0
    %2942 = vmatpush1.msra.mxu0 0.0
    %2943 = vmatprep.subr.mxu0 0.0
    %2944 = vmatpush1.msra.mxu0 0.0
    %2945 = vmatprep.subr.mxu0 0.0
    %2946 = vmatpush1.msra.mxu0 0.0
    %2947 = vmatprep.subr.mxu0 0.0
    %2948 = vmatpush1.msra.mxu0 0.0
    %2949 = vmatprep.subr.mxu0 0.0
    %2950 = vmatpush1.msra.mxu0 0.0
    %2951 = vmatprep.subr.mxu0 0.0
    %2952 = vmatpush1.msra.mxu0 0.0
    %2953 = vmatprep.subr.mxu0 0.0
    %2954 = vmatpush1.msra.mxu0 0.0
    %2955 = vmatprep.subr.mxu0 0.0
    %2956 = vmatpush1.msra.mxu0 0.0
    %2957 = vmatprep.subr.mxu0 0.0
    %2958 = vmatpush1.msra.mxu0 0.0
    %2959 = vmatprep.subr.mxu0 0.0
    %2960 = vmatpush1.msra.mxu0 0.0
    %2961 = vmatprep.subr.mxu0 0.0
    %2962 = vmatpush1.msra.mxu0 0.0
    %2963 = vmatprep.subr.mxu0 0.0
    %2964 = vmatpush1.msra.mxu0 0.0
    %2965 = vmatprep.subr.mxu0 0.0
    %2966 = vmatpush1.msra.mxu0 0.0
    %2967 = vmatprep.subr.mxu0 0.0
    %2968 = vmatpush1.msra.mxu0 0.0
    %2969 = vmatprep.subr.mxu0 0.0
    %2970 = vmatpush1.msra.mxu0 0.0
    %2971 = vmatprep.subr.mxu0 0.0
    %2972 = vmatpush1.msra.mxu0 0.0
    %2973 = vmatprep.subr.mxu0 0.0
    %2974 = vmatpush1.msra.mxu0 0.0
    %2975 = vmatprep.subr.mxu0 0.0
    %2976 = vmatpush1.msra.mxu0 0.0
    %2977 = vmatprep.subr.mxu0 0.0
    %2978 = vmatpush1.msra.mxu0 0.0
    %2979 = vmatprep.mubr.f32.mxu0 0.0
    %2980 = vmatmul.mubr.f32.gmra.mrb[0].mxu0 %v2913
    %v2981 = vpop.f32.mrb[0].mxu0
    %v2982 = vadd.f32 0.0, %v2981
    %v2983 = vpop.f32.mrb[0].mxu0
    %2984 = vdwg.mxu0
    %s2985 = scalar_lea.vmem %s7, 384
    %v2986 = vld [vmem:[%s2985] sm:$0xff]
    %v2987 = vld [vmem:[%s2985 + $0x8] sm:$0xff]
    %v2988 = vld [vmem:[%s2985 + $0x10] sm:$0xff]
    %v2989 = vld [vmem:[%s2985 + $0x18] sm:$0xff]
    %v2990 = vld [vmem:[%s2985 + $0x20] sm:$0xff]
    %v2991 = vld [vmem:[%s2985 + $0x28] sm:$0xff]
    %v2992 = vld [vmem:[%s2985 + $0x30] sm:$0xff]
    %v2993 = vld [vmem:[%s2985 + $0x38] sm:$0xff]
    %v2995 = vsel %vm2131, %v2982, 0
    %2997 = vmatprep.subr.mxu0 0.0
    %2998 = vmatpush1.msra.mxu0 %v2986
    %2999 = vmatprep.subr.mxu0 0.0
    %3000 = vmatpush1.msra.mxu0 %v2987
    %3001 = vmatprep.subr.mxu0 0.0
    %3002 = vmatpush1.msra.mxu0 %v2988
    %3003 = vmatprep.subr.mxu0 0.0
    %3004 = vmatpush1.msra.mxu0 %v2989
    %3005 = vmatprep.subr.mxu0 0.0
    %3006 = vmatpush1.msra.mxu0 %v2990
    %3007 = vmatprep.subr.mxu0 0.0
    %3008 = vmatpush1.msra.mxu0 %v2991
    %3009 = vmatprep.subr.mxu0 0.0
    %3010 = vmatpush1.msra.mxu0 %v2992
    %3011 = vmatprep.subr.mxu0 0.0
    %3012 = vmatpush1.msra.mxu0 %v2993
    %3013 = vmatprep.subr.mxu0 0.0
    %3014 = vmatpush1.msra.mxu0 0.0
    %3015 = vmatprep.subr.mxu0 0.0
    %3016 = vmatpush1.msra.mxu0 0.0
    %3017 = vmatprep.subr.mxu0 0.0
    %3018 = vmatpush1.msra.mxu0 0.0
    %3019 = vmatprep.subr.mxu0 0.0
    %3020 = vmatpush1.msra.mxu0 0.0
    %3021 = vmatprep.subr.mxu0 0.0
    %3022 = vmatpush1.msra.mxu0 0.0
    %3023 = vmatprep.subr.mxu0 0.0
    %3024 = vmatpush1.msra.mxu0 0.0
    %3025 = vmatprep.subr.mxu0 0.0
    %3026 = vmatpush1.msra.mxu0 0.0
    %3027 = vmatprep.subr.mxu0 0.0
    %3028 = vmatpush1.msra.mxu0 0.0
    %3029 = vmatprep.subr.mxu0 0.0
    %3030 = vmatpush1.msra.mxu0 0.0
    %3031 = vmatprep.subr.mxu0 0.0
    %3032 = vmatpush1.msra.mxu0 0.0
    %3033 = vmatprep.subr.mxu0 0.0
    %3034 = vmatpush1.msra.mxu0 0.0
    %3035 = vmatprep.subr.mxu0 0.0
    %3036 = vmatpush1.msra.mxu0 0.0
    %3037 = vmatprep.subr.mxu0 0.0
    %3038 = vmatpush1.msra.mxu0 0.0
    %3039 = vmatprep.subr.mxu0 0.0
    %3040 = vmatpush1.msra.mxu0 0.0
    %3041 = vmatprep.subr.mxu0 0.0
    %3042 = vmatpush1.msra.mxu0 0.0
    %3043 = vmatprep.subr.mxu0 0.0
    %3044 = vmatpush1.msra.mxu0 0.0
    %3045 = vmatprep.subr.mxu0 0.0
    %3046 = vmatpush1.msra.mxu0 0.0
    %3047 = vmatprep.subr.mxu0 0.0
    %3048 = vmatpush1.msra.mxu0 0.0
    %3049 = vmatprep.subr.mxu0 0.0
    %3050 = vmatpush1.msra.mxu0 0.0
    %3051 = vmatprep.subr.mxu0 0.0
    %3052 = vmatpush1.msra.mxu0 0.0
    %3053 = vmatprep.subr.mxu0 0.0
    %3054 = vmatpush1.msra.mxu0 0.0
    %3055 = vmatprep.subr.mxu0 0.0
    %3056 = vmatpush1.msra.mxu0 0.0
    %3057 = vmatprep.subr.mxu0 0.0
    %3058 = vmatpush1.msra.mxu0 0.0
    %3059 = vmatprep.subr.mxu0 0.0
    %3060 = vmatpush1.msra.mxu0 0.0
    %3061 = vmatprep.mubr.f32.mxu0 0.0
    %3062 = vmatmul.mubr.f32.gmra.mrb[0].mxu0 %v2995
    %v3063 = vpop.f32.mrb[0].mxu0
    %v3064 = vadd.f32 0.0, %v3063
    %v3065 = vpop.f32.mrb[0].mxu0
    %3066 = vdwg.mxu0
    %v3067 = vadd.f32 %v2909, %v3064
    %s3068 = scalar_lea.vmem %s6, 14
    %v3069 = vld [vmem:[%s3068] sm:$0x3]
    %v3071 = vsel %vm1962, %v3069, 0
    %3073 = vmatprep.subr.mxu0 0.0
    %3074 = vmatpush1.msra.mxu0 %v1957
    %3075 = vmatprep.subr.mxu0 0.0
    %3076 = vmatpush1.msra.mxu0 %v1958
    %3077 = vmatprep.subr.mxu0 0.0
    %3078 = vmatpush1.msra.mxu0 %v1967
    %3079 = vmatprep.subr.mxu0 0.0
    %3080 = vmatpush1.msra.mxu0 0.0
    %3081 = vmatprep.subr.mxu0 0.0
    %3082 = vmatpush1.msra.mxu0 0.0
    %3083 = vmatprep.subr.mxu0 0.0
    %3084 = vmatpush1.msra.mxu0 0.0
    %3085 = vmatprep.subr.mxu0 0.0
    %3086 = vmatpush1.msra.mxu0 0.0
    %3087 = vmatprep.subr.mxu0 0.0
    %3088 = vmatpush1.msra.mxu0 0.0
    %3089 = vmatprep.subr.mxu0 0.0
    %3090 = vmatpush1.msra.mxu0 0.0
    %3091 = vmatprep.subr.mxu0 0.0
    %3092 = vmatpush1.msra.mxu0 0.0
    %3093 = vmatprep.subr.mxu0 0.0
    %3094 = vmatpush1.msra.mxu0 0.0
    %3095 = vmatprep.subr.mxu0 0.0
    %3096 = vmatpush1.msra.mxu0 0.0
    %3097 = vmatprep.subr.mxu0 0.0
    %3098 = vmatpush1.msra.mxu0 0.0
    %3099 = vmatprep.subr.mxu0 0.0
    %3100 = vmatpush1.msra.mxu0 0.0
    %3101 = vmatprep.subr.mxu0 0.0
    %3102 = vmatpush1.msra.mxu0 0.0
    %3103 = vmatprep.subr.mxu0 0.0
    %3104 = vmatpush1.msra.mxu0 0.0
    %3105 = vmatprep.subr.mxu0 0.0
    %3106 = vmatpush1.msra.mxu0 0.0
    %3107 = vmatprep.subr.mxu0 0.0
    %3108 = vmatpush1.msra.mxu0 0.0
    %3109 = vmatprep.subr.mxu0 0.0
    %3110 = vmatpush1.msra.mxu0 0.0
    %3111 = vmatprep.subr.mxu0 0.0
    %3112 = vmatpush1.msra.mxu0 0.0
    %3113 = vmatprep.subr.mxu0 0.0
    %3114 = vmatpush1.msra.mxu0 0.0
    %3115 = vmatprep.subr.mxu0 0.0
    %3116 = vmatpush1.msra.mxu0 0.0
    %3117 = vmatprep.subr.mxu0 0.0
    %3118 = vmatpush1.msra.mxu0 0.0
    %3119 = vmatprep.subr.mxu0 0.0
    %3120 = vmatpush1.msra.mxu0 0.0
    %3121 = vmatprep.subr.mxu0 0.0
    %3122 = vmatpush1.msra.mxu0 0.0
    %3123 = vmatprep.subr.mxu0 0.0
    %3124 = vmatpush1.msra.mxu0 0.0
    %3125 = vmatprep.subr.mxu0 0.0
    %3126 = vmatpush1.msra.mxu0 0.0
    %3127 = vmatprep.subr.mxu0 0.0
    %3128 = vmatpush1.msra.mxu0 0.0
    %3129 = vmatprep.subr.mxu0 0.0
    %3130 = vmatpush1.msra.mxu0 0.0
    %3131 = vmatprep.subr.mxu0 0.0
    %3132 = vmatpush1.msra.mxu0 0.0
    %3133 = vmatprep.subr.mxu0 0.0
    %3134 = vmatpush1.msra.mxu0 0.0
    %3135 = vmatprep.subr.mxu0 0.0
    %3136 = vmatpush1.msra.mxu0 0.0
    %3137 = vmatprep.mubr.f32.mxu0 0.0
    %3138 = vmatmul.mubr.f32.gmra.mrb[0].mxu0 %v3071
    %v3139 = vpop.f32.mrb[0].mxu0
    %v3140 = vadd.f32 0.0, %v3139
    %v3141 = vpop.f32.mrb[0].mxu0
    %3142 = vdwg.mxu0
    %s3143 = scalar_lea.vmem %s7, 448
    %v3144 = vld [vmem:[%s3143] sm:$0xff]
    %v3145 = vld [vmem:[%s3143 + $0x8] sm:$0xff]
    %v3146 = vld [vmem:[%s3143 + $0x10] sm:$0xff]
    %v3147 = vld [vmem:[%s3143 + $0x18] sm:$0xff]
    %v3148 = vld [vmem:[%s3143 + $0x20] sm:$0xff]
    %v3149 = vld [vmem:[%s3143 + $0x28] sm:$0xff]
    %v3150 = vld [vmem:[%s3143 + $0x30] sm:$0xff]
    %v3151 = vld [vmem:[%s3143 + $0x38] sm:$0xff]
    %v3153 = vsel %vm2131, %v3140, 0
    %3155 = vmatprep.subr.mxu0 0.0
    %3156 = vmatpush1.msra.mxu0 %v3144
    %3157 = vmatprep.subr.mxu0 0.0
    %3158 = vmatpush1.msra.mxu0 %v3145
    %3159 = vmatprep.subr.mxu0 0.0
    %3160 = vmatpush1.msra.mxu0 %v3146
    %3161 = vmatprep.subr.mxu0 0.0
    %3162 = vmatpush1.msra.mxu0 %v3147
    %3163 = vmatprep.subr.mxu0 0.0
    %3164 = vmatpush1.msra.mxu0 %v3148
    %3165 = vmatprep.subr.mxu0 0.0
    %3166 = vmatpush1.msra.mxu0 %v3149
    %3167 = vmatprep.subr.mxu0 0.0
    %3168 = vmatpush1.msra.mxu0 %v3150
    %3169 = vmatprep.subr.mxu0 0.0
    %3170 = vmatpush1.msra.mxu0 %v3151
    %3171 = vmatprep.subr.mxu0 0.0
    %3172 = vmatpush1.msra.mxu0 0.0
    %3173 = vmatprep.subr.mxu0 0.0
    %3174 = vmatpush1.msra.mxu0 0.0
    %3175 = vmatprep.subr.mxu0 0.0
    %3176 = vmatpush1.msra.mxu0 0.0
    %3177 = vmatprep.subr.mxu0 0.0
    %3178 = vmatpush1.msra.mxu0 0.0
    %3179 = vmatprep.subr.mxu0 0.0
    %3180 = vmatpush1.msra.mxu0 0.0
    %3181 = vmatprep.subr.mxu0 0.0
    %3182 = vmatpush1.msra.mxu0 0.0
    %3183 = vmatprep.subr.mxu0 0.0
    %3184 = vmatpush1.msra.mxu0 0.0
    %3185 = vmatprep.subr.mxu0 0.0
    %3186 = vmatpush1.msra.mxu0 0.0
    %3187 = vmatprep.subr.mxu0 0.0
    %3188 = vmatpush1.msra.mxu0 0.0
    %3189 = vmatprep.subr.mxu0 0.0
    %3190 = vmatpush1.msra.mxu0 0.0
    %3191 = vmatprep.subr.mxu0 0.0
    %3192 = vmatpush1.msra.mxu0 0.0
    %3193 = vmatprep.subr.mxu0 0.0
    %3194 = vmatpush1.msra.mxu0 0.0
    %3195 = vmatprep.subr.mxu0 0.0
    %3196 = vmatpush1.msra.mxu0 0.0
    %3197 = vmatprep.subr.mxu0 0.0
    %3198 = vmatpush1.msra.mxu0 0.0
    %3199 = vmatprep.subr.mxu0 0.0
    %3200 = vmatpush1.msra.mxu0 0.0
    %3201 = vmatprep.subr.mxu0 0.0
    %3202 = vmatpush1.msra.mxu0 0.0
    %3203 = vmatprep.subr.mxu0 0.0
    %3204 = vmatpush1.msra.mxu0 0.0
    %3205 = vmatprep.subr.mxu0 0.0
    %3206 = vmatpush1.msra.mxu0 0.0
    %3207 = vmatprep.subr.mxu0 0.0
    %3208 = vmatpush1.msra.mxu0 0.0
    %3209 = vmatprep.subr.mxu0 0.0
    %3210 = vmatpush1.msra.mxu0 0.0
    %3211 = vmatprep.subr.mxu0 0.0
    %3212 = vmatpush1.msra.mxu0 0.0
    %3213 = vmatprep.subr.mxu0 0.0
    %3214 = vmatpush1.msra.mxu0 0.0
    %3215 = vmatprep.subr.mxu0 0.0
    %3216 = vmatpush1.msra.mxu0 0.0
    %3217 = vmatprep.subr.mxu0 0.0
    %3218 = vmatpush1.msra.mxu0 0.0
    %3219 = vmatprep.mubr.f32.mxu0 0.0
    %3220 = vmatmul.mubr.f32.gmra.mrb[0].mxu0 %v3153
    %v3221 = vpop.f32.mrb[0].mxu0
    %v3222 = vadd.f32 0.0, %v3221
    %v3223 = vpop.f32.mrb[0].mxu0
    %3224 = vdwg.mxu0
    %v3225 = vadd.f32 %v3067, %v3222
    %s3226 = scalar_lea.vmem %s6, 16
    %v3227 = vld [vmem:[%s3226] sm:$0x3]
    %v3229 = vsel %vm1962, %v3227, 0
    %3231 = vmatprep.subr.mxu0 0.0
    %3232 = vmatpush1.msra.mxu0 %v1957
    %3233 = vmatprep.subr.mxu0 0.0
    %3234 = vmatpush1.msra.mxu0 %v1958
    %3235 = vmatprep.subr.mxu0 0.0
    %3236 = vmatpush1.msra.mxu0 %v1967
    %3237 = vmatprep.subr.mxu0 0.0
    %3238 = vmatpush1.msra.mxu0 0.0
    %3239 = vmatprep.subr.mxu0 0.0
    %3240 = vmatpush1.msra.mxu0 0.0
    %3241 = vmatprep.subr.mxu0 0.0
    %3242 = vmatpush1.msra.mxu0 0.0
    %3243 = vmatprep.subr.mxu0 0.0
    %3244 = vmatpush1.msra.mxu0 0.0
    %3245 = vmatprep.subr.mxu0 0.0
    %3246 = vmatpush1.msra.mxu0 0.0
    %3247 = vmatprep.subr.mxu0 0.0
    %3248 = vmatpush1.msra.mxu0 0.0
    %3249 = vmatprep.subr.mxu0 0.0
    %3250 = vmatpush1.msra.mxu0 0.0
    %3251 = vmatprep.subr.mxu0 0.0
    %3252 = vmatpush1.msra.mxu0 0.0
    %3253 = vmatprep.subr.mxu0 0.0
    %3254 = vmatpush1.msra.mxu0 0.0
    %3255 = vmatprep.subr.mxu0 0.0
    %3256 = vmatpush1.msra.mxu0 0.0
    %3257 = vmatprep.subr.mxu0 0.0
    %3258 = vmatpush1.msra.mxu0 0.0
    %3259 = vmatprep.subr.mxu0 0.0
    %3260 = vmatpush1.msra.mxu0 0.0
    %3261 = vmatprep.subr.mxu0 0.0
    %3262 = vmatpush1.msra.mxu0 0.0
    %3263 = vmatprep.subr.mxu0 0.0
    %3264 = vmatpush1.msra.mxu0 0.0
    %3265 = vmatprep.subr.mxu0 0.0
    %3266 = vmatpush1.msra.mxu0 0.0
    %3267 = vmatprep.subr.mxu0 0.0
    %3268 = vmatpush1.msra.mxu0 0.0
    %3269 = vmatprep.subr.mxu0 0.0
    %3270 = vmatpush1.msra.mxu0 0.0
    %3271 = vmatprep.subr.mxu0 0.0
    %3272 = vmatpush1.msra.mxu0 0.0
    %3273 = vmatprep.subr.mxu0 0.0
    %3274 = vmatpush1.msra.mxu0 0.0
    %3275 = vmatprep.subr.mxu0 0.0
    %3276 = vmatpush1.msra.mxu0 0.0
    %3277 = vmatprep.subr.mxu0 0.0
    %3278 = vmatpush1.msra.mxu0 0.0
    %3279 = vmatprep.subr.mxu0 0.0
    %3280 = vmatpush1.msra.mxu0 0.0
    %3281 = vmatprep.subr.mxu0 0.0
    %3282 = vmatpush1.msra.mxu0 0.0
    %3283 = vmatprep.subr.mxu0 0.0
    %3284 = vmatpush1.msra.mxu0 0.0
    %3285 = vmatprep.subr.mxu0 0.0
    %3286 = vmatpush1.msra.mxu0 0.0
    %3287 = vmatprep.subr.mxu0 0.0
    %3288 = vmatpush1.msra.mxu0 0.0
    %3289 = vmatprep.subr.mxu0 0.0
    %3290 = vmatpush1.msra.mxu0 0.0
    %3291 = vmatprep.subr.mxu0 0.0
    %3292 = vmatpush1.msra.mxu0 0.0
    %3293 = vmatprep.subr.mxu0 0.0
    %3294 = vmatpush1.msra.mxu0 0.0
    %3295 = vmatprep.mubr.f32.mxu0 0.0
    %3296 = vmatmul.mubr.f32.gmra.mrb[0].mxu0 %v3229
    %v3297 = vpop.f32.mrb[0].mxu0
    %v3298 = vadd.f32 0.0, %v3297
    %v3299 = vpop.f32.mrb[0].mxu0
    %3300 = vdwg.mxu0
    %s3301 = scalar_lea.vmem %s7, 512
    %v3302 = vld [vmem:[%s3301] sm:$0xff]
    %v3303 = vld [vmem:[%s3301 + $0x8] sm:$0xff]
    %v3304 = vld [vmem:[%s3301 + $0x10] sm:$0xff]
    %v3305 = vld [vmem:[%s3301 + $0x18] sm:$0xff]
    %v3306 = vld [vmem:[%s3301 + $0x20] sm:$0xff]
    %v3307 = vld [vmem:[%s3301 + $0x28] sm:$0xff]
    %v3308 = vld [vmem:[%s3301 + $0x30] sm:$0xff]
    %v3309 = vld [vmem:[%s3301 + $0x38] sm:$0xff]
    %v3311 = vsel %vm2131, %v3298, 0
    %3313 = vmatprep.subr.mxu0 0.0
    %3314 = vmatpush1.msra.mxu0 %v3302
    %3315 = vmatprep.subr.mxu0 0.0
    %3316 = vmatpush1.msra.mxu0 %v3303
    %3317 = vmatprep.subr.mxu0 0.0
    %3318 = vmatpush1.msra.mxu0 %v3304
    %3319 = vmatprep.subr.mxu0 0.0
    %3320 = vmatpush1.msra.mxu0 %v3305
    %3321 = vmatprep.subr.mxu0 0.0
    %3322 = vmatpush1.msra.mxu0 %v3306
    %3323 = vmatprep.subr.mxu0 0.0
    %3324 = vmatpush1.msra.mxu0 %v3307
    %3325 = vmatprep.subr.mxu0 0.0
    %3326 = vmatpush1.msra.mxu0 %v3308
    %3327 = vmatprep.subr.mxu0 0.0
    %3328 = vmatpush1.msra.mxu0 %v3309
    %3329 = vmatprep.subr.mxu0 0.0
    %3330 = vmatpush1.msra.mxu0 0.0
    %3331 = vmatprep.subr.mxu0 0.0
    %3332 = vmatpush1.msra.mxu0 0.0
    %3333 = vmatprep.subr.mxu0 0.0
    %3334 = vmatpush1.msra.mxu0 0.0
    %3335 = vmatprep.subr.mxu0 0.0
    %3336 = vmatpush1.msra.mxu0 0.0
    %3337 = vmatprep.subr.mxu0 0.0
    %3338 = vmatpush1.msra.mxu0 0.0
    %3339 = vmatprep.subr.mxu0 0.0
    %3340 = vmatpush1.msra.mxu0 0.0
    %3341 = vmatprep.subr.mxu0 0.0
    %3342 = vmatpush1.msra.mxu0 0.0
    %3343 = vmatprep.subr.mxu0 0.0
    %3344 = vmatpush1.msra.mxu0 0.0
    %3345 = vmatprep.subr.mxu0 0.0
    %3346 = vmatpush1.msra.mxu0 0.0
    %3347 = vmatprep.subr.mxu0 0.0
    %3348 = vmatpush1.msra.mxu0 0.0
    %3349 = vmatprep.subr.mxu0 0.0
    %3350 = vmatpush1.msra.mxu0 0.0
    %3351 = vmatprep.subr.mxu0 0.0
    %3352 = vmatpush1.msra.mxu0 0.0
    %3353 = vmatprep.subr.mxu0 0.0
    %3354 = vmatpush1.msra.mxu0 0.0
    %3355 = vmatprep.subr.mxu0 0.0
    %3356 = vmatpush1.msra.mxu0 0.0
    %3357 = vmatprep.subr.mxu0 0.0
    %3358 = vmatpush1.msra.mxu0 0.0
    %3359 = vmatprep.subr.mxu0 0.0
    %3360 = vmatpush1.msra.mxu0 0.0
    %3361 = vmatprep.subr.mxu0 0.0
    %3362 = vmatpush1.msra.mxu0 0.0
    %3363 = vmatprep.subr.mxu0 0.0
    %3364 = vmatpush1.msra.mxu0 0.0
    %3365 = vmatprep.subr.mxu0 0.0
    %3366 = vmatpush1.msra.mxu0 0.0
    %3367 = vmatprep.subr.mxu0 0.0
    %3368 = vmatpush1.msra.mxu0 0.0
    %3369 = vmatprep.subr.mxu0 0.0
    %3370 = vmatpush1.msra.mxu0 0.0
    %3371 = vmatprep.subr.mxu0 0.0
    %3372 = vmatpush1.msra.mxu0 0.0
    %3373 = vmatprep.subr.mxu0 0.0
    %3374 = vmatpush1.msra.mxu0 0.0
    %3375 = vmatprep.subr.mxu0 0.0
    %3376 = vmatpush1.msra.mxu0 0.0
    %3377 = vmatprep.mubr.f32.mxu0 0.0
    %3378 = vmatmul.mubr.f32.gmra.mrb[0].mxu0 %v3311
    %v3379 = vpop.f32.mrb[0].mxu0
    %v3380 = vadd.f32 0.0, %v3379
    %v3381 = vpop.f32.mrb[0].mxu0
    %3382 = vdwg.mxu0
    %v3383 = vadd.f32 %v3225, %v3380
    %v3385 = vlaneseq
    %v3386 = vshrl.u32 %v3385, 7
    %v3387 = vsub.s32 0, %v3386
    %v3388 = vrot.slane %v1960, %v3387
    %v3390 = vadd.f32 %v3383, %v3388
    %vm3391 = vcmask 254976
    %3392 = vst.msk [vmem:[#allocation2] sm:$0x3] %vm3391, %v3390
    // Predicated region
    $region38: #{base_conv_net_forward.1} parent=1 // pred_check
      _
    $region39: #{base_conv_net_forward.1} parent=1 // pred_check_branch
      %3394 = sbr.rel (0) target = $region41
    $region40: #{base_conv_net_forward.1} parent=1 // pred_region
      %s3396 = ssub.s32 32, 32
      %3397 = vsyncadd [#allocation3], %s3396
      %s3399 = sshll.u32 [#allocation2], 4
      %s3400 = int_to_ptr.vmem [resolvable:$true] %s3399
      %3402 = dma.vmem_to_hbm [thread:$0]  %s3400, 32, %s9, [#allocation3]
    $region41: #{base_conv_net_forward.1} parent=1 // pred_fallthru
      _
    // Predicated region
    $region42: #{base_conv_net_forward.1} parent=1 // pred_check
      _
    $region43: #{base_conv_net_forward.1} parent=1 // pred_check_branch
      %3404 = sbr.rel (0) target = $region45
    $region44: #{base_conv_net_forward.1} parent=1 // pred_region
      %3405 = dma.done [#allocation3], 32
    $region45: #{base_conv_net_forward.1} parent=1 // pred_fallthru
      _
    %3406 = vsyncpa [#allocation3], 1

</llo_original>
